<compile_context>
chip_gen: v5e
topology: v5e:2x2
jax: 0.10.0
libtpu: 0.0.40
codegen_flags: <defaults>
</compile_context>

<pallas_src>
import functools
import math

import jax
import jax.numpy as jnp
from jax.experimental import pallas as pl
from jax.experimental.pallas import tpu as pltpu


# ----------------------------------------------------------------------------
# Tiling helpers
# ----------------------------------------------------------------------------
_TM_LIN = 2048    # row tile for linear / 2-layer-MLP kernels
_TM_ATTN = 256    # row tile (points) for the fused attention-core kernel
_VMEM_LIMIT = 48 * 1024 * 1024


def _round_up(x, m):
    return (x + m - 1) // m * m


def _pick_tile(m, target):
    # targets are multiples of 8, so the result is always a multiple of 8
    return min(target, _round_up(m, 8))


def _compiler_params():
    return pltpu.CompilerParams(
        dimension_semantics=("parallel",),
        vmem_limit_bytes=_VMEM_LIMIT,
    )


# ----------------------------------------------------------------------------
# Pallas kernels
# ----------------------------------------------------------------------------
def _linear_kernel(*refs, act, has_res):
    """y = x @ w + b (+ residual) (+ ReLU)."""
    if has_res:
        x_ref, w_ref, b_ref, r_ref, o_ref = refs
    else:
        x_ref, w_ref, b_ref, o_ref = refs
        r_ref = None
    y = jnp.dot(x_ref[...], w_ref[...], preferred_element_type=jnp.float32)
    y = y + b_ref[...]
    if r_ref is not None:
        y = y + r_ref[...]
    if act == "relu":
        y = jnp.maximum(y, 0.0)
    o_ref[...] = y


def _mlp2_kernel(x_ref, w1_ref, b1_ref, w2_ref, b2_ref, o_ref, *, act2, res_self):
    """y = act2( relu(x @ w1 + b1) @ w2 + b2 (+ x) ) — fused 2-layer MLP."""
    x = x_ref[...]
    h = jnp.dot(x, w1_ref[...], preferred_element_type=jnp.float32) + b1_ref[...]
    h = jnp.maximum(h, 0.0)
    y = jnp.dot(h, w2_ref[...], preferred_element_type=jnp.float32) + b2_ref[...]
    if res_self:
        y = y + x
    if act2 == "relu":
        y = jnp.maximum(y, 0.0)
    o_ref[...] = y


def _attn_core_kernel(pts_ref, kgeo_ref, q_ref, kk_ref, kv_ref,
                      gw1_ref, gb1_ref, gw2_ref, gb2_ref,
                      rw1_ref, rb1_ref, rw2_ref, rb2_ref,
                      o_ref):
    """Fused: geo_mlp + rel_mlp + softmax over K + weighted-sum aggregation.

    Blocks:
      pts (TM,3), knn_geos (TM,K,3), q (TM,D), knn_k (TM,K,D), knn_v (TM,K,D)
      -> out (TM,D)
    """
    tm, k, _ = kgeo_ref.shape
    d = q_ref.shape[-1]

    # geo embedding: geo_mlp(pts - knn_geos)
    geo_diff = pts_ref[...][:, None, :] - kgeo_ref[...]            # (TM,K,3)
    gd2 = geo_diff.reshape(tm * k, 3)
    gh = jnp.dot(gd2, gw1_ref[...], preferred_element_type=jnp.float32) + gb1_ref[...]
    gh = jnp.maximum(gh, 0.0)
    geo = jnp.dot(gh, gw2_ref[...], preferred_element_type=jnp.float32) + gb2_ref[...]
    geo3 = geo.reshape(tm, k, d)                                    # (TM,K,D)

    # rel_mlp(q - knn_k + geo)
    rel = q_ref[...][:, None, :] - kk_ref[...] + geo3               # (TM,K,D)
    rh = jnp.dot(rel.reshape(tm * k, d), rw1_ref[...],
                 preferred_element_type=jnp.float32) + rb1_ref[...]
    rh = jnp.maximum(rh, 0.0)
    logits = (jnp.dot(rh, rw2_ref[...], preferred_element_type=jnp.float32)
              + rb2_ref[...]).reshape(tm, k, d)                     # (TM,K,D)

    # softmax over K and weighted sum with (knn_v + geo)
    vals = kv_ref[...] + geo3
    m = jnp.max(logits, axis=1, keepdims=True)
    e = jnp.exp(logits - m)
    s = jnp.sum(e * vals, axis=1)                                   # (TM,D)
    denom = jnp.sum(e, axis=1)                                      # (TM,D), >= 1
    o_ref[...] = s * pl.reciprocal(denom, approx=True)


# ----------------------------------------------------------------------------
# Pallas wrappers
# ----------------------------------------------------------------------------
def linear_pallas(x2, w, b2, act=None, res2=None):
    """x2: (M, Cin), w: (Cin, Cout), b2: (1, Cout), res2: optional (M, Cout)."""
    m, cin = x2.shape
    cout = w.shape[1]
    tm = _pick_tile(m, _TM_LIN)
    mp = _round_up(m, tm)
    if mp != m:
        x2 = jnp.pad(x2, ((0, mp - m), (0, 0)))
        if res2 is not None:
            res2 = jnp.pad(res2, ((0, mp - m), (0, 0)))
    in_specs = [
        pl.BlockSpec((tm, cin), lambda i: (i, 0)),
        pl.BlockSpec((cin, cout), lambda i: (0, 0)),
        pl.BlockSpec((1, cout), lambda i: (0, 0)),
    ]
    args = [x2, w, b2]
    if res2 is not None:
        in_specs.append(pl.BlockSpec((tm, cout), lambda i: (i, 0)))
        args.append(res2)
    out = pl.pallas_call(
        functools.partial(_linear_kernel, act=act, has_res=res2 is not None),
        grid=(mp // tm,),
        in_specs=in_specs,
        out_specs=pl.BlockSpec((tm, cout), lambda i: (i, 0)),
        out_shape=jax.ShapeDtypeStruct((mp, cout), jnp.float32),
        compiler_params=_compiler_params(),
    )(*args)
    return out[:m]


def mlp2_pallas(x2, p1, p2, act2=None, res_self=False):
    """Fused 2-layer pointwise MLP on (M, Cin)."""
    w1, b1 = p1
    w2, b2 = p2
    m, cin = x2.shape
    ch = w1.shape[1]
    cout = w2.shape[1]
    if res_self:
        assert cin == cout
    tm = _pick_tile(m, _TM_LIN)
    mp = _round_up(m, tm)
    if mp != m:
        x2 = jnp.pad(x2, ((0, mp - m), (0, 0)))
    out = pl.pallas_call(
        functools.partial(_mlp2_kernel, act2=act2, res_self=res_self),
        grid=(mp // tm,),
        in_specs=[
            pl.BlockSpec((tm, cin), lambda i: (i, 0)),
            pl.BlockSpec((cin, ch), lambda i: (0, 0)),
            pl.BlockSpec((1, ch), lambda i: (0, 0)),
            pl.BlockSpec((ch, cout), lambda i: (0, 0)),
            pl.BlockSpec((1, cout), lambda i: (0, 0)),
        ],
        out_specs=pl.BlockSpec((tm, cout), lambda i: (i, 0)),
        out_shape=jax.ShapeDtypeStruct((mp, cout), jnp.float32),
        compiler_params=_compiler_params(),
    )(x2, w1, b1, w2, b2)
    return out[:m]


def pw_linear(x, w, b2, act=None, residual=None):
    """Pointwise (1x1) conv on channels-last tensor x: (..., Cin)."""
    shp = x.shape
    res2 = None if residual is None else residual.reshape(-1, residual.shape[-1])
    y = linear_pallas(x.reshape(-1, shp[-1]), w, b2, act=act, res2=res2)
    return y.reshape(shp[:-1] + (w.shape[1],))


def pw_mlp2(x, p1, p2, act2=None, res_self=False):
    shp = x.shape
    y = mlp2_pallas(x.reshape(-1, shp[-1]), p1, p2, act2=act2, res_self=res_self)
    return y.reshape(shp[:-1] + (p2[0].shape[1],))


def attn_core_pallas(pts, knn_geos, q, knn_k, knn_v, p):
    """(B,N,*) inputs -> (B,N,D) aggregated features (softmax over K fused)."""
    B, N, K, D = knn_k.shape
    m = B * N
    pts2 = pts.reshape(m, 3)
    kg = knn_geos.reshape(m, K, 3)
    q2 = q.reshape(m, D)
    kk = knn_k.reshape(m, K, D)
    kv = knn_v.reshape(m, K, D)

    tm = _pick_tile(m, _TM_ATTN)
    mp = _round_up(m, tm)
    if mp != m:
        pad = mp - m
        pts2 = jnp.pad(pts2, ((0, pad), (0, 0)))
        kg = jnp.pad(kg, ((0, pad), (0, 0), (0, 0)))
        q2 = jnp.pad(q2, ((0, pad), (0, 0)))
        kk = jnp.pad(kk, ((0, pad), (0, 0), (0, 0)))
        kv = jnp.pad(kv, ((0, pad), (0, 0), (0, 0)))

    gw1, gb1 = p["geo1"]
    gw2, gb2 = p["geo2"]
    rw1, rb1 = p["rel1"]
    rw2, rb2 = p["rel2"]
    dh = gw1.shape[1]

    out = pl.pallas_call(
        _attn_core_kernel,
        grid=(mp // tm,),
        in_specs=[
            pl.BlockSpec((tm, 3), lambda i: (i, 0)),
            pl.BlockSpec((tm, K, 3), lambda i: (i, 0, 0)),
            pl.BlockSpec((tm, D), lambda i: (i, 0)),
            pl.BlockSpec((tm, K, D), lambda i: (i, 0, 0)),
            pl.BlockSpec((tm, K, D), lambda i: (i, 0, 0)),
            pl.BlockSpec((3, dh), lambda i: (0, 0)),
            pl.BlockSpec((1, dh), lambda i: (0, 0)),
            pl.BlockSpec((dh, D), lambda i: (0, 0)),
            pl.BlockSpec((1, D), lambda i: (0, 0)),
            pl.BlockSpec((D, dh), lambda i: (0, 0)),
            pl.BlockSpec((1, dh), lambda i: (0, 0)),
            pl.BlockSpec((dh, D), lambda i: (0, 0)),
            pl.BlockSpec((1, D), lambda i: (0, 0)),
        ],
        out_specs=pl.BlockSpec((tm, D), lambda i: (i, 0)),
        out_shape=jax.ShapeDtypeStruct((mp, D), jnp.float32),
        compiler_params=_compiler_params(),
    )(pts2, kg, q2, kk, kv, gw1, gb1, gw2, gb2, rw1, rb1, rw2, rb2)
    return out[:m].reshape(B, N, D)


# ----------------------------------------------------------------------------
# Parameter construction (deterministic, PyTorch-like uniform init)
# ----------------------------------------------------------------------------
_BN_EPS = 1e-5


def conv_params(key, cin, cout, bn_fold=False):
    k1, k2 = jax.random.split(key)
    bound = 1.0 / math.sqrt(cin)
    w = jax.random.uniform(k1, (cin, cout), jnp.float32, -bound, bound)
    b = jax.random.uniform(k2, (cout,), jnp.float32, -bound, bound)
    if bn_fold:  # eval-mode BN with default params: scale by 1/sqrt(1+eps)
        s = 1.0 / math.sqrt(1.0 + _BN_EPS)
        w = w * s
        b = b * s
    return w, b.reshape(1, cout)


def make_attn_params(key, d):
    ks = jax.random.split(key, 10)
    wq, bq = conv_params(ks[0], d, d)
    wk, bk = conv_params(ks[1], d, d)
    wv, bv = conv_params(ks[2], d, d)
    return {
        # fused q/k/v projection
        "qkv": (jnp.concatenate([wq, wk, wv], axis=1),
                jnp.concatenate([bq, bk, bv], axis=1)),
        "geo1": conv_params(ks[3], 3, d // 2),
        "geo2": conv_params(ks[4], d // 2, d),
        "rel1": conv_params(ks[5], d, d // 2, bn_fold=True),  # rel_mlp has BN always
        "rel2": conv_params(ks[6], d // 2, d),
        "attn": conv_params(ks[7], d, d),
        "out1": conv_params(ks[8], d, 2 * d),
        "out2": conv_params(ks[9], 2 * d, d),
    }


def make_params(key, d, out_dim):
    ks = jax.random.split(key, 18)
    p = {
        "stem1": conv_params(ks[0], 3, d),
        "stem2": conv_params(ks[1], d, d),
        "conv1": conv_params(ks[11], 3 * d, d, bn_fold=True),
        "conv2": conv_params(ks[12], 3 * d, d, bn_fold=True),
        "conv3": conv_params(ks[13], 3 * d, d, bn_fold=True),
        "gm1": conv_params(ks[14], d, 256),
        "gm2": conv_params(ks[15], 256, 512),
        "fuse1": conv_params(ks[16], 4 * d + 512, 2 * out_dim),
        "fuse2": conv_params(ks[17], 2 * out_dim, out_dim),
    }
    names = ["attn11", "attn12", "attn13", "attn21", "attn22", "attn23",
             "attn31", "attn32", "attn33"]
    for i, name in enumerate(names):
        p[name] = make_attn_params(ks[2 + i], d)
    return p


# ----------------------------------------------------------------------------
# Forward pass
# ----------------------------------------------------------------------------
def knn_indices(pts, k):
    """pts: (B, N, 3) -> indices of k nearest neighbours (B, N, K), self included."""
    sq = jnp.sum(pts * pts, axis=-1)                                  # (B, N)
    d = sq[:, :, None] + sq[:, None, :] - 2.0 * jnp.einsum("bnc,bmc->bnm", pts, pts)
    _, idx = jax.lax.top_k(-d, k)
    return idx


def gather_points(x, idx):
    """x: (B, N, C), idx: (B, N, K) -> (B, N, K, C)  (== index_points)."""
    return jax.vmap(lambda xb, ib: xb[ib])(x, idx)


def encoder_attention(p, pts, feats, knn_i, knn_geos):
    """Encoder_Attention_o.forward (geos == pts)."""
    qkv = pw_linear(feats, *p["qkv"])                                # (B,N,3D)
    q, kf, v = jnp.split(qkv, 3, axis=-1)

    knn_k = gather_points(kf, knn_i)                                 # (B,N,K,D)
    knn_v = gather_points(v, knn_i)                                  # (B,N,K,D)

    # fused geo_mlp + rel_mlp + softmax + aggregation
    agg = attn_core_pallas(pts, knn_geos, q, knn_k, knn_v, p)        # (B,N,D)
    agg = pw_linear(agg, *p["attn"], residual=feats)                 # attn_conv + residual

    # out_feat = relu(out_conv(agg) + agg)
    return pw_mlp2(agg, p["out1"], p["out2"], act2="relu", res_self=True)


def point_transformer_forward(params, pts, k):
    """pts: (B, N, 3) channels-last. Returns (B, N, out_dim)."""
    B, N, _ = pts.shape
    feat = pts

    # stem (encoder_bn=False -> Identity BNs); fused 2-layer MLP
    feat0 = pw_mlp2(feat, params["stem1"], params["stem2"], act2="relu")

    knn_i = knn_indices(pts, k)          # identical for every attention block
    knn_geos = gather_points(pts, knn_i)  # (B,N,K,3), shared by all blocks

    def block(name, f):
        return encoder_attention(params[name], pts, f, knn_i, knn_geos)

    feat11 = block("attn11", feat0)
    feat12 = block("attn12", feat11)
    feat13 = block("attn13", feat12)
    feat1 = pw_linear(jnp.concatenate([feat11, feat12, feat13], axis=-1),
                      *params["conv1"], act="relu")

    feat21 = block("attn21", feat1)
    feat22 = block("attn22", feat21)
    feat23 = block("attn23", feat22)
    feat2 = pw_linear(jnp.concatenate([feat21, feat22, feat23], axis=-1),
                      *params["conv2"], act="relu")

    feat31 = block("attn31", feat2)
    feat32 = block("attn32", feat31)
    feat33 = block("attn33", feat32)
    feat3 = pw_linear(jnp.concatenate([feat31, feat32, feat33], axis=-1),
                      *params["conv3"], act="relu")

    g = pw_mlp2(feat3, params["gm1"], params["gm2"], act2="relu")    # (B,N,512)
    global_feat = jnp.max(g, axis=1)                                 # (B,512)
    global_rep = jnp.broadcast_to(global_feat[:, None, :], (B, N, 512))

    fuse_in = jnp.concatenate([feat0, feat1, feat2, feat3, global_rep], axis=-1)
    out = pw_mlp2(fuse_in, params["fuse1"], params["fuse2"], act2="relu")
    return out


# ----------------------------------------------------------------------------
if __name__ == "__main__":
    # cfgs: k=8, encoder_dim=32, encoder_bn=False, out_dim=32
    B, N, ENC_DIM, K, OUT_DIM = 2, 16, 32, 8, 32

    key = jax.random.PRNGKey(0)
    kp, kx = jax.random.split(key)
    params = make_params(kp, ENC_DIM, OUT_DIM)
    pts = jax.random.normal(kx, (B, N, 3), jnp.float32)  # torch layout would be (B, 3, N)

    fwd = jax.jit(functools.partial(point_transformer_forward, k=K))
    out = fwd(params, pts)
    jax.block_until_ready(out)

    assert out.shape == (B, N, OUT_DIM), out.shape
    assert jnp.all(jnp.isfinite(out))
    print("KERNEL_OK")
</pallas_src>

<mosaic_0001>
module attributes {stable_mosaic.version = 11 : i64} {
  func.func @_mlp2_kernel(%arg0: i32, %arg1: memref<32x3xf32, #tpu.memory_space<vmem>>, %arg2: memref<3x32xf32, #tpu.memory_space<vmem>>, %arg3: memref<1x32xf32, #tpu.memory_space<vmem>>, %arg4: memref<32x32xf32, #tpu.memory_space<vmem>>, %arg5: memref<1x32xf32, #tpu.memory_space<vmem>>, %arg6: memref<32x32xf32, #tpu.memory_space<vmem>>) attributes {dimension_semantics = [#tpu.dimension_semantics<parallel>], iteration_bounds = array<i64: 1>, scalar_prefetch = 0 : i64, scratch_operands = 0 : i64, tpu.core_type = #tpu.core_type<tc>, window_params = [{transform_indices = @transform_0, window_bounds = array<i64: 32, 3>}, {pipeline_mode = #tpu.pipeline_mode<synchronous>, transform_indices = @transform_1, window_bounds = array<i64: 3, 32>}, {pipeline_mode = #tpu.pipeline_mode<synchronous>, transform_indices = @transform_2, window_bounds = array<i64: 1, 32>}, {pipeline_mode = #tpu.pipeline_mode<synchronous>, transform_indices = @transform_3, window_bounds = array<i64: 32, 32>}, {pipeline_mode = #tpu.pipeline_mode<synchronous>, transform_indices = @transform_4, window_bounds = array<i64: 1, 32>}, {transform_indices = @transform_5, window_bounds = array<i64: 32, 32>}]} {
    %c0 = arith.constant 0 : index
    %c0_0 = arith.constant 0 : index
    %0 = vector.load %arg1[%c0, %c0_0] : memref<32x3xf32, #tpu.memory_space<vmem>>, vector<32x3xf32>
    %c0_1 = arith.constant 0 : index
    %c0_2 = arith.constant 0 : index
    %1 = vector.load %arg2[%c0_1, %c0_2] : memref<3x32xf32, #tpu.memory_space<vmem>>, vector<3x32xf32>
    %cst = arith.constant dense<0.000000e+00> : vector<32x32xf32>
    %2 = tpu.matmul %0, %1, %cst {dimension_numbers = #tpu.dot_dimension_numbers<[1], [0], [0], [1], [0, 0, 1, 1], [], []>} : vector<32x3xf32>, vector<3x32xf32>, vector<32x32xf32> -> vector<32x32xf32>
    %c0_3 = arith.constant 0 : index
    %c0_4 = arith.constant 0 : index
    %3 = vector.load %arg3[%c0_3, %c0_4] : memref<1x32xf32, #tpu.memory_space<vmem>>, vector<1x32xf32>
    %4 = vector.broadcast %3 : vector<1x32xf32> to vector<32x32xf32>
    %5 = arith.addf %2, %4 : vector<32x32xf32>
    %cst_5 = arith.constant 0.000000e+00 : f32
    %6 = vector.broadcast %cst_5 : f32 to vector<32x32xf32>
    %7 = arith.maximumf %5, %6 : vector<32x32xf32>
    %c0_6 = arith.constant 0 : index
    %c0_7 = arith.constant 0 : index
    %8 = vector.load %arg4[%c0_6, %c0_7] : memref<32x32xf32, #tpu.memory_space<vmem>>, vector<32x32xf32>
    %cst_8 = arith.constant dense<0.000000e+00> : vector<32x32xf32>
    %9 = tpu.matmul %7, %8, %cst_8 {dimension_numbers = #tpu.dot_dimension_numbers<[1], [0], [0], [1], [0, 0, 1, 1], [], []>} : vector<32x32xf32>, vector<32x32xf32>, vector<32x32xf32> -> vector<32x32xf32>
    %c0_9 = arith.constant 0 : index
    %c0_10 = arith.constant 0 : index
    %10 = vector.load %arg5[%c0_9, %c0_10] : memref<1x32xf32, #tpu.memory_space<vmem>>, vector<1x32xf32>
    %11 = vector.broadcast %10 : vector<1x32xf32> to vector<32x32xf32>
    %12 = arith.addf %9, %11 : vector<32x32xf32>
    %cst_11 = arith.constant 0.000000e+00 : f32
    %13 = vector.broadcast %cst_11 : f32 to vector<32x32xf32>
    %14 = arith.maximumf %12, %13 : vector<32x32xf32>
    %c0_12 = arith.constant 0 : index
    %c0_13 = arith.constant 0 : index
    %15 = vector.load %arg6[%c0_12, %c0_13] : memref<32x32xf32, #tpu.memory_space<vmem>>, vector<32x32xf32>
    tpu.vector_store %arg6[%c0_12, %c0_13], %14 {strides = array<i32>} : memref<32x32xf32, #tpu.memory_space<vmem>>, vector<32x32xf32>,
    return
  }
  func.func @transform_0(%arg0: i32) -> (i32, i32) {
    %c0_i32 = arith.constant 0 : i32
    %c0_i32_0 = arith.constant 0 : i32
    return %arg0, %c0_i32 : i32, i32
  }
  func.func @transform_1(%arg0: i32) -> (i32, i32) {
    %c0_i32 = arith.constant 0 : i32
    %c0_i32_0 = arith.constant 0 : i32
    %c0_i32_1 = arith.constant 0 : i32
    return %c0_i32, %c0_i32_0 : i32, i32
  }
  func.func @transform_2(%arg0: i32) -> (i32, i32) {
    %c0_i32 = arith.constant 0 : i32
    %c0_i32_0 = arith.constant 0 : i32
    %c0_i32_1 = arith.constant 0 : i32
    return %c0_i32, %c0_i32_0 : i32, i32
  }
  func.func @transform_3(%arg0: i32) -> (i32, i32) {
    %c0_i32 = arith.constant 0 : i32
    %c0_i32_0 = arith.constant 0 : i32
    %c0_i32_1 = arith.constant 0 : i32
    return %c0_i32, %c0_i32_0 : i32, i32
  }
  func.func @transform_4(%arg0: i32) -> (i32, i32) {
    %c0_i32 = arith.constant 0 : i32
    %c0_i32_0 = arith.constant 0 : i32
    %c0_i32_1 = arith.constant 0 : i32
    return %c0_i32, %c0_i32_0 : i32, i32
  }
  func.func @transform_5(%arg0: i32) -> (i32, i32) {
    %c0_i32 = arith.constant 0 : i32
    %c0_i32_0 = arith.constant 0 : i32
    return %arg0, %c0_i32 : i32, i32
  }
}

module attributes {stable_mosaic.version = 11 : i64} {
  func.func @_linear_kernel(%arg0: i32, %arg1: memref<32x32xf32, #tpu.memory_space<vmem>>, %arg2: memref<32x96xf32, #tpu.memory_space<vmem>>, %arg3: memref<1x96xf32, #tpu.memory_space<vmem>>, %arg4: memref<32x96xf32, #tpu.memory_space<vmem>>) attributes {dimension_semantics = [#tpu.dimension_semantics<parallel>], iteration_bounds = array<i64: 1>, scalar_prefetch = 0 : i64, scratch_operands = 0 : i64, tpu.core_type = #tpu.core_type<tc>, window_params = [{transform_indices = @transform_0, window_bounds = array<i64: 32, 32>}, {pipeline_mode = #tpu.pipeline_mode<synchronous>, transform_indices = @transform_1, window_bounds = array<i64: 32, 96>}, {pipeline_mode = #tpu.pipeline_mode<synchronous>, transform_indices = @transform_2, window_bounds = array<i64: 1, 96>}, {transform_indices = @transform_3, window_bounds = array<i64: 32, 96>}]} {
    %c0 = arith.constant 0 : index
    %c0_0 = arith.constant 0 : index
    %0 = vector.load %arg1[%c0, %c0_0] : memref<32x32xf32, #tpu.memory_space<vmem>>, vector<32x32xf32>
    %c0_1 = arith.constant 0 : index
    %c0_2 = arith.constant 0 : index
    %1 = vector.load %arg2[%c0_1, %c0_2] : memref<32x96xf32, #tpu.memory_space<vmem>>, vector<32x96xf32>
    %cst = arith.constant dense<0.000000e+00> : vector<32x96xf32>
    %2 = tpu.matmul %0, %1, %cst {dimension_numbers = #tpu.dot_dimension_numbers<[1], [0], [0], [1], [0, 0, 1, 1], [], []>} : vector<32x32xf32>, vector<32x96xf32>, vector<32x96xf32> -> vector<32x96xf32>
    %c0_3 = arith.constant 0 : index
    %c0_4 = arith.constant 0 : index
    %3 = vector.load %arg3[%c0_3, %c0_4] : memref<1x96xf32, #tpu.memory_space<vmem>>, vector<1x96xf32>
    %4 = vector.broadcast %3 : vector<1x96xf32> to vector<32x96xf32>
    %5 = arith.addf %2, %4 : vector<32x96xf32>
    %c0_5 = arith.constant 0 : index
    %c0_6 = arith.constant 0 : index
    %6 = vector.load %arg4[%c0_5, %c0_6] : memref<32x96xf32, #tpu.memory_space<vmem>>, vector<32x96xf32>
    tpu.vector_store %arg4[%c0_5, %c0_6], %5 {strides = array<i32>} : memref<32x96xf32, #tpu.memory_space<vmem>>, vector<32x96xf32>,
    return
  }
  func.func @transform_0(%arg0: i32) -> (i32, i32) {
    %c0_i32 = arith.constant 0 : i32
    %c0_i32_0 = arith.constant 0 : i32
    return %arg0, %c0_i32 : i32, i32
  }
  func.func @transform_1(%arg0: i32) -> (i32, i32) {
    %c0_i32 = arith.constant 0 : i32
    %c0_i32_0 = arith.constant 0 : i32
    %c0_i32_1 = arith.constant 0 : i32
    return %c0_i32, %c0_i32_0 : i32, i32
  }
  func.func @transform_2(%arg0: i32) -> (i32, i32) {
    %c0_i32 = arith.constant 0 : i32
    %c0_i32_0 = arith.constant 0 : i32
    %c0_i32_1 = arith.constant 0 : i32
    return %c0_i32, %c0_i32_0 : i32, i32
  }
  func.func @transform_3(%arg0: i32) -> (i32, i32) {
    %c0_i32 = arith.constant 0 : i32
    %c0_i32_0 = arith.constant 0 : i32
    return %arg0, %c0_i32 : i32, i32
  }
}

module attributes {stable_mosaic.version = 11 : i64} {
  func.func @_linear_kernel(%arg0: i32, %arg1: memref<32x32xf32, #tpu.memory_space<vmem>>, %arg2: memref<32x32xf32, #tpu.memory_space<vmem>>, %arg3: memref<1x32xf32, #tpu.memory_space<vmem>>, %arg4: memref<32x32xf32, #tpu.memory_space<vmem>>, %arg5: memref<32x32xf32, #tpu.memory_space<vmem>>) attributes {dimension_semantics = [#tpu.dimension_semantics<parallel>], iteration_bounds = array<i64: 1>, scalar_prefetch = 0 : i64, scratch_operands = 0 : i64, tpu.core_type = #tpu.core_type<tc>, window_params = [{transform_indices = @transform_0, window_bounds = array<i64: 32, 32>}, {pipeline_mode = #tpu.pipeline_mode<synchronous>, transform_indices = @transform_1, window_bounds = array<i64: 32, 32>}, {pipeline_mode = #tpu.pipeline_mode<synchronous>, transform_indices = @transform_2, window_bounds = array<i64: 1, 32>}, {transform_indices = @transform_3, window_bounds = array<i64: 32, 32>}, {transform_indices = @transform_4, window_bounds = array<i64: 32, 32>}]} {
    %c0 = arith.constant 0 : index
    %c0_0 = arith.constant 0 : index
    %0 = vector.load %arg1[%c0, %c0_0] : memref<32x32xf32, #tpu.memory_space<vmem>>, vector<32x32xf32>
    %c0_1 = arith.constant 0 : index
    %c0_2 = arith.constant 0 : index
    %1 = vector.load %arg2[%c0_1, %c0_2] : memref<32x32xf32, #tpu.memory_space<vmem>>, vector<32x32xf32>
    %cst = arith.constant dense<0.000000e+00> : vector<32x32xf32>
    %2 = tpu.matmul %0, %1, %cst {dimension_numbers = #tpu.dot_dimension_numbers<[1], [0], [0], [1], [0, 0, 1, 1], [], []>} : vector<32x32xf32>, vector<32x32xf32>, vector<32x32xf32> -> vector<32x32xf32>
    %c0_3 = arith.constant 0 : index
    %c0_4 = arith.constant 0 : index
    %3 = vector.load %arg3[%c0_3, %c0_4] : memref<1x32xf32, #tpu.memory_space<vmem>>, vector<1x32xf32>
    %4 = vector.broadcast %3 : vector<1x32xf32> to vector<32x32xf32>
    %5 = arith.addf %2, %4 : vector<32x32xf32>
    %c0_5 = arith.constant 0 : index
    %c0_6 = arith.constant 0 : index
    %6 = vector.load %arg4[%c0_5, %c0_6] : memref<32x32xf32, #tpu.memory_space<vmem>>, vector<32x32xf32>
    %7 = arith.addf %5, %6 : vector<32x32xf32>
    %c0_7 = arith.constant 0 : index
    %c0_8 = arith.constant 0 : index
    %8 = vector.load %arg5[%c0_7, %c0_8] : memref<32x32xf32, #tpu.memory_space<vmem>>, vector<32x32xf32>
    tpu.vector_store %arg5[%c0_7, %c0_8], %7 {strides = array<i32>} : memref<32x32xf32, #tpu.memory_space<vmem>>, vector<32x32xf32>,
    return
  }
  func.func @transform_0(%arg0: i32) -> (i32, i32) {
    %c0_i32 = arith.constant 0 : i32
    %c0_i32_0 = arith.constant 0 : i32
    return %arg0, %c0_i32 : i32, i32
  }
  func.func @transform_1(%arg0: i32) -> (i32, i32) {
    %c0_i32 = arith.constant 0 : i32
    %c0_i32_0 = arith.constant 0 : i32
    %c0_i32_1 = arith.constant 0 : i32
    return %c0_i32, %c0_i32_0 : i32, i32
  }
  func.func @transform_2(%arg0: i32) -> (i32, i32) {
    %c0_i32 = arith.constant 0 : i32
    %c0_i32_0 = arith.constant 0 : i32
    %c0_i32_1 = arith.constant 0 : i32
    return %c0_i32, %c0_i32_0 : i32, i32
  }
  func.func @transform_3(%arg0: i32) -> (i32, i32) {
    %c0_i32 = arith.constant 0 : i32
    %c0_i32_0 = arith.constant 0 : i32
    return %arg0, %c0_i32 : i32, i32
  }
  func.func @transform_4(%arg0: i32) -> (i32, i32) {
    %c0_i32 = arith.constant 0 : i32
    %c0_i32_0 = arith.constant 0 : i32
    return %arg0, %c0_i32 : i32, i32
  }
}

module attributes {stable_mosaic.version = 11 : i64} {
  func.func @_attn_core_kernel(%arg0: i32, %arg1: memref<32x3xf32, #tpu.memory_space<vmem>>, %arg2: memref<32x8x3xf32, #tpu.memory_space<vmem>>, %arg3: memref<32x32xf32, #tpu.memory_space<vmem>>, %arg4: memref<32x8x32xf32, #tpu.memory_space<vmem>>, %arg5: memref<32x8x32xf32, #tpu.memory_space<vmem>>, %arg6: memref<3x16xf32, #tpu.memory_space<vmem>>, %arg7: memref<1x16xf32, #tpu.memory_space<vmem>>, %arg8: memref<16x32xf32, #tpu.memory_space<vmem>>, %arg9: memref<1x32xf32, #tpu.memory_space<vmem>>, %arg10: memref<32x16xf32, #tpu.memory_space<vmem>>, %arg11: memref<1x16xf32, #tpu.memory_space<vmem>>, %arg12: memref<16x32xf32, #tpu.memory_space<vmem>>, %arg13: memref<1x32xf32, #tpu.memory_space<vmem>>, %arg14: memref<32x32xf32, #tpu.memory_space<vmem>>) attributes {dimension_semantics = [#tpu.dimension_semantics<parallel>], iteration_bounds = array<i64: 1>, scalar_prefetch = 0 : i64, scratch_operands = 0 : i64, tpu.core_type = #tpu.core_type<tc>, window_params = [{transform_indices = @transform_0, window_bounds = array<i64: 32, 3>}, {transform_indices = @transform_1, window_bounds = array<i64: 32, 8, 3>}, {transform_indices = @transform_2, window_bounds = array<i64: 32, 32>}, {transform_indices = @transform_3, window_bounds = array<i64: 32, 8, 32>}, {transform_indices = @transform_4, window_bounds = array<i64: 32, 8, 32>}, {pipeline_mode = #tpu.pipeline_mode<synchronous>, transform_indices = @transform_5, window_bounds = array<i64: 3, 16>}, {pipeline_mode = #tpu.pipeline_mode<synchronous>, transform_indices = @transform_6, window_bounds = array<i64: 1, 16>}, {pipeline_mode = #tpu.pipeline_mode<synchronous>, transform_indices = @transform_7, window_bounds = array<i64: 16, 32>}, {pipeline_mode = #tpu.pipeline_mode<synchronous>, transform_indices = @transform_8, window_bounds = array<i64: 1, 32>}, {pipeline_mode = #tpu.pipeline_mode<synchronous>, transform_indices = @transform_9, window_bounds = array<i64: 32, 16>}, {pipeline_mode = #tpu.pipeline_mode<synchronous>, transform_indices = @transform_10, window_bounds = array<i64: 1, 16>}, {pipeline_mode = #tpu.pipeline_mode<synchronous>, transform_indices = @transform_11, window_bounds = array<i64: 16, 32>}, {pipeline_mode = #tpu.pipeline_mode<synchronous>, transform_indices = @transform_12, window_bounds = array<i64: 1, 32>}, {transform_indices = @transform_13, window_bounds = array<i64: 32, 32>}]} {
    %c0 = arith.constant 0 : index
    %c0_0 = arith.constant 0 : index
    %0 = vector.load %arg1[%c0, %c0_0] : memref<32x3xf32, #tpu.memory_space<vmem>>, vector<32x3xf32>
    %1 = vector.shape_cast %0 : vector<32x3xf32> to vector<32x1x3xf32>
    %c0_1 = arith.constant 0 : index
    %c0_2 = arith.constant 0 : index
    %c0_3 = arith.constant 0 : index
    %2 = vector.load %arg2[%c0_1, %c0_2, %c0_3] : memref<32x8x3xf32, #tpu.memory_space<vmem>>, vector<32x8x3xf32>
    %3 = vector.broadcast %1 : vector<32x1x3xf32> to vector<32x8x3xf32>
    %4 = arith.subf %3, %2 : vector<32x8x3xf32>
    %5 = vector.shape_cast %4 : vector<32x8x3xf32> to vector<256x3xf32>
    %c0_4 = arith.constant 0 : index
    %c0_5 = arith.constant 0 : index
    %6 = vector.load %arg6[%c0_4, %c0_5] : memref<3x16xf32, #tpu.memory_space<vmem>>, vector<3x16xf32>
    %cst = arith.constant dense<0.000000e+00> : vector<256x16xf32>
    %7 = tpu.matmul %5, %6, %cst {dimension_numbers = #tpu.dot_dimension_numbers<[1], [0], [0], [1], [0, 0, 1, 1], [], []>} : vector<256x3xf32>, vector<3x16xf32>, vector<256x16xf32> -> vector<256x16xf32>
    %c0_6 = arith.constant 0 : index
    %c0_7 = arith.constant 0 : index
    %8 = vector.load %arg7[%c0_6, %c0_7] : memref<1x16xf32, #tpu.memory_space<vmem>>, vector<1x16xf32>
    %9 = vector.broadcast %8 : vector<1x16xf32> to vector<256x16xf32>
    %10 = arith.addf %7, %9 : vector<256x16xf32>
    %cst_8 = arith.constant 0.000000e+00 : f32
    %11 = vector.broadcast %cst_8 : f32 to vector<256x16xf32>
    %12 = arith.maximumf %10, %11 : vector<256x16xf32>
    %c0_9 = arith.constant 0 : index
    %c0_10 = arith.constant 0 : index
    %13 = vector.load %arg8[%c0_9, %c0_10] : memref<16x32xf32, #tpu.memory_space<vmem>>, vector<16x32xf32>
    %cst_11 = arith.constant dense<0.000000e+00> : vector<256x32xf32>
    %14 = tpu.matmul %12, %13, %cst_11 {dimension_numbers = #tpu.dot_dimension_numbers<[1], [0], [0], [1], [0, 0, 1, 1], [], []>} : vector<256x16xf32>, vector<16x32xf32>, vector<256x32xf32> -> vector<256x32xf32>
    %c0_12 = arith.constant 0 : index
    %c0_13 = arith.constant 0 : index
    %15 = vector.load %arg9[%c0_12, %c0_13] : memref<1x32xf32, #tpu.memory_space<vmem>>, vector<1x32xf32>
    %16 = vector.broadcast %15 : vector<1x32xf32> to vector<256x32xf32>
    %17 = arith.addf %14, %16 : vector<256x32xf32>
    %18 = vector.shape_cast %17 : vector<256x32xf32> to vector<32x8x32xf32>
    %c0_14 = arith.constant 0 : index
    %c0_15 = arith.constant 0 : index
    %19 = vector.load %arg3[%c0_14, %c0_15] : memref<32x32xf32, #tpu.memory_space<vmem>>, vector<32x32xf32>
    %20 = vector.shape_cast %19 : vector<32x32xf32> to vector<32x1x32xf32>
    %c0_16 = arith.constant 0 : index
    %c0_17 = arith.constant 0 : index
    %c0_18 = arith.constant 0 : index
    %21 = vector.load %arg4[%c0_16, %c0_17, %c0_18] : memref<32x8x32xf32, #tpu.memory_space<vmem>>, vector<32x8x32xf32>
    %22 = vector.broadcast %20 : vector<32x1x32xf32> to vector<32x8x32xf32>
    %23 = arith.subf %22, %21 : vector<32x8x32xf32>
    %24 = arith.addf %23, %18 : vector<32x8x32xf32>
    %25 = vector.shape_cast %24 : vector<32x8x32xf32> to vector<256x32xf32>
    %c0_19 = arith.constant 0 : index
    %c0_20 = arith.constant 0 : index
    %26 = vector.load %arg10[%c0_19, %c0_20] : memref<32x16xf32, #tpu.memory_space<vmem>>, vector<32x16xf32>
    %cst_21 = arith.constant dense<0.000000e+00> : vector<256x16xf32>
    %27 = tpu.matmul %25, %26, %cst_21 {dimension_numbers = #tpu.dot_dimension_numbers<[1], [0], [0], [1], [0, 0, 1, 1], [], []>} : vector<256x32xf32>, vector<32x16xf32>, vector<256x16xf32> -> vector<256x16xf32>
    %c0_22 = arith.constant 0 : index
    %c0_23 = arith.constant 0 : index
    %28 = vector.load %arg11[%c0_22, %c0_23] : memref<1x16xf32, #tpu.memory_space<vmem>>, vector<1x16xf32>
    %29 = vector.broadcast %28 : vector<1x16xf32> to vector<256x16xf32>
    %30 = arith.addf %27, %29 : vector<256x16xf32>
    %cst_24 = arith.constant 0.000000e+00 : f32
    %31 = vector.broadcast %cst_24 : f32 to vector<256x16xf32>
    %32 = arith.maximumf %30, %31 : vector<256x16xf32>
    %c0_25 = arith.constant 0 : index
    %c0_26 = arith.constant 0 : index
    %33 = vector.load %arg12[%c0_25, %c0_26] : memref<16x32xf32, #tpu.memory_space<vmem>>, vector<16x32xf32>
    %cst_27 = arith.constant dense<0.000000e+00> : vector<256x32xf32>
    %34 = tpu.matmul %32, %33, %cst_27 {dimension_numbers = #tpu.dot_dimension_numbers<[1], [0], [0], [1], [0, 0, 1, 1], [], []>} : vector<256x16xf32>, vector<16x32xf32>, vector<256x32xf32> -> vector<256x32xf32>
    %c0_28 = arith.constant 0 : index
    %c0_29 = arith.constant 0 : index
    %35 = vector.load %arg13[%c0_28, %c0_29] : memref<1x32xf32, #tpu.memory_space<vmem>>, vector<1x32xf32>
    %36 = vector.broadcast %35 : vector<1x32xf32> to vector<256x32xf32>
    %37 = arith.addf %34, %36 : vector<256x32xf32>
    %38 = vector.shape_cast %37 : vector<256x32xf32> to vector<32x8x32xf32>
    %c0_30 = arith.constant 0 : index
    %c0_31 = arith.constant 0 : index
    %c0_32 = arith.constant 0 : index
    %39 = vector.load %arg5[%c0_30, %c0_31, %c0_32] : memref<32x8x32xf32, #tpu.memory_space<vmem>>, vector<32x8x32xf32>
    %40 = arith.addf %39, %18 : vector<32x8x32xf32>
    %cst_33 = arith.constant dense<0xFF800000> : vector<32x32xf32>
    %41 = vector.multi_reduction <maximumf>, %38, %cst_33 [1] : vector<32x8x32xf32> to vector<32x32xf32>
    %42 = vector.shape_cast %41 : vector<32x32xf32> to vector<32x1x32xf32>
    %43 = vector.broadcast %42 : vector<32x1x32xf32> to vector<32x8x32xf32>
    %44 = arith.subf %38, %43 : vector<32x8x32xf32>
    %45 = math.exp %44 : vector<32x8x32xf32>
    %46 = arith.mulf %45, %40 : vector<32x8x32xf32>
    %cst_34 = arith.constant dense<0.000000e+00> : vector<32x32xf32>
    %47 = vector.multi_reduction <add>, %46, %cst_34 [1] : vector<32x8x32xf32> to vector<32x32xf32>
    %cst_35 = arith.constant dense<0.000000e+00> : vector<32x32xf32>
    %48 = vector.multi_reduction <add>, %45, %cst_35 [1] : vector<32x8x32xf32> to vector<32x32xf32>
    %49 = tpu.reciprocal %48 {approx = true} : vector<32x32xf32> -> vector<32x32xf32>
    %50 = arith.mulf %47, %49 : vector<32x32xf32>
    %c0_36 = arith.constant 0 : index
    %c0_37 = arith.constant 0 : index
    %51 = vector.load %arg14[%c0_36, %c0_37] : memref<32x32xf32, #tpu.memory_space<vmem>>, vector<32x32xf32>
    tpu.vector_store %arg14[%c0_36, %c0_37], %50 {strides = array<i32>} : memref<32x32xf32, #tpu.memory_space<vmem>>, vector<32x32xf32>,
    return
  }
  func.func @transform_0(%arg0: i32) -> (i32, i32) {
    %c0_i32 = arith.constant 0 : i32
    %c0_i32_0 = arith.constant 0 : i32
    return %arg0, %c0_i32 : i32, i32
  }
  func.func @transform_1(%arg0: i32) -> (i32, i32, i32) {
    %c0_i32 = arith.constant 0 : i32
    %c0_i32_0 = arith.constant 0 : i32
    %c0_i32_1 = arith.constant 0 : i32
    return %arg0, %c0_i32, %c0_i32_0 : i32, i32, i32
  }
  func.func @transform_2(%arg0: i32) -> (i32, i32) {
    %c0_i32 = arith.constant 0 : i32
    %c0_i32_0 = arith.constant 0 : i32
    return %arg0, %c0_i32 : i32, i32
  }
  func.func @transform_3(%arg0: i32) -> (i32, i32, i32) {
    %c0_i32 = arith.constant 0 : i32
    %c0_i32_0 = arith.constant 0 : i32
    %c0_i32_1 = arith.constant 0 : i32
    return %arg0, %c0_i32, %c0_i32_0 : i32, i32, i32
  }
  func.func @transform_4(%arg0: i32) -> (i32, i32, i32) {
    %c0_i32 = arith.constant 0 : i32
    %c0_i32_0 = arith.constant 0 : i32
    %c0_i32_1 = arith.constant 0 : i32
    return %arg0, %c0_i32, %c0_i32_0 : i32, i32, i32
  }
  func.func @transform_5(%arg0: i32) -> (i32, i32) {
    %c0_i32 = arith.constant 0 : i32
    %c0_i32_0 = arith.constant 0 : i32
    %c0_i32_1 = arith.constant 0 : i32
    return %c0_i32, %c0_i32_0 : i32, i32
  }
  func.func @transform_6(%arg0: i32) -> (i32, i32) {
    %c0_i32 = arith.constant 0 : i32
    %c0_i32_0 = arith.constant 0 : i32
    %c0_i32_1 = arith.constant 0 : i32
    return %c0_i32, %c0_i32_0 : i32, i32
  }
  func.func @transform_7(%arg0: i32) -> (i32, i32) {
    %c0_i32 = arith.constant 0 : i32
    %c0_i32_0 = arith.constant 0 : i32
    %c0_i32_1 = arith.constant 0 : i32
    return %c0_i32, %c0_i32_0 : i32, i32
  }
  func.func @transform_8(%arg0: i32) -> (i32, i32) {
    %c0_i32 = arith.constant 0 : i32
    %c0_i32_0 = arith.constant 0 : i32
    %c0_i32_1 = arith.constant 0 : i32
    return %c0_i32, %c0_i32_0 : i32, i32
  }
  func.func @transform_9(%arg0: i32) -> (i32, i32) {
    %c0_i32 = arith.constant 0 : i32
    %c0_i32_0 = arith.constant 0 : i32
    %c0_i32_1 = arith.constant 0 : i32
    return %c0_i32, %c0_i32_0 : i32, i32
  }
  func.func @transform_10(%arg0: i32) -> (i32, i32) {
    %c0_i32 = arith.constant 0 : i32
    %c0_i32_0 = arith.constant 0 : i32
    %c0_i32_1 = arith.constant 0 : i32
    return %c0_i32, %c0_i32_0 : i32, i32
  }
  func.func @transform_11(%arg0: i32) -> (i32, i32) {
    %c0_i32 = arith.constant 0 : i32
    %c0_i32_0 = arith.constant 0 : i32
    %c0_i32_1 = arith.constant 0 : i32
    return %c0_i32, %c0_i32_0 : i32, i32
  }
  func.func @transform_12(%arg0: i32) -> (i32, i32) {
    %c0_i32 = arith.constant 0 : i32
    %c0_i32_0 = arith.constant 0 : i32
    %c0_i32_1 = arith.constant 0 : i32
    return %c0_i32, %c0_i32_0 : i32, i32
  }
  func.func @transform_13(%arg0: i32) -> (i32, i32) {
    %c0_i32 = arith.constant 0 : i32
    %c0_i32_0 = arith.constant 0 : i32
    return %arg0, %c0_i32 : i32, i32
  }
}

module attributes {stable_mosaic.version = 11 : i64} {
  func.func @_mlp2_kernel(%arg0: i32, %arg1: memref<32x32xf32, #tpu.memory_space<vmem>>, %arg2: memref<32x64xf32, #tpu.memory_space<vmem>>, %arg3: memref<1x64xf32, #tpu.memory_space<vmem>>, %arg4: memref<64x32xf32, #tpu.memory_space<vmem>>, %arg5: memref<1x32xf32, #tpu.memory_space<vmem>>, %arg6: memref<32x32xf32, #tpu.memory_space<vmem>>) attributes {dimension_semantics = [#tpu.dimension_semantics<parallel>], iteration_bounds = array<i64: 1>, scalar_prefetch = 0 : i64, scratch_operands = 0 : i64, tpu.core_type = #tpu.core_type<tc>, window_params = [{transform_indices = @transform_0, window_bounds = array<i64: 32, 32>}, {pipeline_mode = #tpu.pipeline_mode<synchronous>, transform_indices = @transform_1, window_bounds = array<i64: 32, 64>}, {pipeline_mode = #tpu.pipeline_mode<synchronous>, transform_indices = @transform_2, window_bounds = array<i64: 1, 64>}, {pipeline_mode = #tpu.pipeline_mode<synchronous>, transform_indices = @transform_3, window_bounds = array<i64: 64, 32>}, {pipeline_mode = #tpu.pipeline_mode<synchronous>, transform_indices = @transform_4, window_bounds = array<i64: 1, 32>}, {transform_indices = @transform_5, window_bounds = array<i64: 32, 32>}]} {
    %c0 = arith.constant 0 : index
    %c0_0 = arith.constant 0 : index
    %0 = vector.load %arg1[%c0, %c0_0] : memref<32x32xf32, #tpu.memory_space<vmem>>, vector<32x32xf32>
    %c0_1 = arith.constant 0 : index
    %c0_2 = arith.constant 0 : index
    %1 = vector.load %arg2[%c0_1, %c0_2] : memref<32x64xf32, #tpu.memory_space<vmem>>, vector<32x64xf32>
    %cst = arith.constant dense<0.000000e+00> : vector<32x64xf32>
    %2 = tpu.matmul %0, %1, %cst {dimension_numbers = #tpu.dot_dimension_numbers<[1], [0], [0], [1], [0, 0, 1, 1], [], []>} : vector<32x32xf32>, vector<32x64xf32>, vector<32x64xf32> -> vector<32x64xf32>
    %c0_3 = arith.constant 0 : index
    %c0_4 = arith.constant 0 : index
    %3 = vector.load %arg3[%c0_3, %c0_4] : memref<1x64xf32, #tpu.memory_space<vmem>>, vector<1x64xf32>
    %4 = vector.broadcast %3 : vector<1x64xf32> to vector<32x64xf32>
    %5 = arith.addf %2, %4 : vector<32x64xf32>
    %cst_5 = arith.constant 0.000000e+00 : f32
    %6 = vector.broadcast %cst_5 : f32 to vector<32x64xf32>
    %7 = arith.maximumf %5, %6 : vector<32x64xf32>
    %c0_6 = arith.constant 0 : index
    %c0_7 = arith.constant 0 : index
    %8 = vector.load %arg4[%c0_6, %c0_7] : memref<64x32xf32, #tpu.memory_space<vmem>>, vector<64x32xf32>
    %cst_8 = arith.constant dense<0.000000e+00> : vector<32x32xf32>
    %9 = tpu.matmul %7, %8, %cst_8 {dimension_numbers = #tpu.dot_dimension_numbers<[1], [0], [0], [1], [0, 0, 1, 1], [], []>} : vector<32x64xf32>, vector<64x32xf32>, vector<32x32xf32> -> vector<32x32xf32>
    %c0_9 = arith.constant 0 : index
    %c0_10 = arith.constant 0 : index
    %10 = vector.load %arg5[%c0_9, %c0_10] : memref<1x32xf32, #tpu.memory_space<vmem>>, vector<1x32xf32>
    %11 = vector.broadcast %10 : vector<1x32xf32> to vector<32x32xf32>
    %12 = arith.addf %9, %11 : vector<32x32xf32>
    %13 = arith.addf %12, %0 : vector<32x32xf32>
    %cst_11 = arith.constant 0.000000e+00 : f32
    %14 = vector.broadcast %cst_11 : f32 to vector<32x32xf32>
    %15 = arith.maximumf %13, %14 : vector<32x32xf32>
    %c0_12 = arith.constant 0 : index
    %c0_13 = arith.constant 0 : index
    %16 = vector.load %arg6[%c0_12, %c0_13] : memref<32x32xf32, #tpu.memory_space<vmem>>, vector<32x32xf32>
    tpu.vector_store %arg6[%c0_12, %c0_13], %15 {strides = array<i32>} : memref<32x32xf32, #tpu.memory_space<vmem>>, vector<32x32xf32>,
    return
  }
  func.func @transform_0(%arg0: i32) -> (i32, i32) {
    %c0_i32 = arith.constant 0 : i32
    %c0_i32_0 = arith.constant 0 : i32
    return %arg0, %c0_i32 : i32, i32
  }
  func.func @transform_1(%arg0: i32) -> (i32, i32) {
    %c0_i32 = arith.constant 0 : i32
    %c0_i32_0 = arith.constant 0 : i32
    %c0_i32_1 = arith.constant 0 : i32
    return %c0_i32, %c0_i32_0 : i32, i32
  }
  func.func @transform_2(%arg0: i32) -> (i32, i32) {
    %c0_i32 = arith.constant 0 : i32
    %c0_i32_0 = arith.constant 0 : i32
    %c0_i32_1 = arith.constant 0 : i32
    return %c0_i32, %c0_i32_0 : i32, i32
  }
  func.func @transform_3(%arg0: i32) -> (i32, i32) {
    %c0_i32 = arith.constant 0 : i32
    %c0_i32_0 = arith.constant 0 : i32
    %c0_i32_1 = arith.constant 0 : i32
    return %c0_i32, %c0_i32_0 : i32, i32
  }
  func.func @transform_4(%arg0: i32) -> (i32, i32) {
    %c0_i32 = arith.constant 0 : i32
    %c0_i32_0 = arith.constant 0 : i32
    %c0_i32_1 = arith.constant 0 : i32
    return %c0_i32, %c0_i32_0 : i32, i32
  }
  func.func @transform_5(%arg0: i32) -> (i32, i32) {
    %c0_i32 = arith.constant 0 : i32
    %c0_i32_0 = arith.constant 0 : i32
    return %arg0, %c0_i32 : i32, i32
  }
}

module attributes {stable_mosaic.version = 11 : i64} {
  func.func @_linear_kernel(%arg0: i32, %arg1: memref<32x96xf32, #tpu.memory_space<vmem>>, %arg2: memref<96x32xf32, #tpu.memory_space<vmem>>, %arg3: memref<1x32xf32, #tpu.memory_space<vmem>>, %arg4: memref<32x32xf32, #tpu.memory_space<vmem>>) attributes {dimension_semantics = [#tpu.dimension_semantics<parallel>], iteration_bounds = array<i64: 1>, scalar_prefetch = 0 : i64, scratch_operands = 0 : i64, tpu.core_type = #tpu.core_type<tc>, window_params = [{transform_indices = @transform_0, window_bounds = array<i64: 32, 96>}, {pipeline_mode = #tpu.pipeline_mode<synchronous>, transform_indices = @transform_1, window_bounds = array<i64: 96, 32>}, {pipeline_mode = #tpu.pipeline_mode<synchronous>, transform_indices = @transform_2, window_bounds = array<i64: 1, 32>}, {transform_indices = @transform_3, window_bounds = array<i64: 32, 32>}]} {
    %c0 = arith.constant 0 : index
    %c0_0 = arith.constant 0 : index
    %0 = vector.load %arg1[%c0, %c0_0] : memref<32x96xf32, #tpu.memory_space<vmem>>, vector<32x96xf32>
    %c0_1 = arith.constant 0 : index
    %c0_2 = arith.constant 0 : index
    %1 = vector.load %arg2[%c0_1, %c0_2] : memref<96x32xf32, #tpu.memory_space<vmem>>, vector<96x32xf32>
    %cst = arith.constant dense<0.000000e+00> : vector<32x32xf32>
    %2 = tpu.matmul %0, %1, %cst {dimension_numbers = #tpu.dot_dimension_numbers<[1], [0], [0], [1], [0, 0, 1, 1], [], []>} : vector<32x96xf32>, vector<96x32xf32>, vector<32x32xf32> -> vector<32x32xf32>
    %c0_3 = arith.constant 0 : index
    %c0_4 = arith.constant 0 : index
    %3 = vector.load %arg3[%c0_3, %c0_4] : memref<1x32xf32, #tpu.memory_space<vmem>>, vector<1x32xf32>
    %4 = vector.broadcast %3 : vector<1x32xf32> to vector<32x32xf32>
    %5 = arith.addf %2, %4 : vector<32x32xf32>
    %cst_5 = arith.constant 0.000000e+00 : f32
    %6 = vector.broadcast %cst_5 : f32 to vector<32x32xf32>
    %7 = arith.maximumf %5, %6 : vector<32x32xf32>
    %c0_6 = arith.constant 0 : index
    %c0_7 = arith.constant 0 : index
    %8 = vector.load %arg4[%c0_6, %c0_7] : memref<32x32xf32, #tpu.memory_space<vmem>>, vector<32x32xf32>
    tpu.vector_store %arg4[%c0_6, %c0_7], %7 {strides = array<i32>} : memref<32x32xf32, #tpu.memory_space<vmem>>, vector<32x32xf32>,
    return
  }
  func.func @transform_0(%arg0: i32) -> (i32, i32) {
    %c0_i32 = arith.constant 0 : i32
    %c0_i32_0 = arith.constant 0 : i32
    return %arg0, %c0_i32 : i32, i32
  }
  func.func @transform_1(%arg0: i32) -> (i32, i32) {
    %c0_i32 = arith.constant 0 : i32
    %c0_i32_0 = arith.constant 0 : i32
    %c0_i32_1 = arith.constant 0 : i32
    return %c0_i32, %c0_i32_0 : i32, i32
  }
  func.func @transform_2(%arg0: i32) -> (i32, i32) {
    %c0_i32 = arith.constant 0 : i32
    %c0_i32_0 = arith.constant 0 : i32
    %c0_i32_1 = arith.constant 0 : i32
    return %c0_i32, %c0_i32_0 : i32, i32
  }
  func.func @transform_3(%arg0: i32) -> (i32, i32) {
    %c0_i32 = arith.constant 0 : i32
    %c0_i32_0 = arith.constant 0 : i32
    return %arg0, %c0_i32 : i32, i32
  }
}

module attributes {stable_mosaic.version = 11 : i64} {
  func.func @_mlp2_kernel(%arg0: i32, %arg1: memref<32x32xf32, #tpu.memory_space<vmem>>, %arg2: memref<32x256xf32, #tpu.memory_space<vmem>>, %arg3: memref<1x256xf32, #tpu.memory_space<vmem>>, %arg4: memref<256x512xf32, #tpu.memory_space<vmem>>, %arg5: memref<1x512xf32, #tpu.memory_space<vmem>>, %arg6: memref<32x512xf32, #tpu.memory_space<vmem>>) attributes {dimension_semantics = [#tpu.dimension_semantics<parallel>], iteration_bounds = array<i64: 1>, scalar_prefetch = 0 : i64, scratch_operands = 0 : i64, tpu.core_type = #tpu.core_type<tc>, window_params = [{transform_indices = @transform_0, window_bounds = array<i64: 32, 32>}, {pipeline_mode = #tpu.pipeline_mode<synchronous>, transform_indices = @transform_1, window_bounds = array<i64: 32, 256>}, {pipeline_mode = #tpu.pipeline_mode<synchronous>, transform_indices = @transform_2, window_bounds = array<i64: 1, 256>}, {pipeline_mode = #tpu.pipeline_mode<synchronous>, transform_indices = @transform_3, window_bounds = array<i64: 256, 512>}, {pipeline_mode = #tpu.pipeline_mode<synchronous>, transform_indices = @transform_4, window_bounds = array<i64: 1, 512>}, {transform_indices = @transform_5, window_bounds = array<i64: 32, 512>}]} {
    %c0 = arith.constant 0 : index
    %c0_0 = arith.constant 0 : index
    %0 = vector.load %arg1[%c0, %c0_0] : memref<32x32xf32, #tpu.memory_space<vmem>>, vector<32x32xf32>
    %c0_1 = arith.constant 0 : index
    %c0_2 = arith.constant 0 : index
    %1 = vector.load %arg2[%c0_1, %c0_2] : memref<32x256xf32, #tpu.memory_space<vmem>>, vector<32x256xf32>
    %cst = arith.constant dense<0.000000e+00> : vector<32x256xf32>
    %2 = tpu.matmul %0, %1, %cst {dimension_numbers = #tpu.dot_dimension_numbers<[1], [0], [0], [1], [0, 0, 1, 1], [], []>} : vector<32x32xf32>, vector<32x256xf32>, vector<32x256xf32> -> vector<32x256xf32>
    %c0_3 = arith.constant 0 : index
    %c0_4 = arith.constant 0 : index
    %3 = vector.load %arg3[%c0_3, %c0_4] : memref<1x256xf32, #tpu.memory_space<vmem>>, vector<1x256xf32>
    %4 = vector.broadcast %3 : vector<1x256xf32> to vector<32x256xf32>
    %5 = arith.addf %2, %4 : vector<32x256xf32>
    %cst_5 = arith.constant 0.000000e+00 : f32
    %6 = vector.broadcast %cst_5 : f32 to vector<32x256xf32>
    %7 = arith.maximumf %5, %6 : vector<32x256xf32>
    %c0_6 = arith.constant 0 : index
    %c0_7 = arith.constant 0 : index
    %8 = vector.load %arg4[%c0_6, %c0_7] : memref<256x512xf32, #tpu.memory_space<vmem>>, vector<256x512xf32>
    %cst_8 = arith.constant dense<0.000000e+00> : vector<32x512xf32>
    %9 = tpu.matmul %7, %8, %cst_8 {dimension_numbers = #tpu.dot_dimension_numbers<[1], [0], [0], [1], [0, 0, 1, 1], [], []>} : vector<32x256xf32>, vector<256x512xf32>, vector<32x512xf32> -> vector<32x512xf32>
    %c0_9 = arith.constant 0 : index
    %c0_10 = arith.constant 0 : index
    %10 = vector.load %arg5[%c0_9, %c0_10] : memref<1x512xf32, #tpu.memory_space<vmem>>, vector<1x512xf32>
    %11 = vector.broadcast %10 : vector<1x512xf32> to vector<32x512xf32>
    %12 = arith.addf %9, %11 : vector<32x512xf32>
    %cst_11 = arith.constant 0.000000e+00 : f32
    %13 = vector.broadcast %cst_11 : f32 to vector<32x512xf32>
    %14 = arith.maximumf %12, %13 : vector<32x512xf32>
    %c0_12 = arith.constant 0 : index
    %c0_13 = arith.constant 0 : index
    %15 = vector.load %arg6[%c0_12, %c0_13] : memref<32x512xf32, #tpu.memory_space<vmem>>, vector<32x512xf32>
    tpu.vector_store %arg6[%c0_12, %c0_13], %14 {strides = array<i32>} : memref<32x512xf32, #tpu.memory_space<vmem>>, vector<32x512xf32>,
    return
  }
  func.func @transform_0(%arg0: i32) -> (i32, i32) {
    %c0_i32 = arith.constant 0 : i32
    %c0_i32_0 = arith.constant 0 : i32
    return %arg0, %c0_i32 : i32, i32
  }
  func.func @transform_1(%arg0: i32) -> (i32, i32) {
    %c0_i32 = arith.constant 0 : i32
    %c0_i32_0 = arith.constant 0 : i32
    %c0_i32_1 = arith.constant 0 : i32
    return %c0_i32, %c0_i32_0 : i32, i32
  }
  func.func @transform_2(%arg0: i32) -> (i32, i32) {
    %c0_i32 = arith.constant 0 : i32
    %c0_i32_0 = arith.constant 0 : i32
    %c0_i32_1 = arith.constant 0 : i32
    return %c0_i32, %c0_i32_0 : i32, i32
  }
  func.func @transform_3(%arg0: i32) -> (i32, i32) {
    %c0_i32 = arith.constant 0 : i32
    %c0_i32_0 = arith.constant 0 : i32
    %c0_i32_1 = arith.constant 0 : i32
    return %c0_i32, %c0_i32_0 : i32, i32
  }
  func.func @transform_4(%arg0: i32) -> (i32, i32) {
    %c0_i32 = arith.constant 0 : i32
    %c0_i32_0 = arith.constant 0 : i32
    %c0_i32_1 = arith.constant 0 : i32
    return %c0_i32, %c0_i32_0 : i32, i32
  }
  func.func @transform_5(%arg0: i32) -> (i32, i32) {
    %c0_i32 = arith.constant 0 : i32
    %c0_i32_0 = arith.constant 0 : i32
    return %arg0, %c0_i32 : i32, i32
  }
}

module attributes {stable_mosaic.version = 11 : i64} {
  func.func @_mlp2_kernel(%arg0: i32, %arg1: memref<32x640xf32, #tpu.memory_space<vmem>>, %arg2: memref<640x64xf32, #tpu.memory_space<vmem>>, %arg3: memref<1x64xf32, #tpu.memory_space<vmem>>, %arg4: memref<64x32xf32, #tpu.memory_space<vmem>>, %arg5: memref<1x32xf32, #tpu.memory_space<vmem>>, %arg6: memref<32x32xf32, #tpu.memory_space<vmem>>) attributes {dimension_semantics = [#tpu.dimension_semantics<parallel>], iteration_bounds = array<i64: 1>, scalar_prefetch = 0 : i64, scratch_operands = 0 : i64, tpu.core_type = #tpu.core_type<tc>, window_params = [{transform_indices = @transform_0, window_bounds = array<i64: 32, 640>}, {pipeline_mode = #tpu.pipeline_mode<synchronous>, transform_indices = @transform_1, window_bounds = array<i64: 640, 64>}, {pipeline_mode = #tpu.pipeline_mode<synchronous>, transform_indices = @transform_2, window_bounds = array<i64: 1, 64>}, {pipeline_mode = #tpu.pipeline_mode<synchronous>, transform_indices = @transform_3, window_bounds = array<i64: 64, 32>}, {pipeline_mode = #tpu.pipeline_mode<synchronous>, transform_indices = @transform_4, window_bounds = array<i64: 1, 32>}, {transform_indices = @transform_5, window_bounds = array<i64: 32, 32>}]} {
    %c0 = arith.constant 0 : index
    %c0_0 = arith.constant 0 : index
    %0 = vector.load %arg1[%c0, %c0_0] : memref<32x640xf32, #tpu.memory_space<vmem>>, vector<32x640xf32>
    %c0_1 = arith.constant 0 : index
    %c0_2 = arith.constant 0 : index
    %1 = vector.load %arg2[%c0_1, %c0_2] : memref<640x64xf32, #tpu.memory_space<vmem>>, vector<640x64xf32>
    %cst = arith.constant dense<0.000000e+00> : vector<32x64xf32>
    %2 = tpu.matmul %0, %1, %cst {dimension_numbers = #tpu.dot_dimension_numbers<[1], [0], [0], [1], [0, 0, 1, 1], [], []>} : vector<32x640xf32>, vector<640x64xf32>, vector<32x64xf32> -> vector<32x64xf32>
    %c0_3 = arith.constant 0 : index
    %c0_4 = arith.constant 0 : index
    %3 = vector.load %arg3[%c0_3, %c0_4] : memref<1x64xf32, #tpu.memory_space<vmem>>, vector<1x64xf32>
    %4 = vector.broadcast %3 : vector<1x64xf32> to vector<32x64xf32>
    %5 = arith.addf %2, %4 : vector<32x64xf32>
    %cst_5 = arith.constant 0.000000e+00 : f32
    %6 = vector.broadcast %cst_5 : f32 to vector<32x64xf32>
    %7 = arith.maximumf %5, %6 : vector<32x64xf32>
    %c0_6 = arith.constant 0 : index
    %c0_7 = arith.constant 0 : index
    %8 = vector.load %arg4[%c0_6, %c0_7] : memref<64x32xf32, #tpu.memory_space<vmem>>, vector<64x32xf32>
    %cst_8 = arith.constant dense<0.000000e+00> : vector<32x32xf32>
    %9 = tpu.matmul %7, %8, %cst_8 {dimension_numbers = #tpu.dot_dimension_numbers<[1], [0], [0], [1], [0, 0, 1, 1], [], []>} : vector<32x64xf32>, vector<64x32xf32>, vector<32x32xf32> -> vector<32x32xf32>
    %c0_9 = arith.constant 0 : index
    %c0_10 = arith.constant 0 : index
    %10 = vector.load %arg5[%c0_9, %c0_10] : memref<1x32xf32, #tpu.memory_space<vmem>>, vector<1x32xf32>
    %11 = vector.broadcast %10 : vector<1x32xf32> to vector<32x32xf32>
    %12 = arith.addf %9, %11 : vector<32x32xf32>
    %cst_11 = arith.constant 0.000000e+00 : f32
    %13 = vector.broadcast %cst_11 : f32 to vector<32x32xf32>
    %14 = arith.maximumf %12, %13 : vector<32x32xf32>
    %c0_12 = arith.constant 0 : index
    %c0_13 = arith.constant 0 : index
    %15 = vector.load %arg6[%c0_12, %c0_13] : memref<32x32xf32, #tpu.memory_space<vmem>>, vector<32x32xf32>
    tpu.vector_store %arg6[%c0_12, %c0_13], %14 {strides = array<i32>} : memref<32x32xf32, #tpu.memory_space<vmem>>, vector<32x32xf32>,
    return
  }
  func.func @transform_0(%arg0: i32) -> (i32, i32) {
    %c0_i32 = arith.constant 0 : i32
    %c0_i32_0 = arith.constant 0 : i32
    return %arg0, %c0_i32 : i32, i32
  }
  func.func @transform_1(%arg0: i32) -> (i32, i32) {
    %c0_i32 = arith.constant 0 : i32
    %c0_i32_0 = arith.constant 0 : i32
    %c0_i32_1 = arith.constant 0 : i32
    return %c0_i32, %c0_i32_0 : i32, i32
  }
  func.func @transform_2(%arg0: i32) -> (i32, i32) {
    %c0_i32 = arith.constant 0 : i32
    %c0_i32_0 = arith.constant 0 : i32
    %c0_i32_1 = arith.constant 0 : i32
    return %c0_i32, %c0_i32_0 : i32, i32
  }
  func.func @transform_3(%arg0: i32) -> (i32, i32) {
    %c0_i32 = arith.constant 0 : i32
    %c0_i32_0 = arith.constant 0 : i32
    %c0_i32_1 = arith.constant 0 : i32
    return %c0_i32, %c0_i32_0 : i32, i32
  }
  func.func @transform_4(%arg0: i32) -> (i32, i32) {
    %c0_i32 = arith.constant 0 : i32
    %c0_i32_0 = arith.constant 0 : i32
    %c0_i32_1 = arith.constant 0 : i32
    return %c0_i32, %c0_i32_0 : i32, i32
  }
  func.func @transform_5(%arg0: i32) -> (i32, i32) {
    %c0_i32 = arith.constant 0 : i32
    %c0_i32_0 = arith.constant 0 : i32
    return %arg0, %c0_i32 : i32, i32
  }
}

</mosaic_0001>

<llo_original>
// kernel: point_transformer_forward.43
$region0: #{point_transformer_forward.43}
  #allocation0 [shape = 'u32[]', space=smem, size = 0x4, offset = 0x4, fixed_abs, tag = 'smem constant byte address 0x4 - core index']
  #allocation1 [shape = 'u32[72,128]{1,0:T(1,128)}', space=vmem, size = 0x9000, scoped, tag = 'internal scratch']
  %s0 = inlined_call_operand.vmem [shape: f32[32,32], index: 0, kind: input, shape index: {}]
  %s1 = inlined_call_operand.vmem [shape: f32[32,96], index: 1, kind: input, shape index: {}]
  %s2 = inlined_call_operand.vmem [shape: f32[1,96], index: 2, kind: input, shape index: {}]
  %s3 = inlined_call_operand.vmem [shape: f32[32,96], index: 3, kind: output, shape index: {}]
  %s4 = sld [smem:[#allocation0]]
  $region22: #{point_transformer_forward.43} parent=0
    _
  %s6 = ssub.s32 1, %s4
  %s7 = scalar_select 0, %s6, %s4
  // Predicated region
  $region2: #{point_transformer_forward.43} parent=0 // pred_check
    _
  $region3: #{point_transformer_forward.43} parent=0 // pred_check_branch
    %9 = sbr.rel (0) target = $region5
  $region4: #{point_transformer_forward.43} parent=0 // pred_region
    _
  $region5: #{point_transformer_forward.43} parent=0 // pred_fallthru
    _
  // Predicated region
  $region6: #{point_transformer_forward.43} parent=0 // pred_check
    _
  $region7: #{point_transformer_forward.43} parent=0 // pred_check_branch
    %11 = sbr.rel (0) target = $region9
  $region8: #{point_transformer_forward.43} parent=0 // pred_region
    _
  $region9: #{point_transformer_forward.43} parent=0 // pred_fallthru
    _
  // Predicated region
  $region10: #{point_transformer_forward.43} parent=0 // pred_check
    _
  $region11: #{point_transformer_forward.43} parent=0 // pred_check_branch
    %13 = sbr.rel (0) target = $region13
  $region12: #{point_transformer_forward.43} parent=0 // pred_region
    _
  $region13: #{point_transformer_forward.43} parent=0 // pred_fallthru
    _
  %v14 = vld [vmem:[%s0] sm:$0xff]
  %v15 = vld [vmem:[%s0 + $0x8] sm:$0xff]
  %v16 = vld [vmem:[%s0 + $0x10] sm:$0xff]
  %v17 = vld [vmem:[%s0 + $0x18] sm:$0xff]
  %v18 = vld [vmem:[%s1] sm:$0xff]
  %v19 = vld [vmem:[%s1 + $0x8] sm:$0xff]
  %v20 = vld [vmem:[%s1 + $0x10] sm:$0xff]
  %v21 = vld [vmem:[%s1 + $0x18] sm:$0xff]
  %v22 = vld [vmem:[%s2] sm:$0x1]
  %v24 = vperm.slane %v22, 0
  %vm26 = vcmask 261120
  %v28 = vsel %vm26, %v14, 0
  %v31 = vsel %vm26, %v15, 0
  %v34 = vsel %vm26, %v16, 0
  %v37 = vsel %vm26, %v17, 0
  %39 = vmatpush.msra.mxu0 0.0
  %40 = vmatpush.msra.mxu0 0.0
  %41 = vmatpush.msra.mxu0 0.0
  %42 = vmatpush.msra.mxu0 0.0
  %43 = vmatpush.msra.mxu0 0.0
  %44 = vmatpush.msra.mxu0 0.0
  %45 = vmatpush.msra.mxu0 0.0
  %46 = vmatpush.msra.mxu0 0.0
  %47 = vmatpush.msra.mxu0 0.0
  %48 = vmatpush.msra.mxu0 0.0
  %49 = vmatpush.msra.mxu0 0.0
  %50 = vmatpush.msra.mxu0 0.0
  %51 = vmatpush.msra.mxu0 %v21
  %52 = vmatpush.msra.mxu0 %v20
  %53 = vmatpush.msra.mxu0 %v19
  %54 = vmatpush.msra.mxu0 %v18
  %55 = vmatmul.f32.gmra.mxu0 %v28
  %v56 = vpop.f32.mrf.mxu0
  %v57 = vadd.f32 %v24, %v56
  %58 = vmatmul.f32.gmra.mxu0 %v31
  %v59 = vpop.f32.mrf.mxu0
  %v60 = vadd.f32 %v24, %v59
  %61 = vmatmul.f32.gmra.mxu0 %v34
  %v62 = vpop.f32.mrf.mxu0
  %v63 = vadd.f32 %v24, %v62
  %64 = vmatmul.f32.gmra.mxu0 %v37
  %v65 = vpop.f32.mrf.mxu0
  %v66 = vadd.f32 %v24, %v65
  %67 = vdwg.mxu0
  %vm68 = vcmask 785408
  %69 = vst.msk [vmem:[%s3] sm:$0xff] %vm68, %v57
  %70 = vst.msk [vmem:[%s3 + $0x8] sm:$0xff] %vm68, %v60
  %71 = vst.msk [vmem:[%s3 + $0x10] sm:$0xff] %vm68, %v63
  %72 = vst.msk [vmem:[%s3 + $0x18] sm:$0xff] %vm68, %v66
  // Predicated region
  $region14: #{point_transformer_forward.43} parent=0 // pred_check
    _
  $region15: #{point_transformer_forward.43} parent=0 // pred_check_branch
    %74 = sbr.rel (0) target = $region17
  $region16: #{point_transformer_forward.43} parent=0 // pred_region
    _
  $region17: #{point_transformer_forward.43} parent=0 // pred_fallthru
    _
  // Predicated region
  $region18: #{point_transformer_forward.43} parent=0 // pred_check
    _
  $region19: #{point_transformer_forward.43} parent=0 // pred_check_branch
    %76 = sbr.rel (0) target = $region21
  $region20: #{point_transformer_forward.43} parent=0 // pred_region
    _
  $region21: #{point_transformer_forward.43} parent=0 // pred_fallthru
    _

// kernel: point_transformer_forward.42
$region0: #{point_transformer_forward.42}
  #allocation0 [shape = 'u32[]', space=smem, size = 0x4, offset = 0x4, fixed_abs, tag = 'smem constant byte address 0x4 - core index']
  #allocation1 [shape = 'u32[72,128]{1,0:T(1,128)}', space=vmem, size = 0x9000, scoped, tag = 'internal scratch']
  %s0 = inlined_call_operand.vmem [shape: f32[32,3], index: 0, kind: input, shape index: {}]
  %s1 = inlined_call_operand.vmem [shape: f32[3,32], index: 1, kind: input, shape index: {}]
  %s2 = inlined_call_operand.vmem [shape: f32[1,32], index: 2, kind: input, shape index: {}]
  %s3 = inlined_call_operand.vmem [shape: f32[32,32], index: 3, kind: input, shape index: {}]
  %s4 = inlined_call_operand.vmem [shape: f32[1,32], index: 4, kind: input, shape index: {}]
  %s5 = inlined_call_operand.vmem [shape: f32[32,32], index: 5, kind: output, shape index: {}]
  %s6 = sld [smem:[#allocation0]]
  $region30: #{point_transformer_forward.42} parent=0
    _
  %s8 = ssub.s32 1, %s6
  %s9 = scalar_select 0, %s8, %s6
  // Predicated region
  $region2: #{point_transformer_forward.42} parent=0 // pred_check
    _
  $region3: #{point_transformer_forward.42} parent=0 // pred_check_branch
    %11 = sbr.rel (0) target = $region5
  $region4: #{point_transformer_forward.42} parent=0 // pred_region
    _
  $region5: #{point_transformer_forward.42} parent=0 // pred_fallthru
    _
  // Predicated region
  $region6: #{point_transformer_forward.42} parent=0 // pred_check
    _
  $region7: #{point_transformer_forward.42} parent=0 // pred_check_branch
    %13 = sbr.rel (0) target = $region9
  $region8: #{point_transformer_forward.42} parent=0 // pred_region
    _
  $region9: #{point_transformer_forward.42} parent=0 // pred_fallthru
    _
  // Predicated region
  $region10: #{point_transformer_forward.42} parent=0 // pred_check
    _
  $region11: #{point_transformer_forward.42} parent=0 // pred_check_branch
    %15 = sbr.rel (0) target = $region13
  $region12: #{point_transformer_forward.42} parent=0 // pred_region
    _
  $region13: #{point_transformer_forward.42} parent=0 // pred_fallthru
    _
  // Predicated region
  $region14: #{point_transformer_forward.42} parent=0 // pred_check
    _
  $region15: #{point_transformer_forward.42} parent=0 // pred_check_branch
    %17 = sbr.rel (0) target = $region17
  $region16: #{point_transformer_forward.42} parent=0 // pred_region
    _
  $region17: #{point_transformer_forward.42} parent=0 // pred_fallthru
    _
  // Predicated region
  $region18: #{point_transformer_forward.42} parent=0 // pred_check
    _
  $region19: #{point_transformer_forward.42} parent=0 // pred_check_branch
    %19 = sbr.rel (0) target = $region21
  $region20: #{point_transformer_forward.42} parent=0 // pred_region
    _
  $region21: #{point_transformer_forward.42} parent=0 // pred_fallthru
    _
  %v20 = vld [vmem:[%s0] sm:$0xff]
  %v21 = vld [vmem:[%s0 + $0x8] sm:$0xff]
  %v22 = vld [vmem:[%s0 + $0x10] sm:$0xff]
  %v23 = vld [vmem:[%s0 + $0x18] sm:$0xff]
  %v24 = vld [vmem:[%s1] sm:$0x7]
  %v25 = vld [vmem:[%s2] sm:$0x1]
  %v27 = vperm.slane %v25, 0
  %vm29 = vcmask 23552
  %v31 = vsel %vm29, %v20, 0
  %v34 = vsel %vm29, %v21, 0
  %v37 = vsel %vm29, %v22, 0
  %v40 = vsel %vm29, %v23, 0
  %vm42 = vcmask 1042432
  %v44 = vsel %vm42, %v24, 0
  %46 = vmatpush.msra.mxu0 0.0
  %47 = vmatpush.msra.mxu0 0.0
  %48 = vmatpush.msra.mxu0 0.0
  %49 = vmatpush.msra.mxu0 0.0
  %50 = vmatpush.msra.mxu0 0.0
  %51 = vmatpush.msra.mxu0 0.0
  %52 = vmatpush.msra.mxu0 0.0
  %53 = vmatpush.msra.mxu0 0.0
  %54 = vmatpush.msra.mxu0 0.0
  %55 = vmatpush.msra.mxu0 0.0
  %56 = vmatpush.msra.mxu0 0.0
  %57 = vmatpush.msra.mxu0 0.0
  %58 = vmatpush.msra.mxu0 0.0
  %59 = vmatpush.msra.mxu0 0.0
  %60 = vmatpush.msra.mxu0 0.0
  %61 = vmatpush.msra.mxu0 %v44
  %62 = vmatmul.f32.gmra.mxu0 %v31
  %v63 = vpop.f32.mrf.mxu0
  %v64 = vadd.f32 %v27, %v63
  %65 = vmatmul.f32.gmra.mxu0 %v34
  %v66 = vpop.f32.mrf.mxu0
  %v67 = vadd.f32 %v27, %v66
  %68 = vmatmul.f32.gmra.mxu0 %v37
  %v69 = vpop.f32.mrf.mxu0
  %v70 = vadd.f32 %v27, %v69
  %71 = vmatmul.f32.gmra.mxu0 %v40
  %v72 = vpop.f32.mrf.mxu0
  %v73 = vadd.f32 %v27, %v72
  %74 = vdwg.mxu0
  %v75 = vmax.f32 %v64, 0.0
  %v76 = vmax.f32 %v67, 0.0
  %v77 = vmax.f32 %v70, 0.0
  %v78 = vmax.f32 %v73, 0.0
  %v79 = vld [vmem:[%s3] sm:$0xff]
  %v80 = vld [vmem:[%s3 + $0x8] sm:$0xff]
  %v81 = vld [vmem:[%s3 + $0x10] sm:$0xff]
  %v82 = vld [vmem:[%s3 + $0x18] sm:$0xff]
  %v83 = vld [vmem:[%s4] sm:$0x1]
  %v85 = vperm.slane %v83, 0
  %vm87 = vcmask 261120
  %v89 = vsel %vm87, %v75, 0
  %v92 = vsel %vm87, %v76, 0
  %v95 = vsel %vm87, %v77, 0
  %v98 = vsel %vm87, %v78, 0
  %100 = vmatpush.msra.mxu0 0.0
  %101 = vmatpush.msra.mxu0 0.0
  %102 = vmatpush.msra.mxu0 0.0
  %103 = vmatpush.msra.mxu0 0.0
  %104 = vmatpush.msra.mxu0 0.0
  %105 = vmatpush.msra.mxu0 0.0
  %106 = vmatpush.msra.mxu0 0.0
  %107 = vmatpush.msra.mxu0 0.0
  %108 = vmatpush.msra.mxu0 0.0
  %109 = vmatpush.msra.mxu0 0.0
  %110 = vmatpush.msra.mxu0 0.0
  %111 = vmatpush.msra.mxu0 0.0
  %112 = vmatpush.msra.mxu0 %v82
  %113 = vmatpush.msra.mxu0 %v81
  %114 = vmatpush.msra.mxu0 %v80
  %115 = vmatpush.msra.mxu0 %v79
  %116 = vmatmul.f32.gmra.mxu0 %v89
  %v117 = vpop.f32.mrf.mxu0
  %v118 = vadd.f32 %v85, %v117
  %119 = vmatmul.f32.gmra.mxu0 %v92
  %v120 = vpop.f32.mrf.mxu0
  %v121 = vadd.f32 %v85, %v120
  %122 = vmatmul.f32.gmra.mxu0 %v95
  %v123 = vpop.f32.mrf.mxu0
  %v124 = vadd.f32 %v85, %v123
  %125 = vmatmul.f32.gmra.mxu0 %v98
  %v126 = vpop.f32.mrf.mxu0
  %v127 = vadd.f32 %v85, %v126
  %128 = vdwg.mxu0
  %v129 = vmax.f32 %v118, 0.0
  %v130 = vmax.f32 %v121, 0.0
  %v131 = vmax.f32 %v124, 0.0
  %v132 = vmax.f32 %v127, 0.0
  %133 = vst.msk [vmem:[%s5] sm:$0xff] %vm87, %v129
  %134 = vst.msk [vmem:[%s5 + $0x8] sm:$0xff] %vm87, %v130
  %135 = vst.msk [vmem:[%s5 + $0x10] sm:$0xff] %vm87, %v131
  %136 = vst.msk [vmem:[%s5 + $0x18] sm:$0xff] %vm87, %v132
  // Predicated region
  $region22: #{point_transformer_forward.42} parent=0 // pred_check
    _
  $region23: #{point_transformer_forward.42} parent=0 // pred_check_branch
    %138 = sbr.rel (0) target = $region25
  $region24: #{point_transformer_forward.42} parent=0 // pred_region
    _
  $region25: #{point_transformer_forward.42} parent=0 // pred_fallthru
    _
  // Predicated region
  $region26: #{point_transformer_forward.42} parent=0 // pred_check
    _
  $region27: #{point_transformer_forward.42} parent=0 // pred_check_branch
    %140 = sbr.rel (0) target = $region29
  $region28: #{point_transformer_forward.42} parent=0 // pred_region
    _
  $region29: #{point_transformer_forward.42} parent=0 // pred_fallthru
    _

// kernel: point_transformer_forward.45
$region0: #{point_transformer_forward.45}
  #allocation0 [shape = 'u32[]', space=smem, size = 0x4, offset = 0x4, fixed_abs, tag = 'smem constant byte address 0x4 - core index']
  #allocation1 [shape = 'u32[72,128]{1,0:T(1,128)}', space=vmem, size = 0x9000, scoped, tag = 'internal scratch']
  %s0 = inlined_call_operand.vmem [shape: f32[32,32], index: 0, kind: input, shape index: {}]
  %s1 = inlined_call_operand.vmem [shape: f32[32,32], index: 1, kind: input, shape index: {}]
  %s2 = inlined_call_operand.vmem [shape: f32[1,32], index: 2, kind: input, shape index: {}]
  %s3 = inlined_call_operand.vmem [shape: f32[32,32], index: 3, kind: input, shape index: {}]
  %s4 = inlined_call_operand.vmem [shape: f32[32,32], index: 4, kind: output, shape index: {}]
  %s5 = sld [smem:[#allocation0]]
  $region26: #{point_transformer_forward.45} parent=0
    _
  %s7 = ssub.s32 1, %s5
  %s8 = scalar_select 0, %s7, %s5
  // Predicated region
  $region2: #{point_transformer_forward.45} parent=0 // pred_check
    _
  $region3: #{point_transformer_forward.45} parent=0 // pred_check_branch
    %10 = sbr.rel (0) target = $region5
  $region4: #{point_transformer_forward.45} parent=0 // pred_region
    _
  $region5: #{point_transformer_forward.45} parent=0 // pred_fallthru
    _
  // Predicated region
  $region6: #{point_transformer_forward.45} parent=0 // pred_check
    _
  $region7: #{point_transformer_forward.45} parent=0 // pred_check_branch
    %12 = sbr.rel (0) target = $region9
  $region8: #{point_transformer_forward.45} parent=0 // pred_region
    _
  $region9: #{point_transformer_forward.45} parent=0 // pred_fallthru
    _
  // Predicated region
  $region10: #{point_transformer_forward.45} parent=0 // pred_check
    _
  $region11: #{point_transformer_forward.45} parent=0 // pred_check_branch
    %14 = sbr.rel (0) target = $region13
  $region12: #{point_transformer_forward.45} parent=0 // pred_region
    _
  $region13: #{point_transformer_forward.45} parent=0 // pred_fallthru
    _
  // Predicated region
  $region14: #{point_transformer_forward.45} parent=0 // pred_check
    _
  $region15: #{point_transformer_forward.45} parent=0 // pred_check_branch
    %16 = sbr.rel (0) target = $region17
  $region16: #{point_transformer_forward.45} parent=0 // pred_region
    _
  $region17: #{point_transformer_forward.45} parent=0 // pred_fallthru
    _
  %v17 = vld [vmem:[%s0] sm:$0xff]
  %v18 = vld [vmem:[%s0 + $0x8] sm:$0xff]
  %v19 = vld [vmem:[%s0 + $0x10] sm:$0xff]
  %v20 = vld [vmem:[%s0 + $0x18] sm:$0xff]
  %v21 = vld [vmem:[%s1] sm:$0xff]
  %v22 = vld [vmem:[%s1 + $0x8] sm:$0xff]
  %v23 = vld [vmem:[%s1 + $0x10] sm:$0xff]
  %v24 = vld [vmem:[%s1 + $0x18] sm:$0xff]
  %v25 = vld [vmem:[%s2] sm:$0x1]
  %v27 = vperm.slane %v25, 0
  %vm29 = vcmask 261120
  %v31 = vsel %vm29, %v17, 0
  %v34 = vsel %vm29, %v18, 0
  %v37 = vsel %vm29, %v19, 0
  %v40 = vsel %vm29, %v20, 0
  %42 = vmatpush.msra.mxu0 0.0
  %43 = vmatpush.msra.mxu0 0.0
  %44 = vmatpush.msra.mxu0 0.0
  %45 = vmatpush.msra.mxu0 0.0
  %46 = vmatpush.msra.mxu0 0.0
  %47 = vmatpush.msra.mxu0 0.0
  %48 = vmatpush.msra.mxu0 0.0
  %49 = vmatpush.msra.mxu0 0.0
  %50 = vmatpush.msra.mxu0 0.0
  %51 = vmatpush.msra.mxu0 0.0
  %52 = vmatpush.msra.mxu0 0.0
  %53 = vmatpush.msra.mxu0 0.0
  %54 = vmatpush.msra.mxu0 %v24
  %55 = vmatpush.msra.mxu0 %v23
  %56 = vmatpush.msra.mxu0 %v22
  %57 = vmatpush.msra.mxu0 %v21
  %58 = vmatmul.f32.gmra.mxu0 %v31
  %v59 = vpop.f32.mrf.mxu0
  %v60 = vadd.f32 %v27, %v59
  %61 = vmatmul.f32.gmra.mxu0 %v34
  %v62 = vpop.f32.mrf.mxu0
  %v63 = vadd.f32 %v27, %v62
  %64 = vmatmul.f32.gmra.mxu0 %v37
  %v65 = vpop.f32.mrf.mxu0
  %v66 = vadd.f32 %v27, %v65
  %67 = vmatmul.f32.gmra.mxu0 %v40
  %v68 = vpop.f32.mrf.mxu0
  %v69 = vadd.f32 %v27, %v68
  %70 = vdwg.mxu0
  %v71 = vld [vmem:[%s3] sm:$0xff]
  %v72 = vld [vmem:[%s3 + $0x8] sm:$0xff]
  %v73 = vld [vmem:[%s3 + $0x10] sm:$0xff]
  %v74 = vld [vmem:[%s3 + $0x18] sm:$0xff]
  %v75 = vadd.f32 %v60, %v71
  %v76 = vadd.f32 %v63, %v72
  %v77 = vadd.f32 %v66, %v73
  %v78 = vadd.f32 %v69, %v74
  %79 = vst.msk [vmem:[%s4] sm:$0xff] %vm29, %v75
  %80 = vst.msk [vmem:[%s4 + $0x8] sm:$0xff] %vm29, %v76
  %81 = vst.msk [vmem:[%s4 + $0x10] sm:$0xff] %vm29, %v77
  %82 = vst.msk [vmem:[%s4 + $0x18] sm:$0xff] %vm29, %v78
  // Predicated region
  $region18: #{point_transformer_forward.45} parent=0 // pred_check
    _
  $region19: #{point_transformer_forward.45} parent=0 // pred_check_branch
    %84 = sbr.rel (0) target = $region21
  $region20: #{point_transformer_forward.45} parent=0 // pred_region
    _
  $region21: #{point_transformer_forward.45} parent=0 // pred_fallthru
    _
  // Predicated region
  $region22: #{point_transformer_forward.45} parent=0 // pred_check
    _
  $region23: #{point_transformer_forward.45} parent=0 // pred_check_branch
    %86 = sbr.rel (0) target = $region25
  $region24: #{point_transformer_forward.45} parent=0 // pred_region
    _
  $region25: #{point_transformer_forward.45} parent=0 // pred_fallthru
    _

// kernel: point_transformer_forward.46
$region0: #{point_transformer_forward.46}
  #allocation0 [shape = 'u32[]', space=smem, size = 0x4, offset = 0x4, fixed_abs, tag = 'smem constant byte address 0x4 - core index']
  #allocation1 [shape = 'u32[72,128]{1,0:T(1,128)}', space=vmem, size = 0x9000, scoped, tag = 'internal scratch']
  %s0 = inlined_call_operand.vmem [shape: f32[32,32], index: 0, kind: input, shape index: {}]
  %s1 = inlined_call_operand.vmem [shape: f32[32,64], index: 1, kind: input, shape index: {}]
  %s2 = inlined_call_operand.vmem [shape: f32[1,64], index: 2, kind: input, shape index: {}]
  %s3 = inlined_call_operand.vmem [shape: f32[64,32], index: 3, kind: input, shape index: {}]
  %s4 = inlined_call_operand.vmem [shape: f32[1,32], index: 4, kind: input, shape index: {}]
  %s5 = inlined_call_operand.vmem [shape: f32[32,32], index: 5, kind: output, shape index: {}]
  %s6 = sld [smem:[#allocation0]]
  $region30: #{point_transformer_forward.46} parent=0
    _
  %s8 = ssub.s32 1, %s6
  %s9 = scalar_select 0, %s8, %s6
  // Predicated region
  $region2: #{point_transformer_forward.46} parent=0 // pred_check
    _
  $region3: #{point_transformer_forward.46} parent=0 // pred_check_branch
    %11 = sbr.rel (0) target = $region5
  $region4: #{point_transformer_forward.46} parent=0 // pred_region
    _
  $region5: #{point_transformer_forward.46} parent=0 // pred_fallthru
    _
  // Predicated region
  $region6: #{point_transformer_forward.46} parent=0 // pred_check
    _
  $region7: #{point_transformer_forward.46} parent=0 // pred_check_branch
    %13 = sbr.rel (0) target = $region9
  $region8: #{point_transformer_forward.46} parent=0 // pred_region
    _
  $region9: #{point_transformer_forward.46} parent=0 // pred_fallthru
    _
  // Predicated region
  $region10: #{point_transformer_forward.46} parent=0 // pred_check
    _
  $region11: #{point_transformer_forward.46} parent=0 // pred_check_branch
    %15 = sbr.rel (0) target = $region13
  $region12: #{point_transformer_forward.46} parent=0 // pred_region
    _
  $region13: #{point_transformer_forward.46} parent=0 // pred_fallthru
    _
  // Predicated region
  $region14: #{point_transformer_forward.46} parent=0 // pred_check
    _
  $region15: #{point_transformer_forward.46} parent=0 // pred_check_branch
    %17 = sbr.rel (0) target = $region17
  $region16: #{point_transformer_forward.46} parent=0 // pred_region
    _
  $region17: #{point_transformer_forward.46} parent=0 // pred_fallthru
    _
  // Predicated region
  $region18: #{point_transformer_forward.46} parent=0 // pred_check
    _
  $region19: #{point_transformer_forward.46} parent=0 // pred_check_branch
    %19 = sbr.rel (0) target = $region21
  $region20: #{point_transformer_forward.46} parent=0 // pred_region
    _
  $region21: #{point_transformer_forward.46} parent=0 // pred_fallthru
    _
  %v20 = vld [vmem:[%s0] sm:$0xff]
  %v21 = vld [vmem:[%s0 + $0x8] sm:$0xff]
  %v22 = vld [vmem:[%s0 + $0x10] sm:$0xff]
  %v23 = vld [vmem:[%s0 + $0x18] sm:$0xff]
  %v24 = vld [vmem:[%s1] sm:$0xff]
  %v25 = vld [vmem:[%s1 + $0x8] sm:$0xff]
  %v26 = vld [vmem:[%s1 + $0x10] sm:$0xff]
  %v27 = vld [vmem:[%s1 + $0x18] sm:$0xff]
  %v28 = vld [vmem:[%s2] sm:$0x1]
  %v30 = vperm.slane %v28, 0
  %vm32 = vcmask 261120
  %v34 = vsel %vm32, %v20, 0
  %v37 = vsel %vm32, %v21, 0
  %v40 = vsel %vm32, %v22, 0
  %v43 = vsel %vm32, %v23, 0
  %45 = vmatpush.msra.mxu0 0.0
  %46 = vmatpush.msra.mxu0 0.0
  %47 = vmatpush.msra.mxu0 0.0
  %48 = vmatpush.msra.mxu0 0.0
  %49 = vmatpush.msra.mxu0 0.0
  %50 = vmatpush.msra.mxu0 0.0
  %51 = vmatpush.msra.mxu0 0.0
  %52 = vmatpush.msra.mxu0 0.0
  %53 = vmatpush.msra.mxu0 0.0
  %54 = vmatpush.msra.mxu0 0.0
  %55 = vmatpush.msra.mxu0 0.0
  %56 = vmatpush.msra.mxu0 0.0
  %57 = vmatpush.msra.mxu0 %v27
  %58 = vmatpush.msra.mxu0 %v26
  %59 = vmatpush.msra.mxu0 %v25
  %60 = vmatpush.msra.mxu0 %v24
  %61 = vmatmul.f32.gmra.mxu0 %v34
  %v62 = vpop.f32.mrf.mxu0
  %v63 = vadd.f32 %v30, %v62
  %64 = vmatmul.f32.gmra.mxu0 %v37
  %v65 = vpop.f32.mrf.mxu0
  %v66 = vadd.f32 %v30, %v65
  %67 = vmatmul.f32.gmra.mxu0 %v40
  %v68 = vpop.f32.mrf.mxu0
  %v69 = vadd.f32 %v30, %v68
  %70 = vmatmul.f32.gmra.mxu0 %v43
  %v71 = vpop.f32.mrf.mxu0
  %v72 = vadd.f32 %v30, %v71
  %73 = vdwg.mxu0
  %v74 = vmax.f32 %v63, 0.0
  %v75 = vmax.f32 %v66, 0.0
  %v76 = vmax.f32 %v69, 0.0
  %v77 = vmax.f32 %v72, 0.0
  %v78 = vld [vmem:[%s3] sm:$0xff]
  %v79 = vld [vmem:[%s3 + $0x8] sm:$0xff]
  %v80 = vld [vmem:[%s3 + $0x10] sm:$0xff]
  %v81 = vld [vmem:[%s3 + $0x18] sm:$0xff]
  %v82 = vld [vmem:[%s3 + $0x20] sm:$0xff]
  %v83 = vld [vmem:[%s3 + $0x28] sm:$0xff]
  %v84 = vld [vmem:[%s3 + $0x30] sm:$0xff]
  %v85 = vld [vmem:[%s3 + $0x38] sm:$0xff]
  %v86 = vld [vmem:[%s4] sm:$0x1]
  %v88 = vperm.slane %v86, 0
  %vm90 = vcmask 523264
  %v92 = vsel %vm90, %v74, 0
  %v95 = vsel %vm90, %v75, 0
  %v98 = vsel %vm90, %v76, 0
  %v101 = vsel %vm90, %v77, 0
  %103 = vmatpush.msra.mxu0 0.0
  %104 = vmatpush.msra.mxu0 0.0
  %105 = vmatpush.msra.mxu0 0.0
  %106 = vmatpush.msra.mxu0 0.0
  %107 = vmatpush.msra.mxu0 0.0
  %108 = vmatpush.msra.mxu0 0.0
  %109 = vmatpush.msra.mxu0 0.0
  %110 = vmatpush.msra.mxu0 0.0
  %111 = vmatpush.msra.mxu0 %v85
  %112 = vmatpush.msra.mxu0 %v84
  %113 = vmatpush.msra.mxu0 %v83
  %114 = vmatpush.msra.mxu0 %v82
  %115 = vmatpush.msra.mxu0 %v81
  %116 = vmatpush.msra.mxu0 %v80
  %117 = vmatpush.msra.mxu0 %v79
  %118 = vmatpush.msra.mxu0 %v78
  %119 = vmatmul.f32.gmra.mxu0 %v92
  %v120 = vpop.f32.mrf.mxu0
  %v121 = vadd.f32 %v88, %v120
  %122 = vmatmul.f32.gmra.mxu0 %v95
  %v123 = vpop.f32.mrf.mxu0
  %v124 = vadd.f32 %v88, %v123
  %125 = vmatmul.f32.gmra.mxu0 %v98
  %v126 = vpop.f32.mrf.mxu0
  %v127 = vadd.f32 %v88, %v126
  %128 = vmatmul.f32.gmra.mxu0 %v101
  %v129 = vpop.f32.mrf.mxu0
  %v130 = vadd.f32 %v88, %v129
  %131 = vdwg.mxu0
  %v132 = vadd.f32 %v121, %v20
  %v133 = vadd.f32 %v124, %v21
  %v134 = vadd.f32 %v127, %v22
  %v135 = vadd.f32 %v130, %v23
  %v136 = vmax.f32 %v132, 0.0
  %v137 = vmax.f32 %v133, 0.0
  %v138 = vmax.f32 %v134, 0.0
  %v139 = vmax.f32 %v135, 0.0
  %140 = vst.msk [vmem:[%s5] sm:$0xff] %vm32, %v136
  %141 = vst.msk [vmem:[%s5 + $0x8] sm:$0xff] %vm32, %v137
  %142 = vst.msk [vmem:[%s5 + $0x10] sm:$0xff] %vm32, %v138
  %143 = vst.msk [vmem:[%s5 + $0x18] sm:$0xff] %vm32, %v139
  // Predicated region
  $region22: #{point_transformer_forward.46} parent=0 // pred_check
    _
  $region23: #{point_transformer_forward.46} parent=0 // pred_check_branch
    %145 = sbr.rel (0) target = $region25
  $region24: #{point_transformer_forward.46} parent=0 // pred_region
    _
  $region25: #{point_transformer_forward.46} parent=0 // pred_fallthru
    _
  // Predicated region
  $region26: #{point_transformer_forward.46} parent=0 // pred_check
    _
  $region27: #{point_transformer_forward.46} parent=0 // pred_check_branch
    %147 = sbr.rel (0) target = $region29
  $region28: #{point_transformer_forward.46} parent=0 // pred_region
    _
  $region29: #{point_transformer_forward.46} parent=0 // pred_fallthru
    _

// kernel: point_transformer_forward.44
$region0: #{point_transformer_forward.44}
  #allocation0 [shape = 'u32[]', space=smem, size = 0x4, offset = 0x4, fixed_abs, tag = 'smem constant byte address 0x4 - core index']
  #allocation1 [shape = 'u32[72,128]{1,0:T(1,128)}', space=vmem, size = 0x9000, scoped, tag = 'internal scratch']
  %s0 = inlined_call_operand.vmem [shape: f32[32,3], index: 0, kind: input, shape index: {}]
  %s1 = inlined_call_operand.vmem [shape: f32[32,8,3], index: 1, kind: input, shape index: {}]
  %s2 = inlined_call_operand.vmem [shape: f32[32,32], index: 2, kind: input, shape index: {}]
  %s3 = inlined_call_operand.vmem [shape: f32[32,8,32], index: 3, kind: input, shape index: {}]
  %s4 = inlined_call_operand.vmem [shape: f32[32,8,32], index: 4, kind: input, shape index: {}]
  %s5 = inlined_call_operand.vmem [shape: f32[3,16], index: 5, kind: input, shape index: {}]
  %s6 = inlined_call_operand.vmem [shape: f32[1,16], index: 6, kind: input, shape index: {}]
  %s7 = inlined_call_operand.vmem [shape: f32[16,32], index: 7, kind: input, shape index: {}]
  %s8 = inlined_call_operand.vmem [shape: f32[1,32], index: 8, kind: input, shape index: {}]
  %s9 = inlined_call_operand.vmem [shape: f32[32,16], index: 9, kind: input, shape index: {}]
  %s10 = inlined_call_operand.vmem [shape: f32[1,16], index: 10, kind: input, shape index: {}]
  %s11 = inlined_call_operand.vmem [shape: f32[16,32], index: 11, kind: input, shape index: {}]
  %s12 = inlined_call_operand.vmem [shape: f32[1,32], index: 12, kind: input, shape index: {}]
  %s13 = inlined_call_operand.vmem [shape: f32[32,32], index: 13, kind: output, shape index: {}]
  %s14 = sld [smem:[#allocation0]]
  $region62: #{point_transformer_forward.44} parent=0
    _
  %s16 = ssub.s32 1, %s14
  %s17 = scalar_select 0, %s16, %s14
  // Predicated region
  $region2: #{point_transformer_forward.44} parent=0 // pred_check
    _
  $region3: #{point_transformer_forward.44} parent=0 // pred_check_branch
    %19 = sbr.rel (0) target = $region5
  $region4: #{point_transformer_forward.44} parent=0 // pred_region
    _
  $region5: #{point_transformer_forward.44} parent=0 // pred_fallthru
    _
  // Predicated region
  $region6: #{point_transformer_forward.44} parent=0 // pred_check
    _
  $region7: #{point_transformer_forward.44} parent=0 // pred_check_branch
    %21 = sbr.rel (0) target = $region9
  $region8: #{point_transformer_forward.44} parent=0 // pred_region
    _
  $region9: #{point_transformer_forward.44} parent=0 // pred_fallthru
    _
  // Predicated region
  $region10: #{point_transformer_forward.44} parent=0 // pred_check
    _
  $region11: #{point_transformer_forward.44} parent=0 // pred_check_branch
    %23 = sbr.rel (0) target = $region13
  $region12: #{point_transformer_forward.44} parent=0 // pred_region
    _
  $region13: #{point_transformer_forward.44} parent=0 // pred_fallthru
    _
  // Predicated region
  $region14: #{point_transformer_forward.44} parent=0 // pred_check
    _
  $region15: #{point_transformer_forward.44} parent=0 // pred_check_branch
    %25 = sbr.rel (0) target = $region17
  $region16: #{point_transformer_forward.44} parent=0 // pred_region
    _
  $region17: #{point_transformer_forward.44} parent=0 // pred_fallthru
    _
  // Predicated region
  $region18: #{point_transformer_forward.44} parent=0 // pred_check
    _
  $region19: #{point_transformer_forward.44} parent=0 // pred_check_branch
    %27 = sbr.rel (0) target = $region21
  $region20: #{point_transformer_forward.44} parent=0 // pred_region
    _
  $region21: #{point_transformer_forward.44} parent=0 // pred_fallthru
    _
  // Predicated region
  $region22: #{point_transformer_forward.44} parent=0 // pred_check
    _
  $region23: #{point_transformer_forward.44} parent=0 // pred_check_branch
    %29 = sbr.rel (0) target = $region25
  $region24: #{point_transformer_forward.44} parent=0 // pred_region
    _
  $region25: #{point_transformer_forward.44} parent=0 // pred_fallthru
    _
  // Predicated region
  $region26: #{point_transformer_forward.44} parent=0 // pred_check
    _
  $region27: #{point_transformer_forward.44} parent=0 // pred_check_branch
    %31 = sbr.rel (0) target = $region29
  $region28: #{point_transformer_forward.44} parent=0 // pred_region
    _
  $region29: #{point_transformer_forward.44} parent=0 // pred_fallthru
    _
  // Predicated region
  $region30: #{point_transformer_forward.44} parent=0 // pred_check
    _
  $region31: #{point_transformer_forward.44} parent=0 // pred_check_branch
    %33 = sbr.rel (0) target = $region33
  $region32: #{point_transformer_forward.44} parent=0 // pred_region
    _
  $region33: #{point_transformer_forward.44} parent=0 // pred_fallthru
    _
  // Predicated region
  $region34: #{point_transformer_forward.44} parent=0 // pred_check
    _
  $region35: #{point_transformer_forward.44} parent=0 // pred_check_branch
    %35 = sbr.rel (0) target = $region37
  $region36: #{point_transformer_forward.44} parent=0 // pred_region
    _
  $region37: #{point_transformer_forward.44} parent=0 // pred_fallthru
    _
  // Predicated region
  $region38: #{point_transformer_forward.44} parent=0 // pred_check
    _
  $region39: #{point_transformer_forward.44} parent=0 // pred_check_branch
    %37 = sbr.rel (0) target = $region41
  $region40: #{point_transformer_forward.44} parent=0 // pred_region
    _
  $region41: #{point_transformer_forward.44} parent=0 // pred_fallthru
    _
  // Predicated region
  $region42: #{point_transformer_forward.44} parent=0 // pred_check
    _
  $region43: #{point_transformer_forward.44} parent=0 // pred_check_branch
    %39 = sbr.rel (0) target = $region45
  $region44: #{point_transformer_forward.44} parent=0 // pred_region
    _
  $region45: #{point_transformer_forward.44} parent=0 // pred_fallthru
    _
  // Predicated region
  $region46: #{point_transformer_forward.44} parent=0 // pred_check
    _
  $region47: #{point_transformer_forward.44} parent=0 // pred_check_branch
    %41 = sbr.rel (0) target = $region49
  $region48: #{point_transformer_forward.44} parent=0 // pred_region
    _
  $region49: #{point_transformer_forward.44} parent=0 // pred_fallthru
    _
  // Predicated region
  $region50: #{point_transformer_forward.44} parent=0 // pred_check
    _
  $region51: #{point_transformer_forward.44} parent=0 // pred_check_branch
    %43 = sbr.rel (0) target = $region53
  $region52: #{point_transformer_forward.44} parent=0 // pred_region
    _
  $region53: #{point_transformer_forward.44} parent=0 // pred_fallthru
    _
  %v44 = vld [vmem:[%s0] sm:$0xff]
  %v45 = vld [vmem:[%s0 + $0x8] sm:$0xff]
  %v46 = vld [vmem:[%s0 + $0x10] sm:$0xff]
  %v47 = vld [vmem:[%s0 + $0x18] sm:$0xff]
  %v52 = vrot.slane %v44, 1
  %v53 = vrot.slane %v44, 2
  %v54 = vrot.slane %v44, 3
  %v55 = vrot.slane %v44, 4
  %v56 = vrot.slane %v44, 5
  %v57 = vrot.slane %v44, 6
  %v58 = vrot.slane %v44, 7
  %v59 = vrot.slane %v45, 1
  %v60 = vrot.slane %v45, 2
  %v61 = vrot.slane %v45, 3
  %v62 = vrot.slane %v45, 4
  %v63 = vrot.slane %v45, 5
  %v64 = vrot.slane %v45, 6
  %v65 = vrot.slane %v45, 7
  %v66 = vrot.slane %v46, 1
  %v67 = vrot.slane %v46, 2
  %v68 = vrot.slane %v46, 3
  %v69 = vrot.slane %v46, 4
  %v70 = vrot.slane %v46, 5
  %v71 = vrot.slane %v46, 6
  %v72 = vrot.slane %v46, 7
  %v73 = vrot.slane %v47, 1
  %v74 = vrot.slane %v47, 2
  %v75 = vrot.slane %v47, 3
  %v76 = vrot.slane %v47, 4
  %v77 = vrot.slane %v47, 5
  %v78 = vrot.slane %v47, 6
  %v79 = vrot.slane %v47, 7
  %v80 = vld [vmem:[%s1] sm:$0xff]
  %v81 = vld [vmem:[%s1 + $0x8] sm:$0xff]
  %v82 = vld [vmem:[%s1 + $0x10] sm:$0xff]
  %v83 = vld [vmem:[%s1 + $0x18] sm:$0xff]
  %v84 = vld [vmem:[%s1 + $0x20] sm:$0xff]
  %v85 = vld [vmem:[%s1 + $0x28] sm:$0xff]
  %v86 = vld [vmem:[%s1 + $0x30] sm:$0xff]
  %v87 = vld [vmem:[%s1 + $0x38] sm:$0xff]
  %v88 = vld [vmem:[%s1 + $0x40] sm:$0xff]
  %v89 = vld [vmem:[%s1 + $0x48] sm:$0xff]
  %v90 = vld [vmem:[%s1 + $0x50] sm:$0xff]
  %v91 = vld [vmem:[%s1 + $0x58] sm:$0xff]
  %v92 = vld [vmem:[%s1 + $0x60] sm:$0xff]
  %v93 = vld [vmem:[%s1 + $0x68] sm:$0xff]
  %v94 = vld [vmem:[%s1 + $0x70] sm:$0xff]
  %v95 = vld [vmem:[%s1 + $0x78] sm:$0xff]
  %v96 = vld [vmem:[%s1 + $0x80] sm:$0xff]
  %v97 = vld [vmem:[%s1 + $0x88] sm:$0xff]
  %v98 = vld [vmem:[%s1 + $0x90] sm:$0xff]
  %v99 = vld [vmem:[%s1 + $0x98] sm:$0xff]
  %v100 = vld [vmem:[%s1 + $0xa0] sm:$0xff]
  %v101 = vld [vmem:[%s1 + $0xa8] sm:$0xff]
  %v102 = vld [vmem:[%s1 + $0xb0] sm:$0xff]
  %v103 = vld [vmem:[%s1 + $0xb8] sm:$0xff]
  %v104 = vld [vmem:[%s1 + $0xc0] sm:$0xff]
  %v105 = vld [vmem:[%s1 + $0xc8] sm:$0xff]
  %v106 = vld [vmem:[%s1 + $0xd0] sm:$0xff]
  %v107 = vld [vmem:[%s1 + $0xd8] sm:$0xff]
  %v108 = vld [vmem:[%s1 + $0xe0] sm:$0xff]
  %v109 = vld [vmem:[%s1 + $0xe8] sm:$0xff]
  %v110 = vld [vmem:[%s1 + $0xf0] sm:$0xff]
  %v111 = vld [vmem:[%s1 + $0xf8] sm:$0xff]
  %v112 = vperm.slane %v44, 0
  %v113 = vperm.slane %v52, 0
  %v114 = vperm.slane %v53, 0
  %v115 = vperm.slane %v54, 0
  %v116 = vperm.slane %v55, 0
  %v117 = vperm.slane %v56, 0
  %v118 = vperm.slane %v57, 0
  %v119 = vperm.slane %v58, 0
  %v120 = vperm.slane %v45, 0
  %v121 = vperm.slane %v59, 0
  %v122 = vperm.slane %v60, 0
  %v123 = vperm.slane %v61, 0
  %v124 = vperm.slane %v62, 0
  %v125 = vperm.slane %v63, 0
  %v126 = vperm.slane %v64, 0
  %v127 = vperm.slane %v65, 0
  %v128 = vperm.slane %v46, 0
  %v129 = vperm.slane %v66, 0
  %v130 = vperm.slane %v67, 0
  %v131 = vperm.slane %v68, 0
  %v132 = vperm.slane %v69, 0
  %v133 = vperm.slane %v70, 0
  %v134 = vperm.slane %v71, 0
  %v135 = vperm.slane %v72, 0
  %v136 = vperm.slane %v47, 0
  %v137 = vperm.slane %v73, 0
  %v138 = vperm.slane %v74, 0
  %v139 = vperm.slane %v75, 0
  %v140 = vperm.slane %v76, 0
  %v141 = vperm.slane %v77, 0
  %v142 = vperm.slane %v78, 0
  %v143 = vperm.slane %v79, 0
  %v176 = vsub.f32 %v112, %v80
  %v177 = vsub.f32 %v113, %v81
  %v178 = vsub.f32 %v114, %v82
  %v179 = vsub.f32 %v115, %v83
  %v180 = vsub.f32 %v116, %v84
  %v181 = vsub.f32 %v117, %v85
  %v182 = vsub.f32 %v118, %v86
  %v183 = vsub.f32 %v119, %v87
  %v184 = vsub.f32 %v120, %v88
  %v185 = vsub.f32 %v121, %v89
  %v186 = vsub.f32 %v122, %v90
  %v187 = vsub.f32 %v123, %v91
  %v188 = vsub.f32 %v124, %v92
  %v189 = vsub.f32 %v125, %v93
  %v190 = vsub.f32 %v126, %v94
  %v191 = vsub.f32 %v127, %v95
  %v192 = vsub.f32 %v128, %v96
  %v193 = vsub.f32 %v129, %v97
  %v194 = vsub.f32 %v130, %v98
  %v195 = vsub.f32 %v131, %v99
  %v196 = vsub.f32 %v132, %v100
  %v197 = vsub.f32 %v133, %v101
  %v198 = vsub.f32 %v134, %v102
  %v199 = vsub.f32 %v135, %v103
  %v200 = vsub.f32 %v136, %v104
  %v201 = vsub.f32 %v137, %v105
  %v202 = vsub.f32 %v138, %v106
  %v203 = vsub.f32 %v139, %v107
  %v204 = vsub.f32 %v140, %v108
  %v205 = vsub.f32 %v141, %v109
  %v206 = vsub.f32 %v142, %v110
  %v207 = vsub.f32 %v143, %v111
  %v208 = vld [vmem:[%s5] sm:$0x7]
  %v209 = vld [vmem:[%s6] sm:$0x1]
  %v211 = vperm.slane %v209, 0
  %vm213 = vcmask 23552
  %v215 = vsel %vm213, %v176, 0
  %v218 = vsel %vm213, %v177, 0
  %v221 = vsel %vm213, %v178, 0
  %v224 = vsel %vm213, %v179, 0
  %v227 = vsel %vm213, %v180, 0
  %v230 = vsel %vm213, %v181, 0
  %v233 = vsel %vm213, %v182, 0
  %v236 = vsel %vm213, %v183, 0
  %v239 = vsel %vm213, %v184, 0
  %v242 = vsel %vm213, %v185, 0
  %v245 = vsel %vm213, %v186, 0
  %v248 = vsel %vm213, %v187, 0
  %v251 = vsel %vm213, %v188, 0
  %v254 = vsel %vm213, %v189, 0
  %v257 = vsel %vm213, %v190, 0
  %v260 = vsel %vm213, %v191, 0
  %v263 = vsel %vm213, %v192, 0
  %v266 = vsel %vm213, %v193, 0
  %v269 = vsel %vm213, %v194, 0
  %v272 = vsel %vm213, %v195, 0
  %v275 = vsel %vm213, %v196, 0
  %v278 = vsel %vm213, %v197, 0
  %v281 = vsel %vm213, %v198, 0
  %v284 = vsel %vm213, %v199, 0
  %v287 = vsel %vm213, %v200, 0
  %v290 = vsel %vm213, %v201, 0
  %v293 = vsel %vm213, %v202, 0
  %v296 = vsel %vm213, %v203, 0
  %v299 = vsel %vm213, %v204, 0
  %v302 = vsel %vm213, %v205, 0
  %v305 = vsel %vm213, %v206, 0
  %v308 = vsel %vm213, %v207, 0
  %vm310 = vcmask 1042432
  %v312 = vsel %vm310, %v208, 0
  %314 = vmatpush.msra.mxu0 0.0
  %315 = vmatpush.msra.mxu0 0.0
  %316 = vmatpush.msra.mxu0 0.0
  %317 = vmatpush.msra.mxu0 0.0
  %318 = vmatpush.msra.mxu0 0.0
  %319 = vmatpush.msra.mxu0 0.0
  %320 = vmatpush.msra.mxu0 0.0
  %321 = vmatpush.msra.mxu0 0.0
  %322 = vmatpush.msra.mxu0 0.0
  %323 = vmatpush.msra.mxu0 0.0
  %324 = vmatpush.msra.mxu0 0.0
  %325 = vmatpush.msra.mxu0 0.0
  %326 = vmatpush.msra.mxu0 0.0
  %327 = vmatpush.msra.mxu0 0.0
  %328 = vmatpush.msra.mxu0 0.0
  %329 = vmatpush.msra.mxu0 %v312
  %330 = vmatmul.f32.gmra.mxu0 %v215
  %v331 = vpop.f32.mrf.mxu0
  %v332 = vadd.f32 %v211, %v331
  %333 = vmatmul.f32.gmra.mxu0 %v218
  %v334 = vpop.f32.mrf.mxu0
  %v335 = vadd.f32 %v211, %v334
  %336 = vmatmul.f32.gmra.mxu0 %v221
  %v337 = vpop.f32.mrf.mxu0
  %v338 = vadd.f32 %v211, %v337
  %339 = vmatmul.f32.gmra.mxu0 %v224
  %v340 = vpop.f32.mrf.mxu0
  %v341 = vadd.f32 %v211, %v340
  %342 = vmatmul.f32.gmra.mxu0 %v227
  %v343 = vpop.f32.mrf.mxu0
  %v344 = vadd.f32 %v211, %v343
  %345 = vmatmul.f32.gmra.mxu0 %v230
  %v346 = vpop.f32.mrf.mxu0
  %v347 = vadd.f32 %v211, %v346
  %348 = vmatmul.f32.gmra.mxu0 %v233
  %v349 = vpop.f32.mrf.mxu0
  %v350 = vadd.f32 %v211, %v349
  %351 = vmatmul.f32.gmra.mxu0 %v236
  %v352 = vpop.f32.mrf.mxu0
  %v353 = vadd.f32 %v211, %v352
  %354 = vmatmul.f32.gmra.mxu0 %v239
  %v355 = vpop.f32.mrf.mxu0
  %v356 = vadd.f32 %v211, %v355
  %357 = vmatmul.f32.gmra.mxu0 %v242
  %v358 = vpop.f32.mrf.mxu0
  %v359 = vadd.f32 %v211, %v358
  %360 = vmatmul.f32.gmra.mxu0 %v245
  %v361 = vpop.f32.mrf.mxu0
  %v362 = vadd.f32 %v211, %v361
  %363 = vmatmul.f32.gmra.mxu0 %v248
  %v364 = vpop.f32.mrf.mxu0
  %v365 = vadd.f32 %v211, %v364
  %366 = vmatmul.f32.gmra.mxu0 %v251
  %v367 = vpop.f32.mrf.mxu0
  %v368 = vadd.f32 %v211, %v367
  %369 = vmatmul.f32.gmra.mxu0 %v254
  %v370 = vpop.f32.mrf.mxu0
  %v371 = vadd.f32 %v211, %v370
  %372 = vmatmul.f32.gmra.mxu0 %v257
  %v373 = vpop.f32.mrf.mxu0
  %v374 = vadd.f32 %v211, %v373
  %375 = vmatmul.f32.gmra.mxu0 %v260
  %v376 = vpop.f32.mrf.mxu0
  %v377 = vadd.f32 %v211, %v376
  %378 = vmatmul.f32.gmra.mxu0 %v263
  %v379 = vpop.f32.mrf.mxu0
  %v380 = vadd.f32 %v211, %v379
  %381 = vmatmul.f32.gmra.mxu0 %v266
  %v382 = vpop.f32.mrf.mxu0
  %v383 = vadd.f32 %v211, %v382
  %384 = vmatmul.f32.gmra.mxu0 %v269
  %v385 = vpop.f32.mrf.mxu0
  %v386 = vadd.f32 %v211, %v385
  %387 = vmatmul.f32.gmra.mxu0 %v272
  %v388 = vpop.f32.mrf.mxu0
  %v389 = vadd.f32 %v211, %v388
  %390 = vmatmul.f32.gmra.mxu0 %v275
  %v391 = vpop.f32.mrf.mxu0
  %v392 = vadd.f32 %v211, %v391
  %393 = vmatmul.f32.gmra.mxu0 %v278
  %v394 = vpop.f32.mrf.mxu0
  %v395 = vadd.f32 %v211, %v394
  %396 = vmatmul.f32.gmra.mxu0 %v281
  %v397 = vpop.f32.mrf.mxu0
  %v398 = vadd.f32 %v211, %v397
  %399 = vmatmul.f32.gmra.mxu0 %v284
  %v400 = vpop.f32.mrf.mxu0
  %v401 = vadd.f32 %v211, %v400
  %402 = vmatmul.f32.gmra.mxu0 %v287
  %v403 = vpop.f32.mrf.mxu0
  %v404 = vadd.f32 %v211, %v403
  %405 = vmatmul.f32.gmra.mxu0 %v290
  %v406 = vpop.f32.mrf.mxu0
  %v407 = vadd.f32 %v211, %v406
  %408 = vmatmul.f32.gmra.mxu0 %v293
  %v409 = vpop.f32.mrf.mxu0
  %v410 = vadd.f32 %v211, %v409
  %411 = vmatmul.f32.gmra.mxu0 %v296
  %v412 = vpop.f32.mrf.mxu0
  %v413 = vadd.f32 %v211, %v412
  %414 = vmatmul.f32.gmra.mxu0 %v299
  %v415 = vpop.f32.mrf.mxu0
  %v416 = vadd.f32 %v211, %v415
  %417 = vmatmul.f32.gmra.mxu0 %v302
  %v418 = vpop.f32.mrf.mxu0
  %v419 = vadd.f32 %v211, %v418
  %420 = vmatmul.f32.gmra.mxu0 %v305
  %v421 = vpop.f32.mrf.mxu0
  %v422 = vadd.f32 %v211, %v421
  %423 = vmatmul.f32.gmra.mxu0 %v308
  %v424 = vpop.f32.mrf.mxu0
  %v425 = vadd.f32 %v211, %v424
  %426 = vdwg.mxu0
  %v427 = vmax.f32 %v332, 0.0
  %v428 = vmax.f32 %v335, 0.0
  %v429 = vmax.f32 %v338, 0.0
  %v430 = vmax.f32 %v341, 0.0
  %v431 = vmax.f32 %v344, 0.0
  %v432 = vmax.f32 %v347, 0.0
  %v433 = vmax.f32 %v350, 0.0
  %v434 = vmax.f32 %v353, 0.0
  %v435 = vmax.f32 %v356, 0.0
  %v436 = vmax.f32 %v359, 0.0
  %v437 = vmax.f32 %v362, 0.0
  %v438 = vmax.f32 %v365, 0.0
  %v439 = vmax.f32 %v368, 0.0
  %v440 = vmax.f32 %v371, 0.0
  %v441 = vmax.f32 %v374, 0.0
  %v442 = vmax.f32 %v377, 0.0
  %v443 = vmax.f32 %v380, 0.0
  %v444 = vmax.f32 %v383, 0.0
  %v445 = vmax.f32 %v386, 0.0
  %v446 = vmax.f32 %v389, 0.0
  %v447 = vmax.f32 %v392, 0.0
  %v448 = vmax.f32 %v395, 0.0
  %v449 = vmax.f32 %v398, 0.0
  %v450 = vmax.f32 %v401, 0.0
  %v451 = vmax.f32 %v404, 0.0
  %v452 = vmax.f32 %v407, 0.0
  %v453 = vmax.f32 %v410, 0.0
  %v454 = vmax.f32 %v413, 0.0
  %v455 = vmax.f32 %v416, 0.0
  %v456 = vmax.f32 %v419, 0.0
  %v457 = vmax.f32 %v422, 0.0
  %v458 = vmax.f32 %v425, 0.0
  %v459 = vld [vmem:[%s7] sm:$0xff]
  %v460 = vld [vmem:[%s7 + $0x8] sm:$0xff]
  %v461 = vld [vmem:[%s8] sm:$0x1]
  %v463 = vperm.slane %v461, 0
  %vm465 = vcmask 130048
  %v467 = vsel %vm465, %v427, 0
  %v470 = vsel %vm465, %v428, 0
  %v473 = vsel %vm465, %v429, 0
  %v476 = vsel %vm465, %v430, 0
  %v479 = vsel %vm465, %v431, 0
  %v482 = vsel %vm465, %v432, 0
  %v485 = vsel %vm465, %v433, 0
  %v488 = vsel %vm465, %v434, 0
  %v491 = vsel %vm465, %v435, 0
  %v494 = vsel %vm465, %v436, 0
  %v497 = vsel %vm465, %v437, 0
  %v500 = vsel %vm465, %v438, 0
  %v503 = vsel %vm465, %v439, 0
  %v506 = vsel %vm465, %v440, 0
  %v509 = vsel %vm465, %v441, 0
  %v512 = vsel %vm465, %v442, 0
  %v515 = vsel %vm465, %v443, 0
  %v518 = vsel %vm465, %v444, 0
  %v521 = vsel %vm465, %v445, 0
  %v524 = vsel %vm465, %v446, 0
  %v527 = vsel %vm465, %v447, 0
  %v530 = vsel %vm465, %v448, 0
  %v533 = vsel %vm465, %v449, 0
  %v536 = vsel %vm465, %v450, 0
  %v539 = vsel %vm465, %v451, 0
  %v542 = vsel %vm465, %v452, 0
  %v545 = vsel %vm465, %v453, 0
  %v548 = vsel %vm465, %v454, 0
  %v551 = vsel %vm465, %v455, 0
  %v554 = vsel %vm465, %v456, 0
  %v557 = vsel %vm465, %v457, 0
  %v560 = vsel %vm465, %v458, 0
  %562 = vmatpush.msra.mxu0 0.0
  %563 = vmatpush.msra.mxu0 0.0
  %564 = vmatpush.msra.mxu0 0.0
  %565 = vmatpush.msra.mxu0 0.0
  %566 = vmatpush.msra.mxu0 0.0
  %567 = vmatpush.msra.mxu0 0.0
  %568 = vmatpush.msra.mxu0 0.0
  %569 = vmatpush.msra.mxu0 0.0
  %570 = vmatpush.msra.mxu0 0.0
  %571 = vmatpush.msra.mxu0 0.0
  %572 = vmatpush.msra.mxu0 0.0
  %573 = vmatpush.msra.mxu0 0.0
  %574 = vmatpush.msra.mxu0 0.0
  %575 = vmatpush.msra.mxu0 0.0
  %576 = vmatpush.msra.mxu0 %v460
  %577 = vmatpush.msra.mxu0 %v459
  %578 = vmatmul.f32.gmra.mxu0 %v467
  %v579 = vpop.f32.mrf.mxu0
  %v580 = vadd.f32 %v463, %v579
  %581 = vmatmul.f32.gmra.mxu0 %v470
  %v582 = vpop.f32.mrf.mxu0
  %v583 = vadd.f32 %v463, %v582
  %584 = vmatmul.f32.gmra.mxu0 %v473
  %v585 = vpop.f32.mrf.mxu0
  %v586 = vadd.f32 %v463, %v585
  %587 = vmatmul.f32.gmra.mxu0 %v476
  %v588 = vpop.f32.mrf.mxu0
  %v589 = vadd.f32 %v463, %v588
  %590 = vmatmul.f32.gmra.mxu0 %v479
  %v591 = vpop.f32.mrf.mxu0
  %v592 = vadd.f32 %v463, %v591
  %593 = vmatmul.f32.gmra.mxu0 %v482
  %v594 = vpop.f32.mrf.mxu0
  %v595 = vadd.f32 %v463, %v594
  %596 = vmatmul.f32.gmra.mxu0 %v485
  %v597 = vpop.f32.mrf.mxu0
  %v598 = vadd.f32 %v463, %v597
  %599 = vmatmul.f32.gmra.mxu0 %v488
  %v600 = vpop.f32.mrf.mxu0
  %v601 = vadd.f32 %v463, %v600
  %602 = vmatmul.f32.gmra.mxu0 %v491
  %v603 = vpop.f32.mrf.mxu0
  %v604 = vadd.f32 %v463, %v603
  %605 = vmatmul.f32.gmra.mxu0 %v494
  %v606 = vpop.f32.mrf.mxu0
  %v607 = vadd.f32 %v463, %v606
  %608 = vmatmul.f32.gmra.mxu0 %v497
  %v609 = vpop.f32.mrf.mxu0
  %v610 = vadd.f32 %v463, %v609
  %611 = vmatmul.f32.gmra.mxu0 %v500
  %v612 = vpop.f32.mrf.mxu0
  %v613 = vadd.f32 %v463, %v612
  %614 = vmatmul.f32.gmra.mxu0 %v503
  %v615 = vpop.f32.mrf.mxu0
  %v616 = vadd.f32 %v463, %v615
  %617 = vmatmul.f32.gmra.mxu0 %v506
  %v618 = vpop.f32.mrf.mxu0
  %v619 = vadd.f32 %v463, %v618
  %620 = vmatmul.f32.gmra.mxu0 %v509
  %v621 = vpop.f32.mrf.mxu0
  %v622 = vadd.f32 %v463, %v621
  %623 = vmatmul.f32.gmra.mxu0 %v512
  %v624 = vpop.f32.mrf.mxu0
  %v625 = vadd.f32 %v463, %v624
  %626 = vmatmul.f32.gmra.mxu0 %v515
  %v627 = vpop.f32.mrf.mxu0
  %v628 = vadd.f32 %v463, %v627
  %629 = vmatmul.f32.gmra.mxu0 %v518
  %v630 = vpop.f32.mrf.mxu0
  %v631 = vadd.f32 %v463, %v630
  %632 = vmatmul.f32.gmra.mxu0 %v521
  %v633 = vpop.f32.mrf.mxu0
  %v634 = vadd.f32 %v463, %v633
  %635 = vmatmul.f32.gmra.mxu0 %v524
  %v636 = vpop.f32.mrf.mxu0
  %v637 = vadd.f32 %v463, %v636
  %638 = vmatmul.f32.gmra.mxu0 %v527
  %v639 = vpop.f32.mrf.mxu0
  %v640 = vadd.f32 %v463, %v639
  %641 = vmatmul.f32.gmra.mxu0 %v530
  %v642 = vpop.f32.mrf.mxu0
  %v643 = vadd.f32 %v463, %v642
  %644 = vmatmul.f32.gmra.mxu0 %v533
  %v645 = vpop.f32.mrf.mxu0
  %v646 = vadd.f32 %v463, %v645
  %647 = vmatmul.f32.gmra.mxu0 %v536
  %v648 = vpop.f32.mrf.mxu0
  %v649 = vadd.f32 %v463, %v648
  %650 = vmatmul.f32.gmra.mxu0 %v539
  %v651 = vpop.f32.mrf.mxu0
  %v652 = vadd.f32 %v463, %v651
  %653 = vmatmul.f32.gmra.mxu0 %v542
  %v654 = vpop.f32.mrf.mxu0
  %v655 = vadd.f32 %v463, %v654
  %656 = vmatmul.f32.gmra.mxu0 %v545
  %v657 = vpop.f32.mrf.mxu0
  %v658 = vadd.f32 %v463, %v657
  %659 = vmatmul.f32.gmra.mxu0 %v548
  %v660 = vpop.f32.mrf.mxu0
  %v661 = vadd.f32 %v463, %v660
  %662 = vmatmul.f32.gmra.mxu0 %v551
  %v663 = vpop.f32.mrf.mxu0
  %v664 = vadd.f32 %v463, %v663
  %665 = vmatmul.f32.gmra.mxu0 %v554
  %v666 = vpop.f32.mrf.mxu0
  %v667 = vadd.f32 %v463, %v666
  %668 = vmatmul.f32.gmra.mxu0 %v557
  %v669 = vpop.f32.mrf.mxu0
  %v670 = vadd.f32 %v463, %v669
  %671 = vmatmul.f32.gmra.mxu0 %v560
  %v672 = vpop.f32.mrf.mxu0
  %v673 = vadd.f32 %v463, %v672
  %674 = vdwg.mxu0
  %v675 = vld [vmem:[%s2] sm:$0xff]
  %v676 = vld [vmem:[%s2 + $0x8] sm:$0xff]
  %v677 = vld [vmem:[%s2 + $0x10] sm:$0xff]
  %v678 = vld [vmem:[%s2 + $0x18] sm:$0xff]
  %v683 = vrot.slane %v675, 1
  %v684 = vrot.slane %v675, 2
  %v685 = vrot.slane %v675, 3
  %v686 = vrot.slane %v675, 4
  %v687 = vrot.slane %v675, 5
  %v688 = vrot.slane %v675, 6
  %v689 = vrot.slane %v675, 7
  %v690 = vrot.slane %v676, 1
  %v691 = vrot.slane %v676, 2
  %v692 = vrot.slane %v676, 3
  %v693 = vrot.slane %v676, 4
  %v694 = vrot.slane %v676, 5
  %v695 = vrot.slane %v676, 6
  %v696 = vrot.slane %v676, 7
  %v697 = vrot.slane %v677, 1
  %v698 = vrot.slane %v677, 2
  %v699 = vrot.slane %v677, 3
  %v700 = vrot.slane %v677, 4
  %v701 = vrot.slane %v677, 5
  %v702 = vrot.slane %v677, 6
  %v703 = vrot.slane %v677, 7
  %v704 = vrot.slane %v678, 1
  %v705 = vrot.slane %v678, 2
  %v706 = vrot.slane %v678, 3
  %v707 = vrot.slane %v678, 4
  %v708 = vrot.slane %v678, 5
  %v709 = vrot.slane %v678, 6
  %v710 = vrot.slane %v678, 7
  %v711 = vld [vmem:[%s3] sm:$0xff]
  %v712 = vld [vmem:[%s3 + $0x8] sm:$0xff]
  %v713 = vld [vmem:[%s3 + $0x10] sm:$0xff]
  %v714 = vld [vmem:[%s3 + $0x18] sm:$0xff]
  %v715 = vld [vmem:[%s3 + $0x20] sm:$0xff]
  %v716 = vld [vmem:[%s3 + $0x28] sm:$0xff]
  %v717 = vld [vmem:[%s3 + $0x30] sm:$0xff]
  %v718 = vld [vmem:[%s3 + $0x38] sm:$0xff]
  %v719 = vld [vmem:[%s3 + $0x40] sm:$0xff]
  %v720 = vld [vmem:[%s3 + $0x48] sm:$0xff]
  %v721 = vld [vmem:[%s3 + $0x50] sm:$0xff]
  %v722 = vld [vmem:[%s3 + $0x58] sm:$0xff]
  %v723 = vld [vmem:[%s3 + $0x60] sm:$0xff]
  %v724 = vld [vmem:[%s3 + $0x68] sm:$0xff]
  %v725 = vld [vmem:[%s3 + $0x70] sm:$0xff]
  %v726 = vld [vmem:[%s3 + $0x78] sm:$0xff]
  %v727 = vld [vmem:[%s3 + $0x80] sm:$0xff]
  %v728 = vld [vmem:[%s3 + $0x88] sm:$0xff]
  %v729 = vld [vmem:[%s3 + $0x90] sm:$0xff]
  %v730 = vld [vmem:[%s3 + $0x98] sm:$0xff]
  %v731 = vld [vmem:[%s3 + $0xa0] sm:$0xff]
  %v732 = vld [vmem:[%s3 + $0xa8] sm:$0xff]
  %v733 = vld [vmem:[%s3 + $0xb0] sm:$0xff]
  %v734 = vld [vmem:[%s3 + $0xb8] sm:$0xff]
  %v735 = vld [vmem:[%s3 + $0xc0] sm:$0xff]
  %v736 = vld [vmem:[%s3 + $0xc8] sm:$0xff]
  %v737 = vld [vmem:[%s3 + $0xd0] sm:$0xff]
  %v738 = vld [vmem:[%s3 + $0xd8] sm:$0xff]
  %v739 = vld [vmem:[%s3 + $0xe0] sm:$0xff]
  %v740 = vld [vmem:[%s3 + $0xe8] sm:$0xff]
  %v741 = vld [vmem:[%s3 + $0xf0] sm:$0xff]
  %v742 = vld [vmem:[%s3 + $0xf8] sm:$0xff]
  %v743 = vperm.slane %v675, 0
  %v744 = vperm.slane %v683, 0
  %v745 = vperm.slane %v684, 0
  %v746 = vperm.slane %v685, 0
  %v747 = vperm.slane %v686, 0
  %v748 = vperm.slane %v687, 0
  %v749 = vperm.slane %v688, 0
  %v750 = vperm.slane %v689, 0
  %v751 = vperm.slane %v676, 0
  %v752 = vperm.slane %v690, 0
  %v753 = vperm.slane %v691, 0
  %v754 = vperm.slane %v692, 0
  %v755 = vperm.slane %v693, 0
  %v756 = vperm.slane %v694, 0
  %v757 = vperm.slane %v695, 0
  %v758 = vperm.slane %v696, 0
  %v759 = vperm.slane %v677, 0
  %v760 = vperm.slane %v697, 0
  %v761 = vperm.slane %v698, 0
  %v762 = vperm.slane %v699, 0
  %v763 = vperm.slane %v700, 0
  %v764 = vperm.slane %v701, 0
  %v765 = vperm.slane %v702, 0
  %v766 = vperm.slane %v703, 0
  %v767 = vperm.slane %v678, 0
  %v768 = vperm.slane %v704, 0
  %v769 = vperm.slane %v705, 0
  %v770 = vperm.slane %v706, 0
  %v771 = vperm.slane %v707, 0
  %v772 = vperm.slane %v708, 0
  %v773 = vperm.slane %v709, 0
  %v774 = vperm.slane %v710, 0
  %v807 = vsub.f32 %v743, %v711
  %v808 = vsub.f32 %v744, %v712
  %v809 = vsub.f32 %v745, %v713
  %v810 = vsub.f32 %v746, %v714
  %v811 = vsub.f32 %v747, %v715
  %v812 = vsub.f32 %v748, %v716
  %v813 = vsub.f32 %v749, %v717
  %v814 = vsub.f32 %v750, %v718
  %v815 = vsub.f32 %v751, %v719
  %v816 = vsub.f32 %v752, %v720
  %v817 = vsub.f32 %v753, %v721
  %v818 = vsub.f32 %v754, %v722
  %v819 = vsub.f32 %v755, %v723
  %v820 = vsub.f32 %v756, %v724
  %v821 = vsub.f32 %v757, %v725
  %v822 = vsub.f32 %v758, %v726
  %v823 = vsub.f32 %v759, %v727
  %v824 = vsub.f32 %v760, %v728
  %v825 = vsub.f32 %v761, %v729
  %v826 = vsub.f32 %v762, %v730
  %v827 = vsub.f32 %v763, %v731
  %v828 = vsub.f32 %v764, %v732
  %v829 = vsub.f32 %v765, %v733
  %v830 = vsub.f32 %v766, %v734
  %v831 = vsub.f32 %v767, %v735
  %v832 = vsub.f32 %v768, %v736
  %v833 = vsub.f32 %v769, %v737
  %v834 = vsub.f32 %v770, %v738
  %v835 = vsub.f32 %v771, %v739
  %v836 = vsub.f32 %v772, %v740
  %v837 = vsub.f32 %v773, %v741
  %v838 = vsub.f32 %v774, %v742
  %v839 = vadd.f32 %v807, %v580
  %v840 = vadd.f32 %v808, %v583
  %v841 = vadd.f32 %v809, %v586
  %v842 = vadd.f32 %v810, %v589
  %v843 = vadd.f32 %v811, %v592
  %v844 = vadd.f32 %v812, %v595
  %v845 = vadd.f32 %v813, %v598
  %v846 = vadd.f32 %v814, %v601
  %v847 = vadd.f32 %v815, %v604
  %v848 = vadd.f32 %v816, %v607
  %v849 = vadd.f32 %v817, %v610
  %v850 = vadd.f32 %v818, %v613
  %v851 = vadd.f32 %v819, %v616
  %v852 = vadd.f32 %v820, %v619
  %v853 = vadd.f32 %v821, %v622
  %v854 = vadd.f32 %v822, %v625
  %v855 = vadd.f32 %v823, %v628
  %v856 = vadd.f32 %v824, %v631
  %v857 = vadd.f32 %v825, %v634
  %v858 = vadd.f32 %v826, %v637
  %v859 = vadd.f32 %v827, %v640
  %v860 = vadd.f32 %v828, %v643
  %v861 = vadd.f32 %v829, %v646
  %v862 = vadd.f32 %v830, %v649
  %v863 = vadd.f32 %v831, %v652
  %v864 = vadd.f32 %v832, %v655
  %v865 = vadd.f32 %v833, %v658
  %v866 = vadd.f32 %v834, %v661
  %v867 = vadd.f32 %v835, %v664
  %v868 = vadd.f32 %v836, %v667
  %v869 = vadd.f32 %v837, %v670
  %v870 = vadd.f32 %v838, %v673
  %v871 = vld [vmem:[%s9] sm:$0xff]
  %v872 = vld [vmem:[%s9 + $0x8] sm:$0xff]
  %v873 = vld [vmem:[%s9 + $0x10] sm:$0xff]
  %v874 = vld [vmem:[%s9 + $0x18] sm:$0xff]
  %v875 = vld [vmem:[%s10] sm:$0x1]
  %v877 = vperm.slane %v875, 0
  %vm879 = vcmask 261120
  %v881 = vsel %vm879, %v839, 0
  %v884 = vsel %vm879, %v840, 0
  %v887 = vsel %vm879, %v841, 0
  %v890 = vsel %vm879, %v842, 0
  %v893 = vsel %vm879, %v843, 0
  %v896 = vsel %vm879, %v844, 0
  %v899 = vsel %vm879, %v845, 0
  %v902 = vsel %vm879, %v846, 0
  %v905 = vsel %vm879, %v847, 0
  %v908 = vsel %vm879, %v848, 0
  %v911 = vsel %vm879, %v849, 0
  %v914 = vsel %vm879, %v850, 0
  %v917 = vsel %vm879, %v851, 0
  %v920 = vsel %vm879, %v852, 0
  %v923 = vsel %vm879, %v853, 0
  %v926 = vsel %vm879, %v854, 0
  %v929 = vsel %vm879, %v855, 0
  %v932 = vsel %vm879, %v856, 0
  %v935 = vsel %vm879, %v857, 0
  %v938 = vsel %vm879, %v858, 0
  %v941 = vsel %vm879, %v859, 0
  %v944 = vsel %vm879, %v860, 0
  %v947 = vsel %vm879, %v861, 0
  %v950 = vsel %vm879, %v862, 0
  %v953 = vsel %vm879, %v863, 0
  %v956 = vsel %vm879, %v864, 0
  %v959 = vsel %vm879, %v865, 0
  %v962 = vsel %vm879, %v866, 0
  %v965 = vsel %vm879, %v867, 0
  %v968 = vsel %vm879, %v868, 0
  %v971 = vsel %vm879, %v869, 0
  %v974 = vsel %vm879, %v870, 0
  %976 = vmatpush.msra.mxu0 0.0
  %977 = vmatpush.msra.mxu0 0.0
  %978 = vmatpush.msra.mxu0 0.0
  %979 = vmatpush.msra.mxu0 0.0
  %980 = vmatpush.msra.mxu0 0.0
  %981 = vmatpush.msra.mxu0 0.0
  %982 = vmatpush.msra.mxu0 0.0
  %983 = vmatpush.msra.mxu0 0.0
  %984 = vmatpush.msra.mxu0 0.0
  %985 = vmatpush.msra.mxu0 0.0
  %986 = vmatpush.msra.mxu0 0.0
  %987 = vmatpush.msra.mxu0 0.0
  %988 = vmatpush.msra.mxu0 %v874
  %989 = vmatpush.msra.mxu0 %v873
  %990 = vmatpush.msra.mxu0 %v872
  %991 = vmatpush.msra.mxu0 %v871
  %992 = vmatmul.f32.gmra.mxu0 %v881
  %v993 = vpop.f32.mrf.mxu0
  %v994 = vadd.f32 %v877, %v993
  %995 = vmatmul.f32.gmra.mxu0 %v884
  %v996 = vpop.f32.mrf.mxu0
  %v997 = vadd.f32 %v877, %v996
  %998 = vmatmul.f32.gmra.mxu0 %v887
  %v999 = vpop.f32.mrf.mxu0
  %v1000 = vadd.f32 %v877, %v999
  %1001 = vmatmul.f32.gmra.mxu0 %v890
  %v1002 = vpop.f32.mrf.mxu0
  %v1003 = vadd.f32 %v877, %v1002
  %1004 = vmatmul.f32.gmra.mxu0 %v893
  %v1005 = vpop.f32.mrf.mxu0
  %v1006 = vadd.f32 %v877, %v1005
  %1007 = vmatmul.f32.gmra.mxu0 %v896
  %v1008 = vpop.f32.mrf.mxu0
  %v1009 = vadd.f32 %v877, %v1008
  %1010 = vmatmul.f32.gmra.mxu0 %v899
  %v1011 = vpop.f32.mrf.mxu0
  %v1012 = vadd.f32 %v877, %v1011
  %1013 = vmatmul.f32.gmra.mxu0 %v902
  %v1014 = vpop.f32.mrf.mxu0
  %v1015 = vadd.f32 %v877, %v1014
  %1016 = vmatmul.f32.gmra.mxu0 %v905
  %v1017 = vpop.f32.mrf.mxu0
  %v1018 = vadd.f32 %v877, %v1017
  %1019 = vmatmul.f32.gmra.mxu0 %v908
  %v1020 = vpop.f32.mrf.mxu0
  %v1021 = vadd.f32 %v877, %v1020
  %1022 = vmatmul.f32.gmra.mxu0 %v911
  %v1023 = vpop.f32.mrf.mxu0
  %v1024 = vadd.f32 %v877, %v1023
  %1025 = vmatmul.f32.gmra.mxu0 %v914
  %v1026 = vpop.f32.mrf.mxu0
  %v1027 = vadd.f32 %v877, %v1026
  %1028 = vmatmul.f32.gmra.mxu0 %v917
  %v1029 = vpop.f32.mrf.mxu0
  %v1030 = vadd.f32 %v877, %v1029
  %1031 = vmatmul.f32.gmra.mxu0 %v920
  %v1032 = vpop.f32.mrf.mxu0
  %v1033 = vadd.f32 %v877, %v1032
  %1034 = vmatmul.f32.gmra.mxu0 %v923
  %v1035 = vpop.f32.mrf.mxu0
  %v1036 = vadd.f32 %v877, %v1035
  %1037 = vmatmul.f32.gmra.mxu0 %v926
  %v1038 = vpop.f32.mrf.mxu0
  %v1039 = vadd.f32 %v877, %v1038
  %1040 = vmatmul.f32.gmra.mxu0 %v929
  %v1041 = vpop.f32.mrf.mxu0
  %v1042 = vadd.f32 %v877, %v1041
  %1043 = vmatmul.f32.gmra.mxu0 %v932
  %v1044 = vpop.f32.mrf.mxu0
  %v1045 = vadd.f32 %v877, %v1044
  %1046 = vmatmul.f32.gmra.mxu0 %v935
  %v1047 = vpop.f32.mrf.mxu0
  %v1048 = vadd.f32 %v877, %v1047
  %1049 = vmatmul.f32.gmra.mxu0 %v938
  %v1050 = vpop.f32.mrf.mxu0
  %v1051 = vadd.f32 %v877, %v1050
  %1052 = vmatmul.f32.gmra.mxu0 %v941
  %v1053 = vpop.f32.mrf.mxu0
  %v1054 = vadd.f32 %v877, %v1053
  %1055 = vmatmul.f32.gmra.mxu0 %v944
  %v1056 = vpop.f32.mrf.mxu0
  %v1057 = vadd.f32 %v877, %v1056
  %1058 = vmatmul.f32.gmra.mxu0 %v947
  %v1059 = vpop.f32.mrf.mxu0
  %v1060 = vadd.f32 %v877, %v1059
  %1061 = vmatmul.f32.gmra.mxu0 %v950
  %v1062 = vpop.f32.mrf.mxu0
  %v1063 = vadd.f32 %v877, %v1062
  %1064 = vmatmul.f32.gmra.mxu0 %v953
  %v1065 = vpop.f32.mrf.mxu0
  %v1066 = vadd.f32 %v877, %v1065
  %1067 = vmatmul.f32.gmra.mxu0 %v956
  %v1068 = vpop.f32.mrf.mxu0
  %v1069 = vadd.f32 %v877, %v1068
  %1070 = vmatmul.f32.gmra.mxu0 %v959
  %v1071 = vpop.f32.mrf.mxu0
  %v1072 = vadd.f32 %v877, %v1071
  %1073 = vmatmul.f32.gmra.mxu0 %v962
  %v1074 = vpop.f32.mrf.mxu0
  %v1075 = vadd.f32 %v877, %v1074
  %1076 = vmatmul.f32.gmra.mxu0 %v965
  %v1077 = vpop.f32.mrf.mxu0
  %v1078 = vadd.f32 %v877, %v1077
  %1079 = vmatmul.f32.gmra.mxu0 %v968
  %v1080 = vpop.f32.mrf.mxu0
  %v1081 = vadd.f32 %v877, %v1080
  %1082 = vmatmul.f32.gmra.mxu0 %v971
  %v1083 = vpop.f32.mrf.mxu0
  %v1084 = vadd.f32 %v877, %v1083
  %1085 = vmatmul.f32.gmra.mxu0 %v974
  %v1086 = vpop.f32.mrf.mxu0
  %v1087 = vadd.f32 %v877, %v1086
  %1088 = vdwg.mxu0
  %v1089 = vmax.f32 %v994, 0.0
  %v1090 = vmax.f32 %v997, 0.0
  %v1091 = vmax.f32 %v1000, 0.0
  %v1092 = vmax.f32 %v1003, 0.0
  %v1093 = vmax.f32 %v1006, 0.0
  %v1094 = vmax.f32 %v1009, 0.0
  %v1095 = vmax.f32 %v1012, 0.0
  %v1096 = vmax.f32 %v1015, 0.0
  %v1097 = vmax.f32 %v1018, 0.0
  %v1098 = vmax.f32 %v1021, 0.0
  %v1099 = vmax.f32 %v1024, 0.0
  %v1100 = vmax.f32 %v1027, 0.0
  %v1101 = vmax.f32 %v1030, 0.0
  %v1102 = vmax.f32 %v1033, 0.0
  %v1103 = vmax.f32 %v1036, 0.0
  %v1104 = vmax.f32 %v1039, 0.0
  %v1105 = vmax.f32 %v1042, 0.0
  %v1106 = vmax.f32 %v1045, 0.0
  %v1107 = vmax.f32 %v1048, 0.0
  %v1108 = vmax.f32 %v1051, 0.0
  %v1109 = vmax.f32 %v1054, 0.0
  %v1110 = vmax.f32 %v1057, 0.0
  %v1111 = vmax.f32 %v1060, 0.0
  %v1112 = vmax.f32 %v1063, 0.0
  %v1113 = vmax.f32 %v1066, 0.0
  %v1114 = vmax.f32 %v1069, 0.0
  %v1115 = vmax.f32 %v1072, 0.0
  %v1116 = vmax.f32 %v1075, 0.0
  %v1117 = vmax.f32 %v1078, 0.0
  %v1118 = vmax.f32 %v1081, 0.0
  %v1119 = vmax.f32 %v1084, 0.0
  %v1120 = vmax.f32 %v1087, 0.0
  %v1121 = vld [vmem:[%s11] sm:$0xff]
  %v1122 = vld [vmem:[%s11 + $0x8] sm:$0xff]
  %v1123 = vld [vmem:[%s12] sm:$0x1]
  %v1125 = vperm.slane %v1123, 0
  %v1128 = vsel %vm465, %v1089, 0
  %v1131 = vsel %vm465, %v1090, 0
  %v1134 = vsel %vm465, %v1091, 0
  %v1137 = vsel %vm465, %v1092, 0
  %v1140 = vsel %vm465, %v1093, 0
  %v1143 = vsel %vm465, %v1094, 0
  %v1146 = vsel %vm465, %v1095, 0
  %v1149 = vsel %vm465, %v1096, 0
  %v1152 = vsel %vm465, %v1097, 0
  %v1155 = vsel %vm465, %v1098, 0
  %v1158 = vsel %vm465, %v1099, 0
  %v1161 = vsel %vm465, %v1100, 0
  %v1164 = vsel %vm465, %v1101, 0
  %v1167 = vsel %vm465, %v1102, 0
  %v1170 = vsel %vm465, %v1103, 0
  %v1173 = vsel %vm465, %v1104, 0
  %v1176 = vsel %vm465, %v1105, 0
  %v1179 = vsel %vm465, %v1106, 0
  %v1182 = vsel %vm465, %v1107, 0
  %v1185 = vsel %vm465, %v1108, 0
  %v1188 = vsel %vm465, %v1109, 0
  %v1191 = vsel %vm465, %v1110, 0
  %v1194 = vsel %vm465, %v1111, 0
  %v1197 = vsel %vm465, %v1112, 0
  %v1200 = vsel %vm465, %v1113, 0
  %v1203 = vsel %vm465, %v1114, 0
  %v1206 = vsel %vm465, %v1115, 0
  %v1209 = vsel %vm465, %v1116, 0
  %v1212 = vsel %vm465, %v1117, 0
  %v1215 = vsel %vm465, %v1118, 0
  %v1218 = vsel %vm465, %v1119, 0
  %v1221 = vsel %vm465, %v1120, 0
  %1223 = vmatpush.msra.mxu0 0.0
  %1224 = vmatpush.msra.mxu0 0.0
  %1225 = vmatpush.msra.mxu0 0.0
  %1226 = vmatpush.msra.mxu0 0.0
  %1227 = vmatpush.msra.mxu0 0.0
  %1228 = vmatpush.msra.mxu0 0.0
  %1229 = vmatpush.msra.mxu0 0.0
  %1230 = vmatpush.msra.mxu0 0.0
  %1231 = vmatpush.msra.mxu0 0.0
  %1232 = vmatpush.msra.mxu0 0.0
  %1233 = vmatpush.msra.mxu0 0.0
  %1234 = vmatpush.msra.mxu0 0.0
  %1235 = vmatpush.msra.mxu0 0.0
  %1236 = vmatpush.msra.mxu0 0.0
  %1237 = vmatpush.msra.mxu0 %v1122
  %1238 = vmatpush.msra.mxu0 %v1121
  %1239 = vmatmul.f32.gmra.mxu0 %v1128
  %v1240 = vpop.f32.mrf.mxu0
  %v1241 = vadd.f32 %v1125, %v1240
  %1242 = vmatmul.f32.gmra.mxu0 %v1131
  %v1243 = vpop.f32.mrf.mxu0
  %v1244 = vadd.f32 %v1125, %v1243
  %1245 = vmatmul.f32.gmra.mxu0 %v1134
  %v1246 = vpop.f32.mrf.mxu0
  %v1247 = vadd.f32 %v1125, %v1246
  %1248 = vmatmul.f32.gmra.mxu0 %v1137
  %v1249 = vpop.f32.mrf.mxu0
  %v1250 = vadd.f32 %v1125, %v1249
  %1251 = vmatmul.f32.gmra.mxu0 %v1140
  %v1252 = vpop.f32.mrf.mxu0
  %v1253 = vadd.f32 %v1125, %v1252
  %1254 = vmatmul.f32.gmra.mxu0 %v1143
  %v1255 = vpop.f32.mrf.mxu0
  %v1256 = vadd.f32 %v1125, %v1255
  %1257 = vmatmul.f32.gmra.mxu0 %v1146
  %v1258 = vpop.f32.mrf.mxu0
  %v1259 = vadd.f32 %v1125, %v1258
  %1260 = vmatmul.f32.gmra.mxu0 %v1149
  %v1261 = vpop.f32.mrf.mxu0
  %v1262 = vadd.f32 %v1125, %v1261
  %1263 = vmatmul.f32.gmra.mxu0 %v1152
  %v1264 = vpop.f32.mrf.mxu0
  %v1265 = vadd.f32 %v1125, %v1264
  %1266 = vmatmul.f32.gmra.mxu0 %v1155
  %v1267 = vpop.f32.mrf.mxu0
  %v1268 = vadd.f32 %v1125, %v1267
  %1269 = vmatmul.f32.gmra.mxu0 %v1158
  %v1270 = vpop.f32.mrf.mxu0
  %v1271 = vadd.f32 %v1125, %v1270
  %1272 = vmatmul.f32.gmra.mxu0 %v1161
  %v1273 = vpop.f32.mrf.mxu0
  %v1274 = vadd.f32 %v1125, %v1273
  %1275 = vmatmul.f32.gmra.mxu0 %v1164
  %v1276 = vpop.f32.mrf.mxu0
  %v1277 = vadd.f32 %v1125, %v1276
  %1278 = vmatmul.f32.gmra.mxu0 %v1167
  %v1279 = vpop.f32.mrf.mxu0
  %v1280 = vadd.f32 %v1125, %v1279
  %1281 = vmatmul.f32.gmra.mxu0 %v1170
  %v1282 = vpop.f32.mrf.mxu0
  %v1283 = vadd.f32 %v1125, %v1282
  %1284 = vmatmul.f32.gmra.mxu0 %v1173
  %v1285 = vpop.f32.mrf.mxu0
  %v1286 = vadd.f32 %v1125, %v1285
  %1287 = vmatmul.f32.gmra.mxu0 %v1176
  %v1288 = vpop.f32.mrf.mxu0
  %v1289 = vadd.f32 %v1125, %v1288
  %1290 = vmatmul.f32.gmra.mxu0 %v1179
  %v1291 = vpop.f32.mrf.mxu0
  %v1292 = vadd.f32 %v1125, %v1291
  %1293 = vmatmul.f32.gmra.mxu0 %v1182
  %v1294 = vpop.f32.mrf.mxu0
  %v1295 = vadd.f32 %v1125, %v1294
  %1296 = vmatmul.f32.gmra.mxu0 %v1185
  %v1297 = vpop.f32.mrf.mxu0
  %v1298 = vadd.f32 %v1125, %v1297
  %1299 = vmatmul.f32.gmra.mxu0 %v1188
  %v1300 = vpop.f32.mrf.mxu0
  %v1301 = vadd.f32 %v1125, %v1300
  %1302 = vmatmul.f32.gmra.mxu0 %v1191
  %v1303 = vpop.f32.mrf.mxu0
  %v1304 = vadd.f32 %v1125, %v1303
  %1305 = vmatmul.f32.gmra.mxu0 %v1194
  %v1306 = vpop.f32.mrf.mxu0
  %v1307 = vadd.f32 %v1125, %v1306
  %1308 = vmatmul.f32.gmra.mxu0 %v1197
  %v1309 = vpop.f32.mrf.mxu0
  %v1310 = vadd.f32 %v1125, %v1309
  %1311 = vmatmul.f32.gmra.mxu0 %v1200
  %v1312 = vpop.f32.mrf.mxu0
  %v1313 = vadd.f32 %v1125, %v1312
  %1314 = vmatmul.f32.gmra.mxu0 %v1203
  %v1315 = vpop.f32.mrf.mxu0
  %v1316 = vadd.f32 %v1125, %v1315
  %1317 = vmatmul.f32.gmra.mxu0 %v1206
  %v1318 = vpop.f32.mrf.mxu0
  %v1319 = vadd.f32 %v1125, %v1318
  %1320 = vmatmul.f32.gmra.mxu0 %v1209
  %v1321 = vpop.f32.mrf.mxu0
  %v1322 = vadd.f32 %v1125, %v1321
  %1323 = vmatmul.f32.gmra.mxu0 %v1212
  %v1324 = vpop.f32.mrf.mxu0
  %v1325 = vadd.f32 %v1125, %v1324
  %1326 = vmatmul.f32.gmra.mxu0 %v1215
  %v1327 = vpop.f32.mrf.mxu0
  %v1328 = vadd.f32 %v1125, %v1327
  %1329 = vmatmul.f32.gmra.mxu0 %v1218
  %v1330 = vpop.f32.mrf.mxu0
  %v1331 = vadd.f32 %v1125, %v1330
  %1332 = vmatmul.f32.gmra.mxu0 %v1221
  %v1333 = vpop.f32.mrf.mxu0
  %v1334 = vadd.f32 %v1125, %v1333
  %1335 = vdwg.mxu0
  %v1336 = vld [vmem:[%s4] sm:$0xff]
  %v1337 = vld [vmem:[%s4 + $0x8] sm:$0xff]
  %v1338 = vld [vmem:[%s4 + $0x10] sm:$0xff]
  %v1339 = vld [vmem:[%s4 + $0x18] sm:$0xff]
  %v1340 = vld [vmem:[%s4 + $0x20] sm:$0xff]
  %v1341 = vld [vmem:[%s4 + $0x28] sm:$0xff]
  %v1342 = vld [vmem:[%s4 + $0x30] sm:$0xff]
  %v1343 = vld [vmem:[%s4 + $0x38] sm:$0xff]
  %v1344 = vld [vmem:[%s4 + $0x40] sm:$0xff]
  %v1345 = vld [vmem:[%s4 + $0x48] sm:$0xff]
  %v1346 = vld [vmem:[%s4 + $0x50] sm:$0xff]
  %v1347 = vld [vmem:[%s4 + $0x58] sm:$0xff]
  %v1348 = vld [vmem:[%s4 + $0x60] sm:$0xff]
  %v1349 = vld [vmem:[%s4 + $0x68] sm:$0xff]
  %v1350 = vld [vmem:[%s4 + $0x70] sm:$0xff]
  %v1351 = vld [vmem:[%s4 + $0x78] sm:$0xff]
  %v1352 = vld [vmem:[%s4 + $0x80] sm:$0xff]
  %v1353 = vld [vmem:[%s4 + $0x88] sm:$0xff]
  %v1354 = vld [vmem:[%s4 + $0x90] sm:$0xff]
  %v1355 = vld [vmem:[%s4 + $0x98] sm:$0xff]
  %v1356 = vld [vmem:[%s4 + $0xa0] sm:$0xff]
  %v1357 = vld [vmem:[%s4 + $0xa8] sm:$0xff]
  %v1358 = vld [vmem:[%s4 + $0xb0] sm:$0xff]
  %v1359 = vld [vmem:[%s4 + $0xb8] sm:$0xff]
  %v1360 = vld [vmem:[%s4 + $0xc0] sm:$0xff]
  %v1361 = vld [vmem:[%s4 + $0xc8] sm:$0xff]
  %v1362 = vld [vmem:[%s4 + $0xd0] sm:$0xff]
  %v1363 = vld [vmem:[%s4 + $0xd8] sm:$0xff]
  %v1364 = vld [vmem:[%s4 + $0xe0] sm:$0xff]
  %v1365 = vld [vmem:[%s4 + $0xe8] sm:$0xff]
  %v1366 = vld [vmem:[%s4 + $0xf0] sm:$0xff]
  %v1367 = vld [vmem:[%s4 + $0xf8] sm:$0xff]
  %v1368 = vadd.f32 %v1336, %v580
  %v1369 = vadd.f32 %v1337, %v583
  %v1370 = vadd.f32 %v1338, %v586
  %v1371 = vadd.f32 %v1339, %v589
  %v1372 = vadd.f32 %v1340, %v592
  %v1373 = vadd.f32 %v1341, %v595
  %v1374 = vadd.f32 %v1342, %v598
  %v1375 = vadd.f32 %v1343, %v601
  %v1376 = vadd.f32 %v1344, %v604
  %v1377 = vadd.f32 %v1345, %v607
  %v1378 = vadd.f32 %v1346, %v610
  %v1379 = vadd.f32 %v1347, %v613
  %v1380 = vadd.f32 %v1348, %v616
  %v1381 = vadd.f32 %v1349, %v619
  %v1382 = vadd.f32 %v1350, %v622
  %v1383 = vadd.f32 %v1351, %v625
  %v1384 = vadd.f32 %v1352, %v628
  %v1385 = vadd.f32 %v1353, %v631
  %v1386 = vadd.f32 %v1354, %v634
  %v1387 = vadd.f32 %v1355, %v637
  %v1388 = vadd.f32 %v1356, %v640
  %v1389 = vadd.f32 %v1357, %v643
  %v1390 = vadd.f32 %v1358, %v646
  %v1391 = vadd.f32 %v1359, %v649
  %v1392 = vadd.f32 %v1360, %v652
  %v1393 = vadd.f32 %v1361, %v655
  %v1394 = vadd.f32 %v1362, %v658
  %v1395 = vadd.f32 %v1363, %v661
  %v1396 = vadd.f32 %v1364, %v664
  %v1397 = vadd.f32 %v1365, %v667
  %v1398 = vadd.f32 %v1366, %v670
  %v1399 = vadd.f32 %v1367, %v673
  %v1400 = vsel %vm879, %v1241, -inf
  %v1401 = vrot.slane %v1400, 4
  %v1402 = vmax.f32 %v1400, %v1401
  %v1403 = vrot.slane %v1402, 2
  %v1404 = vmax.f32 %v1402, %v1403
  %v1405 = vrot.slane %v1404, 1
  %v1406 = vmax.f32 %v1404, %v1405
  %v1407 = vsel %vm879, %v1244, -inf
  %v1408 = vrot.slane %v1407, 4
  %v1409 = vmax.f32 %v1407, %v1408
  %v1410 = vrot.slane %v1409, 2
  %v1411 = vmax.f32 %v1409, %v1410
  %v1412 = vrot.slane %v1411, 1
  %v1413 = vmax.f32 %v1411, %v1412
  %v1414 = vsel %vm879, %v1247, -inf
  %v1415 = vrot.slane %v1414, 4
  %v1416 = vmax.f32 %v1414, %v1415
  %v1417 = vrot.slane %v1416, 2
  %v1418 = vmax.f32 %v1416, %v1417
  %v1419 = vrot.slane %v1418, 1
  %v1420 = vmax.f32 %v1418, %v1419
  %v1421 = vsel %vm879, %v1250, -inf
  %v1422 = vrot.slane %v1421, 4
  %v1423 = vmax.f32 %v1421, %v1422
  %v1424 = vrot.slane %v1423, 2
  %v1425 = vmax.f32 %v1423, %v1424
  %v1426 = vrot.slane %v1425, 1
  %v1427 = vmax.f32 %v1425, %v1426
  %v1428 = vsel %vm879, %v1253, -inf
  %v1429 = vrot.slane %v1428, 4
  %v1430 = vmax.f32 %v1428, %v1429
  %v1431 = vrot.slane %v1430, 2
  %v1432 = vmax.f32 %v1430, %v1431
  %v1433 = vrot.slane %v1432, 1
  %v1434 = vmax.f32 %v1432, %v1433
  %v1435 = vsel %vm879, %v1256, -inf
  %v1436 = vrot.slane %v1435, 4
  %v1437 = vmax.f32 %v1435, %v1436
  %v1438 = vrot.slane %v1437, 2
  %v1439 = vmax.f32 %v1437, %v1438
  %v1440 = vrot.slane %v1439, 1
  %v1441 = vmax.f32 %v1439, %v1440
  %v1442 = vsel %vm879, %v1259, -inf
  %v1443 = vrot.slane %v1442, 4
  %v1444 = vmax.f32 %v1442, %v1443
  %v1445 = vrot.slane %v1444, 2
  %v1446 = vmax.f32 %v1444, %v1445
  %v1447 = vrot.slane %v1446, 1
  %v1448 = vmax.f32 %v1446, %v1447
  %v1449 = vsel %vm879, %v1262, -inf
  %v1450 = vrot.slane %v1449, 4
  %v1451 = vmax.f32 %v1449, %v1450
  %v1452 = vrot.slane %v1451, 2
  %v1453 = vmax.f32 %v1451, %v1452
  %v1454 = vrot.slane %v1453, 1
  %v1455 = vmax.f32 %v1453, %v1454
  %v1456 = vsel %vm879, %v1265, -inf
  %v1457 = vrot.slane %v1456, 4
  %v1458 = vmax.f32 %v1456, %v1457
  %v1459 = vrot.slane %v1458, 2
  %v1460 = vmax.f32 %v1458, %v1459
  %v1461 = vrot.slane %v1460, 1
  %v1462 = vmax.f32 %v1460, %v1461
  %v1463 = vsel %vm879, %v1268, -inf
  %v1464 = vrot.slane %v1463, 4
  %v1465 = vmax.f32 %v1463, %v1464
  %v1466 = vrot.slane %v1465, 2
  %v1467 = vmax.f32 %v1465, %v1466
  %v1468 = vrot.slane %v1467, 1
  %v1469 = vmax.f32 %v1467, %v1468
  %v1470 = vsel %vm879, %v1271, -inf
  %v1471 = vrot.slane %v1470, 4
  %v1472 = vmax.f32 %v1470, %v1471
  %v1473 = vrot.slane %v1472, 2
  %v1474 = vmax.f32 %v1472, %v1473
  %v1475 = vrot.slane %v1474, 1
  %v1476 = vmax.f32 %v1474, %v1475
  %v1477 = vsel %vm879, %v1274, -inf
  %v1478 = vrot.slane %v1477, 4
  %v1479 = vmax.f32 %v1477, %v1478
  %v1480 = vrot.slane %v1479, 2
  %v1481 = vmax.f32 %v1479, %v1480
  %v1482 = vrot.slane %v1481, 1
  %v1483 = vmax.f32 %v1481, %v1482
  %v1484 = vsel %vm879, %v1277, -inf
  %v1485 = vrot.slane %v1484, 4
  %v1486 = vmax.f32 %v1484, %v1485
  %v1487 = vrot.slane %v1486, 2
  %v1488 = vmax.f32 %v1486, %v1487
  %v1489 = vrot.slane %v1488, 1
  %v1490 = vmax.f32 %v1488, %v1489
  %v1491 = vsel %vm879, %v1280, -inf
  %v1492 = vrot.slane %v1491, 4
  %v1493 = vmax.f32 %v1491, %v1492
  %v1494 = vrot.slane %v1493, 2
  %v1495 = vmax.f32 %v1493, %v1494
  %v1496 = vrot.slane %v1495, 1
  %v1497 = vmax.f32 %v1495, %v1496
  %v1498 = vsel %vm879, %v1283, -inf
  %v1499 = vrot.slane %v1498, 4
  %v1500 = vmax.f32 %v1498, %v1499
  %v1501 = vrot.slane %v1500, 2
  %v1502 = vmax.f32 %v1500, %v1501
  %v1503 = vrot.slane %v1502, 1
  %v1504 = vmax.f32 %v1502, %v1503
  %v1505 = vsel %vm879, %v1286, -inf
  %v1506 = vrot.slane %v1505, 4
  %v1507 = vmax.f32 %v1505, %v1506
  %v1508 = vrot.slane %v1507, 2
  %v1509 = vmax.f32 %v1507, %v1508
  %v1510 = vrot.slane %v1509, 1
  %v1511 = vmax.f32 %v1509, %v1510
  %v1512 = vsel %vm879, %v1289, -inf
  %v1513 = vrot.slane %v1512, 4
  %v1514 = vmax.f32 %v1512, %v1513
  %v1515 = vrot.slane %v1514, 2
  %v1516 = vmax.f32 %v1514, %v1515
  %v1517 = vrot.slane %v1516, 1
  %v1518 = vmax.f32 %v1516, %v1517
  %v1519 = vsel %vm879, %v1292, -inf
  %v1520 = vrot.slane %v1519, 4
  %v1521 = vmax.f32 %v1519, %v1520
  %v1522 = vrot.slane %v1521, 2
  %v1523 = vmax.f32 %v1521, %v1522
  %v1524 = vrot.slane %v1523, 1
  %v1525 = vmax.f32 %v1523, %v1524
  %v1526 = vsel %vm879, %v1295, -inf
  %v1527 = vrot.slane %v1526, 4
  %v1528 = vmax.f32 %v1526, %v1527
  %v1529 = vrot.slane %v1528, 2
  %v1530 = vmax.f32 %v1528, %v1529
  %v1531 = vrot.slane %v1530, 1
  %v1532 = vmax.f32 %v1530, %v1531
  %v1533 = vsel %vm879, %v1298, -inf
  %v1534 = vrot.slane %v1533, 4
  %v1535 = vmax.f32 %v1533, %v1534
  %v1536 = vrot.slane %v1535, 2
  %v1537 = vmax.f32 %v1535, %v1536
  %v1538 = vrot.slane %v1537, 1
  %v1539 = vmax.f32 %v1537, %v1538
  %v1540 = vsel %vm879, %v1301, -inf
  %v1541 = vrot.slane %v1540, 4
  %v1542 = vmax.f32 %v1540, %v1541
  %v1543 = vrot.slane %v1542, 2
  %v1544 = vmax.f32 %v1542, %v1543
  %v1545 = vrot.slane %v1544, 1
  %v1546 = vmax.f32 %v1544, %v1545
  %v1547 = vsel %vm879, %v1304, -inf
  %v1548 = vrot.slane %v1547, 4
  %v1549 = vmax.f32 %v1547, %v1548
  %v1550 = vrot.slane %v1549, 2
  %v1551 = vmax.f32 %v1549, %v1550
  %v1552 = vrot.slane %v1551, 1
  %v1553 = vmax.f32 %v1551, %v1552
  %v1554 = vsel %vm879, %v1307, -inf
  %v1555 = vrot.slane %v1554, 4
  %v1556 = vmax.f32 %v1554, %v1555
  %v1557 = vrot.slane %v1556, 2
  %v1558 = vmax.f32 %v1556, %v1557
  %v1559 = vrot.slane %v1558, 1
  %v1560 = vmax.f32 %v1558, %v1559
  %v1561 = vsel %vm879, %v1310, -inf
  %v1562 = vrot.slane %v1561, 4
  %v1563 = vmax.f32 %v1561, %v1562
  %v1564 = vrot.slane %v1563, 2
  %v1565 = vmax.f32 %v1563, %v1564
  %v1566 = vrot.slane %v1565, 1
  %v1567 = vmax.f32 %v1565, %v1566
  %v1568 = vsel %vm879, %v1313, -inf
  %v1569 = vrot.slane %v1568, 4
  %v1570 = vmax.f32 %v1568, %v1569
  %v1571 = vrot.slane %v1570, 2
  %v1572 = vmax.f32 %v1570, %v1571
  %v1573 = vrot.slane %v1572, 1
  %v1574 = vmax.f32 %v1572, %v1573
  %v1575 = vsel %vm879, %v1316, -inf
  %v1576 = vrot.slane %v1575, 4
  %v1577 = vmax.f32 %v1575, %v1576
  %v1578 = vrot.slane %v1577, 2
  %v1579 = vmax.f32 %v1577, %v1578
  %v1580 = vrot.slane %v1579, 1
  %v1581 = vmax.f32 %v1579, %v1580
  %v1582 = vsel %vm879, %v1319, -inf
  %v1583 = vrot.slane %v1582, 4
  %v1584 = vmax.f32 %v1582, %v1583
  %v1585 = vrot.slane %v1584, 2
  %v1586 = vmax.f32 %v1584, %v1585
  %v1587 = vrot.slane %v1586, 1
  %v1588 = vmax.f32 %v1586, %v1587
  %v1589 = vsel %vm879, %v1322, -inf
  %v1590 = vrot.slane %v1589, 4
  %v1591 = vmax.f32 %v1589, %v1590
  %v1592 = vrot.slane %v1591, 2
  %v1593 = vmax.f32 %v1591, %v1592
  %v1594 = vrot.slane %v1593, 1
  %v1595 = vmax.f32 %v1593, %v1594
  %v1596 = vsel %vm879, %v1325, -inf
  %v1597 = vrot.slane %v1596, 4
  %v1598 = vmax.f32 %v1596, %v1597
  %v1599 = vrot.slane %v1598, 2
  %v1600 = vmax.f32 %v1598, %v1599
  %v1601 = vrot.slane %v1600, 1
  %v1602 = vmax.f32 %v1600, %v1601
  %v1603 = vsel %vm879, %v1328, -inf
  %v1604 = vrot.slane %v1603, 4
  %v1605 = vmax.f32 %v1603, %v1604
  %v1606 = vrot.slane %v1605, 2
  %v1607 = vmax.f32 %v1605, %v1606
  %v1608 = vrot.slane %v1607, 1
  %v1609 = vmax.f32 %v1607, %v1608
  %v1610 = vsel %vm879, %v1331, -inf
  %v1611 = vrot.slane %v1610, 4
  %v1612 = vmax.f32 %v1610, %v1611
  %v1613 = vrot.slane %v1612, 2
  %v1614 = vmax.f32 %v1612, %v1613
  %v1615 = vrot.slane %v1614, 1
  %v1616 = vmax.f32 %v1614, %v1615
  %v1617 = vsel %vm879, %v1334, -inf
  %v1618 = vrot.slane %v1617, 4
  %v1619 = vmax.f32 %v1617, %v1618
  %v1620 = vrot.slane %v1619, 2
  %v1621 = vmax.f32 %v1619, %v1620
  %v1622 = vrot.slane %v1621, 1
  %v1623 = vmax.f32 %v1621, %v1622
  %v1624 = vsub.f32 %v1241, %v1406
  %v1625 = vsub.f32 %v1244, %v1413
  %v1626 = vsub.f32 %v1247, %v1420
  %v1627 = vsub.f32 %v1250, %v1427
  %v1628 = vsub.f32 %v1253, %v1434
  %v1629 = vsub.f32 %v1256, %v1441
  %v1630 = vsub.f32 %v1259, %v1448
  %v1631 = vsub.f32 %v1262, %v1455
  %v1632 = vsub.f32 %v1265, %v1462
  %v1633 = vsub.f32 %v1268, %v1469
  %v1634 = vsub.f32 %v1271, %v1476
  %v1635 = vsub.f32 %v1274, %v1483
  %v1636 = vsub.f32 %v1277, %v1490
  %v1637 = vsub.f32 %v1280, %v1497
  %v1638 = vsub.f32 %v1283, %v1504
  %v1639 = vsub.f32 %v1286, %v1511
  %v1640 = vsub.f32 %v1289, %v1518
  %v1641 = vsub.f32 %v1292, %v1525
  %v1642 = vsub.f32 %v1295, %v1532
  %v1643 = vsub.f32 %v1298, %v1539
  %v1644 = vsub.f32 %v1301, %v1546
  %v1645 = vsub.f32 %v1304, %v1553
  %v1646 = vsub.f32 %v1307, %v1560
  %v1647 = vsub.f32 %v1310, %v1567
  %v1648 = vsub.f32 %v1313, %v1574
  %v1649 = vsub.f32 %v1316, %v1581
  %v1650 = vsub.f32 %v1319, %v1588
  %v1651 = vsub.f32 %v1322, %v1595
  %v1652 = vsub.f32 %v1325, %v1602
  %v1653 = vsub.f32 %v1328, %v1609
  %v1654 = vsub.f32 %v1331, %v1616
  %v1655 = vsub.f32 %v1334, %v1623
  %v1656 = vmul.f32 %v1624, 1.442695
  %v1657 = vpow.pop %v1656
  %v1658 = vmul.f32 %v1625, 1.442695
  %v1659 = vpow.pop %v1658
  %v1660 = vmul.f32 %v1626, 1.442695
  %v1661 = vpow.pop %v1660
  %v1662 = vmul.f32 %v1627, 1.442695
  %v1663 = vpow.pop %v1662
  %v1664 = vmul.f32 %v1628, 1.442695
  %v1665 = vpow.pop %v1664
  %v1666 = vmul.f32 %v1629, 1.442695
  %v1667 = vpow.pop %v1666
  %v1668 = vmul.f32 %v1630, 1.442695
  %v1669 = vpow.pop %v1668
  %v1670 = vmul.f32 %v1631, 1.442695
  %v1671 = vpow.pop %v1670
  %v1672 = vmul.f32 %v1632, 1.442695
  %v1673 = vpow.pop %v1672
  %v1674 = vmul.f32 %v1633, 1.442695
  %v1675 = vpow.pop %v1674
  %v1676 = vmul.f32 %v1634, 1.442695
  %v1677 = vpow.pop %v1676
  %v1678 = vmul.f32 %v1635, 1.442695
  %v1679 = vpow.pop %v1678
  %v1680 = vmul.f32 %v1636, 1.442695
  %v1681 = vpow.pop %v1680
  %v1682 = vmul.f32 %v1637, 1.442695
  %v1683 = vpow.pop %v1682
  %v1684 = vmul.f32 %v1638, 1.442695
  %v1685 = vpow.pop %v1684
  %v1686 = vmul.f32 %v1639, 1.442695
  %v1687 = vpow.pop %v1686
  %v1688 = vmul.f32 %v1640, 1.442695
  %v1689 = vpow.pop %v1688
  %v1690 = vmul.f32 %v1641, 1.442695
  %v1691 = vpow.pop %v1690
  %v1692 = vmul.f32 %v1642, 1.442695
  %v1693 = vpow.pop %v1692
  %v1694 = vmul.f32 %v1643, 1.442695
  %v1695 = vpow.pop %v1694
  %v1696 = vmul.f32 %v1644, 1.442695
  %v1697 = vpow.pop %v1696
  %v1698 = vmul.f32 %v1645, 1.442695
  %v1699 = vpow.pop %v1698
  %v1700 = vmul.f32 %v1646, 1.442695
  %v1701 = vpow.pop %v1700
  %v1702 = vmul.f32 %v1647, 1.442695
  %v1703 = vpow.pop %v1702
  %v1704 = vmul.f32 %v1648, 1.442695
  %v1705 = vpow.pop %v1704
  %v1706 = vmul.f32 %v1649, 1.442695
  %v1707 = vpow.pop %v1706
  %v1708 = vmul.f32 %v1650, 1.442695
  %v1709 = vpow.pop %v1708
  %v1710 = vmul.f32 %v1651, 1.442695
  %v1711 = vpow.pop %v1710
  %v1712 = vmul.f32 %v1652, 1.442695
  %v1713 = vpow.pop %v1712
  %v1714 = vmul.f32 %v1653, 1.442695
  %v1715 = vpow.pop %v1714
  %v1716 = vmul.f32 %v1654, 1.442695
  %v1717 = vpow.pop %v1716
  %v1718 = vmul.f32 %v1655, 1.442695
  %v1719 = vpow.pop %v1718
  %v1720 = vmul.f32 %v1657, %v1368
  %v1721 = vmul.f32 %v1659, %v1369
  %v1722 = vmul.f32 %v1661, %v1370
  %v1723 = vmul.f32 %v1663, %v1371
  %v1724 = vmul.f32 %v1665, %v1372
  %v1725 = vmul.f32 %v1667, %v1373
  %v1726 = vmul.f32 %v1669, %v1374
  %v1727 = vmul.f32 %v1671, %v1375
  %v1728 = vmul.f32 %v1673, %v1376
  %v1729 = vmul.f32 %v1675, %v1377
  %v1730 = vmul.f32 %v1677, %v1378
  %v1731 = vmul.f32 %v1679, %v1379
  %v1732 = vmul.f32 %v1681, %v1380
  %v1733 = vmul.f32 %v1683, %v1381
  %v1734 = vmul.f32 %v1685, %v1382
  %v1735 = vmul.f32 %v1687, %v1383
  %v1736 = vmul.f32 %v1689, %v1384
  %v1737 = vmul.f32 %v1691, %v1385
  %v1738 = vmul.f32 %v1693, %v1386
  %v1739 = vmul.f32 %v1695, %v1387
  %v1740 = vmul.f32 %v1697, %v1388
  %v1741 = vmul.f32 %v1699, %v1389
  %v1742 = vmul.f32 %v1701, %v1390
  %v1743 = vmul.f32 %v1703, %v1391
  %v1744 = vmul.f32 %v1705, %v1392
  %v1745 = vmul.f32 %v1707, %v1393
  %v1746 = vmul.f32 %v1709, %v1394
  %v1747 = vmul.f32 %v1711, %v1395
  %v1748 = vmul.f32 %v1713, %v1396
  %v1749 = vmul.f32 %v1715, %v1397
  %v1750 = vmul.f32 %v1717, %v1398
  %v1751 = vmul.f32 %v1719, %v1399
  %v1752 = vsel %vm879, %v1720, 0.0
  %v1753 = vrot.slane %v1752, 4
  %v1754 = vadd.f32 %v1752, %v1753
  %v1755 = vrot.slane %v1754, 2
  %v1756 = vadd.f32 %v1754, %v1755
  %v1757 = vrot.slane %v1756, 1
  %v1758 = vadd.f32 %v1756, %v1757
  %v1759 = vsel %vm879, %v1721, 0.0
  %v1760 = vrot.slane %v1759, 4
  %v1761 = vadd.f32 %v1759, %v1760
  %v1762 = vrot.slane %v1761, 2
  %v1763 = vadd.f32 %v1761, %v1762
  %v1764 = vrot.slane %v1763, 1
  %v1765 = vadd.f32 %v1763, %v1764
  %v1766 = vsel %vm879, %v1722, 0.0
  %v1767 = vrot.slane %v1766, 4
  %v1768 = vadd.f32 %v1766, %v1767
  %v1769 = vrot.slane %v1768, 2
  %v1770 = vadd.f32 %v1768, %v1769
  %v1771 = vrot.slane %v1770, 1
  %v1772 = vadd.f32 %v1770, %v1771
  %v1773 = vsel %vm879, %v1723, 0.0
  %v1774 = vrot.slane %v1773, 4
  %v1775 = vadd.f32 %v1773, %v1774
  %v1776 = vrot.slane %v1775, 2
  %v1777 = vadd.f32 %v1775, %v1776
  %v1778 = vrot.slane %v1777, 1
  %v1779 = vadd.f32 %v1777, %v1778
  %v1780 = vsel %vm879, %v1724, 0.0
  %v1781 = vrot.slane %v1780, 4
  %v1782 = vadd.f32 %v1780, %v1781
  %v1783 = vrot.slane %v1782, 2
  %v1784 = vadd.f32 %v1782, %v1783
  %v1785 = vrot.slane %v1784, 1
  %v1786 = vadd.f32 %v1784, %v1785
  %v1787 = vsel %vm879, %v1725, 0.0
  %v1788 = vrot.slane %v1787, 4
  %v1789 = vadd.f32 %v1787, %v1788
  %v1790 = vrot.slane %v1789, 2
  %v1791 = vadd.f32 %v1789, %v1790
  %v1792 = vrot.slane %v1791, 1
  %v1793 = vadd.f32 %v1791, %v1792
  %v1794 = vsel %vm879, %v1726, 0.0
  %v1795 = vrot.slane %v1794, 4
  %v1796 = vadd.f32 %v1794, %v1795
  %v1797 = vrot.slane %v1796, 2
  %v1798 = vadd.f32 %v1796, %v1797
  %v1799 = vrot.slane %v1798, 1
  %v1800 = vadd.f32 %v1798, %v1799
  %v1801 = vsel %vm879, %v1727, 0.0
  %v1802 = vrot.slane %v1801, 4
  %v1803 = vadd.f32 %v1801, %v1802
  %v1804 = vrot.slane %v1803, 2
  %v1805 = vadd.f32 %v1803, %v1804
  %v1806 = vrot.slane %v1805, 1
  %v1807 = vadd.f32 %v1805, %v1806
  %v1808 = vsel %vm879, %v1728, 0.0
  %v1809 = vrot.slane %v1808, 4
  %v1810 = vadd.f32 %v1808, %v1809
  %v1811 = vrot.slane %v1810, 2
  %v1812 = vadd.f32 %v1810, %v1811
  %v1813 = vrot.slane %v1812, 1
  %v1814 = vadd.f32 %v1812, %v1813
  %v1815 = vsel %vm879, %v1729, 0.0
  %v1816 = vrot.slane %v1815, 4
  %v1817 = vadd.f32 %v1815, %v1816
  %v1818 = vrot.slane %v1817, 2
  %v1819 = vadd.f32 %v1817, %v1818
  %v1820 = vrot.slane %v1819, 1
  %v1821 = vadd.f32 %v1819, %v1820
  %v1822 = vsel %vm879, %v1730, 0.0
  %v1823 = vrot.slane %v1822, 4
  %v1824 = vadd.f32 %v1822, %v1823
  %v1825 = vrot.slane %v1824, 2
  %v1826 = vadd.f32 %v1824, %v1825
  %v1827 = vrot.slane %v1826, 1
  %v1828 = vadd.f32 %v1826, %v1827
  %v1829 = vsel %vm879, %v1731, 0.0
  %v1830 = vrot.slane %v1829, 4
  %v1831 = vadd.f32 %v1829, %v1830
  %v1832 = vrot.slane %v1831, 2
  %v1833 = vadd.f32 %v1831, %v1832
  %v1834 = vrot.slane %v1833, 1
  %v1835 = vadd.f32 %v1833, %v1834
  %v1836 = vsel %vm879, %v1732, 0.0
  %v1837 = vrot.slane %v1836, 4
  %v1838 = vadd.f32 %v1836, %v1837
  %v1839 = vrot.slane %v1838, 2
  %v1840 = vadd.f32 %v1838, %v1839
  %v1841 = vrot.slane %v1840, 1
  %v1842 = vadd.f32 %v1840, %v1841
  %v1843 = vsel %vm879, %v1733, 0.0
  %v1844 = vrot.slane %v1843, 4
  %v1845 = vadd.f32 %v1843, %v1844
  %v1846 = vrot.slane %v1845, 2
  %v1847 = vadd.f32 %v1845, %v1846
  %v1848 = vrot.slane %v1847, 1
  %v1849 = vadd.f32 %v1847, %v1848
  %v1850 = vsel %vm879, %v1734, 0.0
  %v1851 = vrot.slane %v1850, 4
  %v1852 = vadd.f32 %v1850, %v1851
  %v1853 = vrot.slane %v1852, 2
  %v1854 = vadd.f32 %v1852, %v1853
  %v1855 = vrot.slane %v1854, 1
  %v1856 = vadd.f32 %v1854, %v1855
  %v1857 = vsel %vm879, %v1735, 0.0
  %v1858 = vrot.slane %v1857, 4
  %v1859 = vadd.f32 %v1857, %v1858
  %v1860 = vrot.slane %v1859, 2
  %v1861 = vadd.f32 %v1859, %v1860
  %v1862 = vrot.slane %v1861, 1
  %v1863 = vadd.f32 %v1861, %v1862
  %v1864 = vsel %vm879, %v1736, 0.0
  %v1865 = vrot.slane %v1864, 4
  %v1866 = vadd.f32 %v1864, %v1865
  %v1867 = vrot.slane %v1866, 2
  %v1868 = vadd.f32 %v1866, %v1867
  %v1869 = vrot.slane %v1868, 1
  %v1870 = vadd.f32 %v1868, %v1869
  %v1871 = vsel %vm879, %v1737, 0.0
  %v1872 = vrot.slane %v1871, 4
  %v1873 = vadd.f32 %v1871, %v1872
  %v1874 = vrot.slane %v1873, 2
  %v1875 = vadd.f32 %v1873, %v1874
  %v1876 = vrot.slane %v1875, 1
  %v1877 = vadd.f32 %v1875, %v1876
  %v1878 = vsel %vm879, %v1738, 0.0
  %v1879 = vrot.slane %v1878, 4
  %v1880 = vadd.f32 %v1878, %v1879
  %v1881 = vrot.slane %v1880, 2
  %v1882 = vadd.f32 %v1880, %v1881
  %v1883 = vrot.slane %v1882, 1
  %v1884 = vadd.f32 %v1882, %v1883
  %v1885 = vsel %vm879, %v1739, 0.0
  %v1886 = vrot.slane %v1885, 4
  %v1887 = vadd.f32 %v1885, %v1886
  %v1888 = vrot.slane %v1887, 2
  %v1889 = vadd.f32 %v1887, %v1888
  %v1890 = vrot.slane %v1889, 1
  %v1891 = vadd.f32 %v1889, %v1890
  %v1892 = vsel %vm879, %v1740, 0.0
  %v1893 = vrot.slane %v1892, 4
  %v1894 = vadd.f32 %v1892, %v1893
  %v1895 = vrot.slane %v1894, 2
  %v1896 = vadd.f32 %v1894, %v1895
  %v1897 = vrot.slane %v1896, 1
  %v1898 = vadd.f32 %v1896, %v1897
  %v1899 = vsel %vm879, %v1741, 0.0
  %v1900 = vrot.slane %v1899, 4
  %v1901 = vadd.f32 %v1899, %v1900
  %v1902 = vrot.slane %v1901, 2
  %v1903 = vadd.f32 %v1901, %v1902
  %v1904 = vrot.slane %v1903, 1
  %v1905 = vadd.f32 %v1903, %v1904
  %v1906 = vsel %vm879, %v1742, 0.0
  %v1907 = vrot.slane %v1906, 4
  %v1908 = vadd.f32 %v1906, %v1907
  %v1909 = vrot.slane %v1908, 2
  %v1910 = vadd.f32 %v1908, %v1909
  %v1911 = vrot.slane %v1910, 1
  %v1912 = vadd.f32 %v1910, %v1911
  %v1913 = vsel %vm879, %v1743, 0.0
  %v1914 = vrot.slane %v1913, 4
  %v1915 = vadd.f32 %v1913, %v1914
  %v1916 = vrot.slane %v1915, 2
  %v1917 = vadd.f32 %v1915, %v1916
  %v1918 = vrot.slane %v1917, 1
  %v1919 = vadd.f32 %v1917, %v1918
  %v1920 = vsel %vm879, %v1744, 0.0
  %v1921 = vrot.slane %v1920, 4
  %v1922 = vadd.f32 %v1920, %v1921
  %v1923 = vrot.slane %v1922, 2
  %v1924 = vadd.f32 %v1922, %v1923
  %v1925 = vrot.slane %v1924, 1
  %v1926 = vadd.f32 %v1924, %v1925
  %v1927 = vsel %vm879, %v1745, 0.0
  %v1928 = vrot.slane %v1927, 4
  %v1929 = vadd.f32 %v1927, %v1928
  %v1930 = vrot.slane %v1929, 2
  %v1931 = vadd.f32 %v1929, %v1930
  %v1932 = vrot.slane %v1931, 1
  %v1933 = vadd.f32 %v1931, %v1932
  %v1934 = vsel %vm879, %v1746, 0.0
  %v1935 = vrot.slane %v1934, 4
  %v1936 = vadd.f32 %v1934, %v1935
  %v1937 = vrot.slane %v1936, 2
  %v1938 = vadd.f32 %v1936, %v1937
  %v1939 = vrot.slane %v1938, 1
  %v1940 = vadd.f32 %v1938, %v1939
  %v1941 = vsel %vm879, %v1747, 0.0
  %v1942 = vrot.slane %v1941, 4
  %v1943 = vadd.f32 %v1941, %v1942
  %v1944 = vrot.slane %v1943, 2
  %v1945 = vadd.f32 %v1943, %v1944
  %v1946 = vrot.slane %v1945, 1
  %v1947 = vadd.f32 %v1945, %v1946
  %v1948 = vsel %vm879, %v1748, 0.0
  %v1949 = vrot.slane %v1948, 4
  %v1950 = vadd.f32 %v1948, %v1949
  %v1951 = vrot.slane %v1950, 2
  %v1952 = vadd.f32 %v1950, %v1951
  %v1953 = vrot.slane %v1952, 1
  %v1954 = vadd.f32 %v1952, %v1953
  %v1955 = vsel %vm879, %v1749, 0.0
  %v1956 = vrot.slane %v1955, 4
  %v1957 = vadd.f32 %v1955, %v1956
  %v1958 = vrot.slane %v1957, 2
  %v1959 = vadd.f32 %v1957, %v1958
  %v1960 = vrot.slane %v1959, 1
  %v1961 = vadd.f32 %v1959, %v1960
  %v1962 = vsel %vm879, %v1750, 0.0
  %v1963 = vrot.slane %v1962, 4
  %v1964 = vadd.f32 %v1962, %v1963
  %v1965 = vrot.slane %v1964, 2
  %v1966 = vadd.f32 %v1964, %v1965
  %v1967 = vrot.slane %v1966, 1
  %v1968 = vadd.f32 %v1966, %v1967
  %v1969 = vsel %vm879, %v1751, 0.0
  %v1970 = vrot.slane %v1969, 4
  %v1971 = vadd.f32 %v1969, %v1970
  %v1972 = vrot.slane %v1971, 2
  %v1973 = vadd.f32 %v1971, %v1972
  %v1974 = vrot.slane %v1973, 1
  %v1975 = vadd.f32 %v1973, %v1974
  %v1976 = vsel %vm879, %v1657, 0.0
  %v1977 = vrot.slane %v1976, 4
  %v1978 = vadd.f32 %v1976, %v1977
  %v1979 = vrot.slane %v1978, 2
  %v1980 = vadd.f32 %v1978, %v1979
  %v1981 = vrot.slane %v1980, 1
  %v1982 = vadd.f32 %v1980, %v1981
  %v1983 = vsel %vm879, %v1659, 0.0
  %v1984 = vrot.slane %v1983, 4
  %v1985 = vadd.f32 %v1983, %v1984
  %v1986 = vrot.slane %v1985, 2
  %v1987 = vadd.f32 %v1985, %v1986
  %v1988 = vrot.slane %v1987, 1
  %v1989 = vadd.f32 %v1987, %v1988
  %v1990 = vsel %vm879, %v1661, 0.0
  %v1991 = vrot.slane %v1990, 4
  %v1992 = vadd.f32 %v1990, %v1991
  %v1993 = vrot.slane %v1992, 2
  %v1994 = vadd.f32 %v1992, %v1993
  %v1995 = vrot.slane %v1994, 1
  %v1996 = vadd.f32 %v1994, %v1995
  %v1997 = vsel %vm879, %v1663, 0.0
  %v1998 = vrot.slane %v1997, 4
  %v1999 = vadd.f32 %v1997, %v1998
  %v2000 = vrot.slane %v1999, 2
  %v2001 = vadd.f32 %v1999, %v2000
  %v2002 = vrot.slane %v2001, 1
  %v2003 = vadd.f32 %v2001, %v2002
  %v2004 = vsel %vm879, %v1665, 0.0
  %v2005 = vrot.slane %v2004, 4
  %v2006 = vadd.f32 %v2004, %v2005
  %v2007 = vrot.slane %v2006, 2
  %v2008 = vadd.f32 %v2006, %v2007
  %v2009 = vrot.slane %v2008, 1
  %v2010 = vadd.f32 %v2008, %v2009
  %v2011 = vsel %vm879, %v1667, 0.0
  %v2012 = vrot.slane %v2011, 4
  %v2013 = vadd.f32 %v2011, %v2012
  %v2014 = vrot.slane %v2013, 2
  %v2015 = vadd.f32 %v2013, %v2014
  %v2016 = vrot.slane %v2015, 1
  %v2017 = vadd.f32 %v2015, %v2016
  %v2018 = vsel %vm879, %v1669, 0.0
  %v2019 = vrot.slane %v2018, 4
  %v2020 = vadd.f32 %v2018, %v2019
  %v2021 = vrot.slane %v2020, 2
  %v2022 = vadd.f32 %v2020, %v2021
  %v2023 = vrot.slane %v2022, 1
  %v2024 = vadd.f32 %v2022, %v2023
  %v2025 = vsel %vm879, %v1671, 0.0
  %v2026 = vrot.slane %v2025, 4
  %v2027 = vadd.f32 %v2025, %v2026
  %v2028 = vrot.slane %v2027, 2
  %v2029 = vadd.f32 %v2027, %v2028
  %v2030 = vrot.slane %v2029, 1
  %v2031 = vadd.f32 %v2029, %v2030
  %v2032 = vsel %vm879, %v1673, 0.0
  %v2033 = vrot.slane %v2032, 4
  %v2034 = vadd.f32 %v2032, %v2033
  %v2035 = vrot.slane %v2034, 2
  %v2036 = vadd.f32 %v2034, %v2035
  %v2037 = vrot.slane %v2036, 1
  %v2038 = vadd.f32 %v2036, %v2037
  %v2039 = vsel %vm879, %v1675, 0.0
  %v2040 = vrot.slane %v2039, 4
  %v2041 = vadd.f32 %v2039, %v2040
  %v2042 = vrot.slane %v2041, 2
  %v2043 = vadd.f32 %v2041, %v2042
  %v2044 = vrot.slane %v2043, 1
  %v2045 = vadd.f32 %v2043, %v2044
  %v2046 = vsel %vm879, %v1677, 0.0
  %v2047 = vrot.slane %v2046, 4
  %v2048 = vadd.f32 %v2046, %v2047
  %v2049 = vrot.slane %v2048, 2
  %v2050 = vadd.f32 %v2048, %v2049
  %v2051 = vrot.slane %v2050, 1
  %v2052 = vadd.f32 %v2050, %v2051
  %v2053 = vsel %vm879, %v1679, 0.0
  %v2054 = vrot.slane %v2053, 4
  %v2055 = vadd.f32 %v2053, %v2054
  %v2056 = vrot.slane %v2055, 2
  %v2057 = vadd.f32 %v2055, %v2056
  %v2058 = vrot.slane %v2057, 1
  %v2059 = vadd.f32 %v2057, %v2058
  %v2060 = vsel %vm879, %v1681, 0.0
  %v2061 = vrot.slane %v2060, 4
  %v2062 = vadd.f32 %v2060, %v2061
  %v2063 = vrot.slane %v2062, 2
  %v2064 = vadd.f32 %v2062, %v2063
  %v2065 = vrot.slane %v2064, 1
  %v2066 = vadd.f32 %v2064, %v2065
  %v2067 = vsel %vm879, %v1683, 0.0
  %v2068 = vrot.slane %v2067, 4
  %v2069 = vadd.f32 %v2067, %v2068
  %v2070 = vrot.slane %v2069, 2
  %v2071 = vadd.f32 %v2069, %v2070
  %v2072 = vrot.slane %v2071, 1
  %v2073 = vadd.f32 %v2071, %v2072
  %v2074 = vsel %vm879, %v1685, 0.0
  %v2075 = vrot.slane %v2074, 4
  %v2076 = vadd.f32 %v2074, %v2075
  %v2077 = vrot.slane %v2076, 2
  %v2078 = vadd.f32 %v2076, %v2077
  %v2079 = vrot.slane %v2078, 1
  %v2080 = vadd.f32 %v2078, %v2079
  %v2081 = vsel %vm879, %v1687, 0.0
  %v2082 = vrot.slane %v2081, 4
  %v2083 = vadd.f32 %v2081, %v2082
  %v2084 = vrot.slane %v2083, 2
  %v2085 = vadd.f32 %v2083, %v2084
  %v2086 = vrot.slane %v2085, 1
  %v2087 = vadd.f32 %v2085, %v2086
  %v2088 = vsel %vm879, %v1689, 0.0
  %v2089 = vrot.slane %v2088, 4
  %v2090 = vadd.f32 %v2088, %v2089
  %v2091 = vrot.slane %v2090, 2
  %v2092 = vadd.f32 %v2090, %v2091
  %v2093 = vrot.slane %v2092, 1
  %v2094 = vadd.f32 %v2092, %v2093
  %v2095 = vsel %vm879, %v1691, 0.0
  %v2096 = vrot.slane %v2095, 4
  %v2097 = vadd.f32 %v2095, %v2096
  %v2098 = vrot.slane %v2097, 2
  %v2099 = vadd.f32 %v2097, %v2098
  %v2100 = vrot.slane %v2099, 1
  %v2101 = vadd.f32 %v2099, %v2100
  %v2102 = vsel %vm879, %v1693, 0.0
  %v2103 = vrot.slane %v2102, 4
  %v2104 = vadd.f32 %v2102, %v2103
  %v2105 = vrot.slane %v2104, 2
  %v2106 = vadd.f32 %v2104, %v2105
  %v2107 = vrot.slane %v2106, 1
  %v2108 = vadd.f32 %v2106, %v2107
  %v2109 = vsel %vm879, %v1695, 0.0
  %v2110 = vrot.slane %v2109, 4
  %v2111 = vadd.f32 %v2109, %v2110
  %v2112 = vrot.slane %v2111, 2
  %v2113 = vadd.f32 %v2111, %v2112
  %v2114 = vrot.slane %v2113, 1
  %v2115 = vadd.f32 %v2113, %v2114
  %v2116 = vsel %vm879, %v1697, 0.0
  %v2117 = vrot.slane %v2116, 4
  %v2118 = vadd.f32 %v2116, %v2117
  %v2119 = vrot.slane %v2118, 2
  %v2120 = vadd.f32 %v2118, %v2119
  %v2121 = vrot.slane %v2120, 1
  %v2122 = vadd.f32 %v2120, %v2121
  %v2123 = vsel %vm879, %v1699, 0.0
  %v2124 = vrot.slane %v2123, 4
  %v2125 = vadd.f32 %v2123, %v2124
  %v2126 = vrot.slane %v2125, 2
  %v2127 = vadd.f32 %v2125, %v2126
  %v2128 = vrot.slane %v2127, 1
  %v2129 = vadd.f32 %v2127, %v2128
  %v2130 = vsel %vm879, %v1701, 0.0
  %v2131 = vrot.slane %v2130, 4
  %v2132 = vadd.f32 %v2130, %v2131
  %v2133 = vrot.slane %v2132, 2
  %v2134 = vadd.f32 %v2132, %v2133
  %v2135 = vrot.slane %v2134, 1
  %v2136 = vadd.f32 %v2134, %v2135
  %v2137 = vsel %vm879, %v1703, 0.0
  %v2138 = vrot.slane %v2137, 4
  %v2139 = vadd.f32 %v2137, %v2138
  %v2140 = vrot.slane %v2139, 2
  %v2141 = vadd.f32 %v2139, %v2140
  %v2142 = vrot.slane %v2141, 1
  %v2143 = vadd.f32 %v2141, %v2142
  %v2144 = vsel %vm879, %v1705, 0.0
  %v2145 = vrot.slane %v2144, 4
  %v2146 = vadd.f32 %v2144, %v2145
  %v2147 = vrot.slane %v2146, 2
  %v2148 = vadd.f32 %v2146, %v2147
  %v2149 = vrot.slane %v2148, 1
  %v2150 = vadd.f32 %v2148, %v2149
  %v2151 = vsel %vm879, %v1707, 0.0
  %v2152 = vrot.slane %v2151, 4
  %v2153 = vadd.f32 %v2151, %v2152
  %v2154 = vrot.slane %v2153, 2
  %v2155 = vadd.f32 %v2153, %v2154
  %v2156 = vrot.slane %v2155, 1
  %v2157 = vadd.f32 %v2155, %v2156
  %v2158 = vsel %vm879, %v1709, 0.0
  %v2159 = vrot.slane %v2158, 4
  %v2160 = vadd.f32 %v2158, %v2159
  %v2161 = vrot.slane %v2160, 2
  %v2162 = vadd.f32 %v2160, %v2161
  %v2163 = vrot.slane %v2162, 1
  %v2164 = vadd.f32 %v2162, %v2163
  %v2165 = vsel %vm879, %v1711, 0.0
  %v2166 = vrot.slane %v2165, 4
  %v2167 = vadd.f32 %v2165, %v2166
  %v2168 = vrot.slane %v2167, 2
  %v2169 = vadd.f32 %v2167, %v2168
  %v2170 = vrot.slane %v2169, 1
  %v2171 = vadd.f32 %v2169, %v2170
  %v2172 = vsel %vm879, %v1713, 0.0
  %v2173 = vrot.slane %v2172, 4
  %v2174 = vadd.f32 %v2172, %v2173
  %v2175 = vrot.slane %v2174, 2
  %v2176 = vadd.f32 %v2174, %v2175
  %v2177 = vrot.slane %v2176, 1
  %v2178 = vadd.f32 %v2176, %v2177
  %v2179 = vsel %vm879, %v1715, 0.0
  %v2180 = vrot.slane %v2179, 4
  %v2181 = vadd.f32 %v2179, %v2180
  %v2182 = vrot.slane %v2181, 2
  %v2183 = vadd.f32 %v2181, %v2182
  %v2184 = vrot.slane %v2183, 1
  %v2185 = vadd.f32 %v2183, %v2184
  %v2186 = vsel %vm879, %v1717, 0.0
  %v2187 = vrot.slane %v2186, 4
  %v2188 = vadd.f32 %v2186, %v2187
  %v2189 = vrot.slane %v2188, 2
  %v2190 = vadd.f32 %v2188, %v2189
  %v2191 = vrot.slane %v2190, 1
  %v2192 = vadd.f32 %v2190, %v2191
  %v2193 = vsel %vm879, %v1719, 0.0
  %v2194 = vrot.slane %v2193, 4
  %v2195 = vadd.f32 %v2193, %v2194
  %v2196 = vrot.slane %v2195, 2
  %v2197 = vadd.f32 %v2195, %v2196
  %v2198 = vrot.slane %v2197, 1
  %v2199 = vadd.f32 %v2197, %v2198
  %v2200 = vrcp.pop %v1982
  %v2201 = vrcp.pop %v1989
  %v2202 = vrcp.pop %v1996
  %v2203 = vrcp.pop %v2003
  %v2204 = vrcp.pop %v2010
  %v2205 = vrcp.pop %v2017
  %v2206 = vrcp.pop %v2024
  %v2207 = vrcp.pop %v2031
  %v2208 = vrcp.pop %v2038
  %v2209 = vrcp.pop %v2045
  %v2210 = vrcp.pop %v2052
  %v2211 = vrcp.pop %v2059
  %v2212 = vrcp.pop %v2066
  %v2213 = vrcp.pop %v2073
  %v2214 = vrcp.pop %v2080
  %v2215 = vrcp.pop %v2087
  %v2216 = vrcp.pop %v2094
  %v2217 = vrcp.pop %v2101
  %v2218 = vrcp.pop %v2108
  %v2219 = vrcp.pop %v2115
  %v2220 = vrcp.pop %v2122
  %v2221 = vrcp.pop %v2129
  %v2222 = vrcp.pop %v2136
  %v2223 = vrcp.pop %v2143
  %v2224 = vrcp.pop %v2150
  %v2225 = vrcp.pop %v2157
  %v2226 = vrcp.pop %v2164
  %v2227 = vrcp.pop %v2171
  %v2228 = vrcp.pop %v2178
  %v2229 = vrcp.pop %v2185
  %v2230 = vrcp.pop %v2192
  %v2231 = vrcp.pop %v2199
  %v2232 = vmul.f32 %v1758, %v2200
  %v2233 = vmul.f32 %v1765, %v2201
  %v2234 = vmul.f32 %v1772, %v2202
  %v2235 = vmul.f32 %v1779, %v2203
  %v2236 = vmul.f32 %v1786, %v2204
  %v2237 = vmul.f32 %v1793, %v2205
  %v2238 = vmul.f32 %v1800, %v2206
  %v2239 = vmul.f32 %v1807, %v2207
  %v2240 = vmul.f32 %v1814, %v2208
  %v2241 = vmul.f32 %v1821, %v2209
  %v2242 = vmul.f32 %v1828, %v2210
  %v2243 = vmul.f32 %v1835, %v2211
  %v2244 = vmul.f32 %v1842, %v2212
  %v2245 = vmul.f32 %v1849, %v2213
  %v2246 = vmul.f32 %v1856, %v2214
  %v2247 = vmul.f32 %v1863, %v2215
  %v2248 = vmul.f32 %v1870, %v2216
  %v2249 = vmul.f32 %v1877, %v2217
  %v2250 = vmul.f32 %v1884, %v2218
  %v2251 = vmul.f32 %v1891, %v2219
  %v2252 = vmul.f32 %v1898, %v2220
  %v2253 = vmul.f32 %v1905, %v2221
  %v2254 = vmul.f32 %v1912, %v2222
  %v2255 = vmul.f32 %v1919, %v2223
  %v2256 = vmul.f32 %v1926, %v2224
  %v2257 = vmul.f32 %v1933, %v2225
  %v2258 = vmul.f32 %v1940, %v2226
  %v2259 = vmul.f32 %v1947, %v2227
  %v2260 = vmul.f32 %v1954, %v2228
  %v2261 = vmul.f32 %v1961, %v2229
  %v2262 = vmul.f32 %v1968, %v2230
  %v2263 = vmul.f32 %v1975, %v2231
  %vm2296 = vcmask 1041409
  %v2297 = vsel %vm2296, %v2233, %v2232
  %vm2298 = vcmask 1042434
  %v2299 = vsel %vm2298, %v2234, %v2297
  %vm2300 = vcmask 1043459
  %v2301 = vsel %vm2300, %v2235, %v2299
  %vm2302 = vcmask 1044484
  %v2303 = vsel %vm2302, %v2236, %v2301
  %vm2304 = vcmask 1045509
  %v2305 = vsel %vm2304, %v2237, %v2303
  %vm2306 = vcmask 1046534
  %v2307 = vsel %vm2306, %v2238, %v2305
  %vm2308 = vcmask 1047559
  %v2309 = vsel %vm2308, %v2239, %v2307
  %v2310 = vsel %vm2296, %v2241, %v2240
  %v2311 = vsel %vm2298, %v2242, %v2310
  %v2312 = vsel %vm2300, %v2243, %v2311
  %v2313 = vsel %vm2302, %v2244, %v2312
  %v2314 = vsel %vm2304, %v2245, %v2313
  %v2315 = vsel %vm2306, %v2246, %v2314
  %v2316 = vsel %vm2308, %v2247, %v2315
  %v2317 = vsel %vm2296, %v2249, %v2248
  %v2318 = vsel %vm2298, %v2250, %v2317
  %v2319 = vsel %vm2300, %v2251, %v2318
  %v2320 = vsel %vm2302, %v2252, %v2319
  %v2321 = vsel %vm2304, %v2253, %v2320
  %v2322 = vsel %vm2306, %v2254, %v2321
  %v2323 = vsel %vm2308, %v2255, %v2322
  %v2324 = vsel %vm2296, %v2257, %v2256
  %v2325 = vsel %vm2298, %v2258, %v2324
  %v2326 = vsel %vm2300, %v2259, %v2325
  %v2327 = vsel %vm2302, %v2260, %v2326
  %v2328 = vsel %vm2304, %v2261, %v2327
  %v2329 = vsel %vm2306, %v2262, %v2328
  %v2330 = vsel %vm2308, %v2263, %v2329
  %2335 = vst.msk [vmem:[%s13] sm:$0xff] %vm879, %v2309
  %2336 = vst.msk [vmem:[%s13 + $0x8] sm:$0xff] %vm879, %v2316
  %2337 = vst.msk [vmem:[%s13 + $0x10] sm:$0xff] %vm879, %v2323
  %2338 = vst.msk [vmem:[%s13 + $0x18] sm:$0xff] %vm879, %v2330
  // Predicated region
  $region54: #{point_transformer_forward.44} parent=0 // pred_check
    _
  $region55: #{point_transformer_forward.44} parent=0 // pred_check_branch
    %2340 = sbr.rel (0) target = $region57
  $region56: #{point_transformer_forward.44} parent=0 // pred_region
    _
  $region57: #{point_transformer_forward.44} parent=0 // pred_fallthru
    _
  // Predicated region
  $region58: #{point_transformer_forward.44} parent=0 // pred_check
    _
  $region59: #{point_transformer_forward.44} parent=0 // pred_check_branch
    %2342 = sbr.rel (0) target = $region61
  $region60: #{point_transformer_forward.44} parent=0 // pred_region
    _
  $region61: #{point_transformer_forward.44} parent=0 // pred_fallthru
    _

// kernel: point_transformer_forward.55
$region0: #{point_transformer_forward.55}
  #allocation0 [shape = 'u32[]', space=smem, size = 0x4, offset = 0x4, fixed_abs, tag = 'smem constant byte address 0x4 - core index']
  #allocation1 [shape = 'u32[72,128]{1,0:T(1,128)}', space=vmem, size = 0x9000, scoped, tag = 'internal scratch']
  %s0 = inlined_call_operand.vmem [shape: f32[32,96], index: 0, kind: input, shape index: {}]
  %s1 = inlined_call_operand.vmem [shape: f32[96,32], index: 1, kind: input, shape index: {}]
  %s2 = inlined_call_operand.vmem [shape: f32[1,32], index: 2, kind: input, shape index: {}]
  %s3 = inlined_call_operand.vmem [shape: f32[32,32], index: 3, kind: output, shape index: {}]
  %s4 = sld [smem:[#allocation0]]
  $region22: #{point_transformer_forward.55} parent=0
    _
  %s6 = ssub.s32 1, %s4
  %s7 = scalar_select 0, %s6, %s4
  // Predicated region
  $region2: #{point_transformer_forward.55} parent=0 // pred_check
    _
  $region3: #{point_transformer_forward.55} parent=0 // pred_check_branch
    %9 = sbr.rel (0) target = $region5
  $region4: #{point_transformer_forward.55} parent=0 // pred_region
    _
  $region5: #{point_transformer_forward.55} parent=0 // pred_fallthru
    _
  // Predicated region
  $region6: #{point_transformer_forward.55} parent=0 // pred_check
    _
  $region7: #{point_transformer_forward.55} parent=0 // pred_check_branch
    %11 = sbr.rel (0) target = $region9
  $region8: #{point_transformer_forward.55} parent=0 // pred_region
    _
  $region9: #{point_transformer_forward.55} parent=0 // pred_fallthru
    _
  // Predicated region
  $region10: #{point_transformer_forward.55} parent=0 // pred_check
    _
  $region11: #{point_transformer_forward.55} parent=0 // pred_check_branch
    %13 = sbr.rel (0) target = $region13
  $region12: #{point_transformer_forward.55} parent=0 // pred_region
    _
  $region13: #{point_transformer_forward.55} parent=0 // pred_fallthru
    _
  %v14 = vld [vmem:[%s0] sm:$0xff]
  %v15 = vld [vmem:[%s0 + $0x8] sm:$0xff]
  %v16 = vld [vmem:[%s0 + $0x10] sm:$0xff]
  %v17 = vld [vmem:[%s0 + $0x18] sm:$0xff]
  %v18 = vld [vmem:[%s1] sm:$0xff]
  %v19 = vld [vmem:[%s1 + $0x8] sm:$0xff]
  %v20 = vld [vmem:[%s1 + $0x10] sm:$0xff]
  %v21 = vld [vmem:[%s1 + $0x18] sm:$0xff]
  %v22 = vld [vmem:[%s1 + $0x20] sm:$0xff]
  %v23 = vld [vmem:[%s1 + $0x28] sm:$0xff]
  %v24 = vld [vmem:[%s1 + $0x30] sm:$0xff]
  %v25 = vld [vmem:[%s1 + $0x38] sm:$0xff]
  %v26 = vld [vmem:[%s1 + $0x40] sm:$0xff]
  %v27 = vld [vmem:[%s1 + $0x48] sm:$0xff]
  %v28 = vld [vmem:[%s1 + $0x50] sm:$0xff]
  %v29 = vld [vmem:[%s1 + $0x58] sm:$0xff]
  %v30 = vld [vmem:[%s2] sm:$0x1]
  %v32 = vperm.slane %v30, 0
  %vm34 = vcmask 785408
  %v36 = vsel %vm34, %v14, 0
  %v39 = vsel %vm34, %v15, 0
  %v42 = vsel %vm34, %v16, 0
  %v45 = vsel %vm34, %v17, 0
  %47 = vmatpush.msra.mxu0 0.0
  %48 = vmatpush.msra.mxu0 0.0
  %49 = vmatpush.msra.mxu0 0.0
  %50 = vmatpush.msra.mxu0 0.0
  %51 = vmatpush.msra.mxu0 %v29
  %52 = vmatpush.msra.mxu0 %v28
  %53 = vmatpush.msra.mxu0 %v27
  %54 = vmatpush.msra.mxu0 %v26
  %55 = vmatpush.msra.mxu0 %v25
  %56 = vmatpush.msra.mxu0 %v24
  %57 = vmatpush.msra.mxu0 %v23
  %58 = vmatpush.msra.mxu0 %v22
  %59 = vmatpush.msra.mxu0 %v21
  %60 = vmatpush.msra.mxu0 %v20
  %61 = vmatpush.msra.mxu0 %v19
  %62 = vmatpush.msra.mxu0 %v18
  %63 = vmatmul.f32.gmra.mxu0 %v36
  %v64 = vpop.f32.mrf.mxu0
  %v65 = vadd.f32 %v32, %v64
  %66 = vmatmul.f32.gmra.mxu0 %v39
  %v67 = vpop.f32.mrf.mxu0
  %v68 = vadd.f32 %v32, %v67
  %69 = vmatmul.f32.gmra.mxu0 %v42
  %v70 = vpop.f32.mrf.mxu0
  %v71 = vadd.f32 %v32, %v70
  %72 = vmatmul.f32.gmra.mxu0 %v45
  %v73 = vpop.f32.mrf.mxu0
  %v74 = vadd.f32 %v32, %v73
  %75 = vdwg.mxu0
  %v76 = vmax.f32 %v65, 0.0
  %v77 = vmax.f32 %v68, 0.0
  %v78 = vmax.f32 %v71, 0.0
  %v79 = vmax.f32 %v74, 0.0
  %vm80 = vcmask 261120
  %81 = vst.msk [vmem:[%s3] sm:$0xff] %vm80, %v76
  %82 = vst.msk [vmem:[%s3 + $0x8] sm:$0xff] %vm80, %v77
  %83 = vst.msk [vmem:[%s3 + $0x10] sm:$0xff] %vm80, %v78
  %84 = vst.msk [vmem:[%s3 + $0x18] sm:$0xff] %vm80, %v79
  // Predicated region
  $region14: #{point_transformer_forward.55} parent=0 // pred_check
    _
  $region15: #{point_transformer_forward.55} parent=0 // pred_check_branch
    %86 = sbr.rel (0) target = $region17
  $region16: #{point_transformer_forward.55} parent=0 // pred_region
    _
  $region17: #{point_transformer_forward.55} parent=0 // pred_fallthru
    _
  // Predicated region
  $region18: #{point_transformer_forward.55} parent=0 // pred_check
    _
  $region19: #{point_transformer_forward.55} parent=0 // pred_check_branch
    %88 = sbr.rel (0) target = $region21
  $region20: #{point_transformer_forward.55} parent=0 // pred_region
    _
  $region21: #{point_transformer_forward.55} parent=0 // pred_fallthru
    _

// kernel: point_transformer_forward.82
$region0: #{point_transformer_forward.82}
  #allocation0 [shape = 'u32[]', space=smem, size = 0x4, offset = 0x4, fixed_abs, tag = 'smem constant byte address 0x4 - core index']
  #allocation1 [shape = 'u32[72,128]{1,0:T(1,128)}', space=vmem, size = 0x9000, scoped, tag = 'internal scratch']
  %s0 = inlined_call_operand.vmem [shape: f32[32,32], index: 0, kind: input, shape index: {}]
  %s1 = inlined_call_operand.vmem [shape: f32[32,256], index: 1, kind: input, shape index: {}]
  %s2 = inlined_call_operand.vmem [shape: f32[1,256], index: 2, kind: input, shape index: {}]
  %s3 = inlined_call_operand.vmem [shape: f32[256,512], index: 3, kind: input, shape index: {}]
  %s4 = inlined_call_operand.vmem [shape: f32[1,512], index: 4, kind: input, shape index: {}]
  %s5 = inlined_call_operand.vmem [shape: f32[32,512], index: 5, kind: output, shape index: {}]
  %s6 = sld [smem:[#allocation0]]
  $region30: #{point_transformer_forward.82} parent=0
    _
  %s8 = ssub.s32 1, %s6
  %s9 = scalar_select 0, %s8, %s6
  // Predicated region
  $region2: #{point_transformer_forward.82} parent=0 // pred_check
    _
  $region3: #{point_transformer_forward.82} parent=0 // pred_check_branch
    %11 = sbr.rel (0) target = $region5
  $region4: #{point_transformer_forward.82} parent=0 // pred_region
    _
  $region5: #{point_transformer_forward.82} parent=0 // pred_fallthru
    _
  // Predicated region
  $region6: #{point_transformer_forward.82} parent=0 // pred_check
    _
  $region7: #{point_transformer_forward.82} parent=0 // pred_check_branch
    %13 = sbr.rel (0) target = $region9
  $region8: #{point_transformer_forward.82} parent=0 // pred_region
    _
  $region9: #{point_transformer_forward.82} parent=0 // pred_fallthru
    _
  // Predicated region
  $region10: #{point_transformer_forward.82} parent=0 // pred_check
    _
  $region11: #{point_transformer_forward.82} parent=0 // pred_check_branch
    %15 = sbr.rel (0) target = $region13
  $region12: #{point_transformer_forward.82} parent=0 // pred_region
    _
  $region13: #{point_transformer_forward.82} parent=0 // pred_fallthru
    _
  // Predicated region
  $region14: #{point_transformer_forward.82} parent=0 // pred_check
    _
  $region15: #{point_transformer_forward.82} parent=0 // pred_check_branch
    %17 = sbr.rel (0) target = $region17
  $region16: #{point_transformer_forward.82} parent=0 // pred_region
    _
  $region17: #{point_transformer_forward.82} parent=0 // pred_fallthru
    _
  // Predicated region
  $region18: #{point_transformer_forward.82} parent=0 // pred_check
    _
  $region19: #{point_transformer_forward.82} parent=0 // pred_check_branch
    %19 = sbr.rel (0) target = $region21
  $region20: #{point_transformer_forward.82} parent=0 // pred_region
    _
  $region21: #{point_transformer_forward.82} parent=0 // pred_fallthru
    _
  %v20 = vld [vmem:[%s0] sm:$0xff]
  %v21 = vld [vmem:[%s0 + $0x8] sm:$0xff]
  %v22 = vld [vmem:[%s0 + $0x10] sm:$0xff]
  %v23 = vld [vmem:[%s0 + $0x18] sm:$0xff]
  %v24 = vld [vmem:[%s1] sm:$0xff]
  %v25 = vld [vmem:[%s1 + $0x8] sm:$0xff]
  %v26 = vld [vmem:[%s1 + $0x10] sm:$0xff]
  %v27 = vld [vmem:[%s1 + $0x18] sm:$0xff]
  %v28 = vld [vmem:[%s1 + $0x20] sm:$0xff]
  %v29 = vld [vmem:[%s1 + $0x28] sm:$0xff]
  %v30 = vld [vmem:[%s1 + $0x30] sm:$0xff]
  %v31 = vld [vmem:[%s1 + $0x38] sm:$0xff]
  %v32 = vld [vmem:[%s2] sm:$0x3]
  %v34 = vperm.slane %v32, 0
  %v35 = vperm.slane %v32, 1
  %vm38 = vcmask 261120
  %v40 = vsel %vm38, %v20, 0
  %v43 = vsel %vm38, %v21, 0
  %v46 = vsel %vm38, %v22, 0
  %v49 = vsel %vm38, %v23, 0
  %51 = vmatpush.msra.mxu0 0.0
  %52 = vmatpush.msra.mxu0 0.0
  %53 = vmatpush.msra.mxu0 0.0
  %54 = vmatpush.msra.mxu0 0.0
  %55 = vmatpush.msra.mxu0 0.0
  %56 = vmatpush.msra.mxu0 0.0
  %57 = vmatpush.msra.mxu0 0.0
  %58 = vmatpush.msra.mxu0 0.0
  %59 = vmatpush.msra.mxu0 0.0
  %60 = vmatpush.msra.mxu0 0.0
  %61 = vmatpush.msra.mxu0 0.0
  %62 = vmatpush.msra.mxu0 0.0
  %63 = vmatpush.msra.mxu0 %v30
  %64 = vmatpush.msra.mxu0 %v28
  %65 = vmatpush.msra.mxu0 %v26
  %66 = vmatpush.msra.mxu0 %v24
  %67 = vmatmul.f32.gmra.mxu0 %v40
  %v68 = vpop.f32.mrf.mxu0
  %v69 = vadd.f32 %v34, %v68
  %70 = vmatmul.f32.gmra.mxu0 %v43
  %v71 = vpop.f32.mrf.mxu0
  %v72 = vadd.f32 %v34, %v71
  %73 = vmatmul.f32.gmra.mxu0 %v46
  %v74 = vpop.f32.mrf.mxu0
  %v75 = vadd.f32 %v34, %v74
  %76 = vmatmul.f32.gmra.mxu0 %v49
  %v77 = vpop.f32.mrf.mxu0
  %v78 = vadd.f32 %v34, %v77
  %79 = vdwg.mxu0
  %80 = vmatpush.msra.mxu0 0.0
  %81 = vmatpush.msra.mxu0 0.0
  %82 = vmatpush.msra.mxu0 0.0
  %83 = vmatpush.msra.mxu0 0.0
  %84 = vmatpush.msra.mxu0 0.0
  %85 = vmatpush.msra.mxu0 0.0
  %86 = vmatpush.msra.mxu0 0.0
  %87 = vmatpush.msra.mxu0 0.0
  %88 = vmatpush.msra.mxu0 0.0
  %89 = vmatpush.msra.mxu0 0.0
  %90 = vmatpush.msra.mxu0 0.0
  %91 = vmatpush.msra.mxu0 0.0
  %92 = vmatpush.msra.mxu0 %v31
  %93 = vmatpush.msra.mxu0 %v29
  %94 = vmatpush.msra.mxu0 %v27
  %95 = vmatpush.msra.mxu0 %v25
  %96 = vmatmul.f32.gmra.mxu0 %v40
  %v97 = vpop.f32.mrf.mxu0
  %v98 = vadd.f32 %v35, %v97
  %99 = vmatmul.f32.gmra.mxu0 %v43
  %v100 = vpop.f32.mrf.mxu0
  %v101 = vadd.f32 %v35, %v100
  %102 = vmatmul.f32.gmra.mxu0 %v46
  %v103 = vpop.f32.mrf.mxu0
  %v104 = vadd.f32 %v35, %v103
  %105 = vmatmul.f32.gmra.mxu0 %v49
  %v106 = vpop.f32.mrf.mxu0
  %v107 = vadd.f32 %v35, %v106
  %108 = vdwg.mxu0
  %v109 = vmax.f32 %v69, 0.0
  %v110 = vmax.f32 %v98, 0.0
  %v111 = vmax.f32 %v72, 0.0
  %v112 = vmax.f32 %v101, 0.0
  %v113 = vmax.f32 %v75, 0.0
  %v114 = vmax.f32 %v104, 0.0
  %v115 = vmax.f32 %v78, 0.0
  %v116 = vmax.f32 %v107, 0.0
  %v117 = vld [vmem:[%s3] sm:$0xff]
  %v118 = vld [vmem:[%s3 + $0x8] sm:$0xff]
  %v119 = vld [vmem:[%s3 + $0x10] sm:$0xff]
  %v120 = vld [vmem:[%s3 + $0x18] sm:$0xff]
  %v121 = vld [vmem:[%s3 + $0x20] sm:$0xff]
  %v122 = vld [vmem:[%s3 + $0x28] sm:$0xff]
  %v123 = vld [vmem:[%s3 + $0x30] sm:$0xff]
  %v124 = vld [vmem:[%s3 + $0x38] sm:$0xff]
  %v125 = vld [vmem:[%s3 + $0x40] sm:$0xff]
  %v126 = vld [vmem:[%s3 + $0x48] sm:$0xff]
  %v127 = vld [vmem:[%s3 + $0x50] sm:$0xff]
  %v128 = vld [vmem:[%s3 + $0x58] sm:$0xff]
  %v129 = vld [vmem:[%s3 + $0x60] sm:$0xff]
  %v130 = vld [vmem:[%s3 + $0x68] sm:$0xff]
  %v131 = vld [vmem:[%s3 + $0x70] sm:$0xff]
  %v132 = vld [vmem:[%s3 + $0x78] sm:$0xff]
  %v133 = vld [vmem:[%s3 + $0x80] sm:$0xff]
  %v134 = vld [vmem:[%s3 + $0x88] sm:$0xff]
  %v135 = vld [vmem:[%s3 + $0x90] sm:$0xff]
  %v136 = vld [vmem:[%s3 + $0x98] sm:$0xff]
  %v137 = vld [vmem:[%s3 + $0xa0] sm:$0xff]
  %v138 = vld [vmem:[%s3 + $0xa8] sm:$0xff]
  %v139 = vld [vmem:[%s3 + $0xb0] sm:$0xff]
  %v140 = vld [vmem:[%s3 + $0xb8] sm:$0xff]
  %v141 = vld [vmem:[%s3 + $0xc0] sm:$0xff]
  %v142 = vld [vmem:[%s3 + $0xc8] sm:$0xff]
  %v143 = vld [vmem:[%s3 + $0xd0] sm:$0xff]
  %v144 = vld [vmem:[%s3 + $0xd8] sm:$0xff]
  %v145 = vld [vmem:[%s3 + $0xe0] sm:$0xff]
  %v146 = vld [vmem:[%s3 + $0xe8] sm:$0xff]
  %v147 = vld [vmem:[%s3 + $0xf0] sm:$0xff]
  %v148 = vld [vmem:[%s3 + $0xf8] sm:$0xff]
  %v149 = vld [vmem:[%s3 + $0x100] sm:$0xff]
  %v150 = vld [vmem:[%s3 + $0x108] sm:$0xff]
  %v151 = vld [vmem:[%s3 + $0x110] sm:$0xff]
  %v152 = vld [vmem:[%s3 + $0x118] sm:$0xff]
  %v153 = vld [vmem:[%s3 + $0x120] sm:$0xff]
  %v154 = vld [vmem:[%s3 + $0x128] sm:$0xff]
  %v155 = vld [vmem:[%s3 + $0x130] sm:$0xff]
  %v156 = vld [vmem:[%s3 + $0x138] sm:$0xff]
  %v157 = vld [vmem:[%s3 + $0x140] sm:$0xff]
  %v158 = vld [vmem:[%s3 + $0x148] sm:$0xff]
  %v159 = vld [vmem:[%s3 + $0x150] sm:$0xff]
  %v160 = vld [vmem:[%s3 + $0x158] sm:$0xff]
  %v161 = vld [vmem:[%s3 + $0x160] sm:$0xff]
  %v162 = vld [vmem:[%s3 + $0x168] sm:$0xff]
  %v163 = vld [vmem:[%s3 + $0x170] sm:$0xff]
  %v164 = vld [vmem:[%s3 + $0x178] sm:$0xff]
  %v165 = vld [vmem:[%s3 + $0x180] sm:$0xff]
  %v166 = vld [vmem:[%s3 + $0x188] sm:$0xff]
  %v167 = vld [vmem:[%s3 + $0x190] sm:$0xff]
  %v168 = vld [vmem:[%s3 + $0x198] sm:$0xff]
  %v169 = vld [vmem:[%s3 + $0x1a0] sm:$0xff]
  %v170 = vld [vmem:[%s3 + $0x1a8] sm:$0xff]
  %v171 = vld [vmem:[%s3 + $0x1b0] sm:$0xff]
  %v172 = vld [vmem:[%s3 + $0x1b8] sm:$0xff]
  %v173 = vld [vmem:[%s3 + $0x1c0] sm:$0xff]
  %v174 = vld [vmem:[%s3 + $0x1c8] sm:$0xff]
  %v175 = vld [vmem:[%s3 + $0x1d0] sm:$0xff]
  %v176 = vld [vmem:[%s3 + $0x1d8] sm:$0xff]
  %v177 = vld [vmem:[%s3 + $0x1e0] sm:$0xff]
  %v178 = vld [vmem:[%s3 + $0x1e8] sm:$0xff]
  %v179 = vld [vmem:[%s3 + $0x1f0] sm:$0xff]
  %v180 = vld [vmem:[%s3 + $0x1f8] sm:$0xff]
  %v181 = vld [vmem:[%s3 + $0x200] sm:$0xff]
  %v182 = vld [vmem:[%s3 + $0x208] sm:$0xff]
  %v183 = vld [vmem:[%s3 + $0x210] sm:$0xff]
  %v184 = vld [vmem:[%s3 + $0x218] sm:$0xff]
  %v185 = vld [vmem:[%s3 + $0x220] sm:$0xff]
  %v186 = vld [vmem:[%s3 + $0x228] sm:$0xff]
  %v187 = vld [vmem:[%s3 + $0x230] sm:$0xff]
  %v188 = vld [vmem:[%s3 + $0x238] sm:$0xff]
  %v189 = vld [vmem:[%s3 + $0x240] sm:$0xff]
  %v190 = vld [vmem:[%s3 + $0x248] sm:$0xff]
  %v191 = vld [vmem:[%s3 + $0x250] sm:$0xff]
  %v192 = vld [vmem:[%s3 + $0x258] sm:$0xff]
  %v193 = vld [vmem:[%s3 + $0x260] sm:$0xff]
  %v194 = vld [vmem:[%s3 + $0x268] sm:$0xff]
  %v195 = vld [vmem:[%s3 + $0x270] sm:$0xff]
  %v196 = vld [vmem:[%s3 + $0x278] sm:$0xff]
  %v197 = vld [vmem:[%s3 + $0x280] sm:$0xff]
  %v198 = vld [vmem:[%s3 + $0x288] sm:$0xff]
  %v199 = vld [vmem:[%s3 + $0x290] sm:$0xff]
  %v200 = vld [vmem:[%s3 + $0x298] sm:$0xff]
  %v201 = vld [vmem:[%s3 + $0x2a0] sm:$0xff]
  %v202 = vld [vmem:[%s3 + $0x2a8] sm:$0xff]
  %v203 = vld [vmem:[%s3 + $0x2b0] sm:$0xff]
  %v204 = vld [vmem:[%s3 + $0x2b8] sm:$0xff]
  %v205 = vld [vmem:[%s3 + $0x2c0] sm:$0xff]
  %v206 = vld [vmem:[%s3 + $0x2c8] sm:$0xff]
  %v207 = vld [vmem:[%s3 + $0x2d0] sm:$0xff]
  %v208 = vld [vmem:[%s3 + $0x2d8] sm:$0xff]
  %v209 = vld [vmem:[%s3 + $0x2e0] sm:$0xff]
  %v210 = vld [vmem:[%s3 + $0x2e8] sm:$0xff]
  %v211 = vld [vmem:[%s3 + $0x2f0] sm:$0xff]
  %v212 = vld [vmem:[%s3 + $0x2f8] sm:$0xff]
  %v213 = vld [vmem:[%s3 + $0x300] sm:$0xff]
  %v214 = vld [vmem:[%s3 + $0x308] sm:$0xff]
  %v215 = vld [vmem:[%s3 + $0x310] sm:$0xff]
  %v216 = vld [vmem:[%s3 + $0x318] sm:$0xff]
  %v217 = vld [vmem:[%s3 + $0x320] sm:$0xff]
  %v218 = vld [vmem:[%s3 + $0x328] sm:$0xff]
  %v219 = vld [vmem:[%s3 + $0x330] sm:$0xff]
  %v220 = vld [vmem:[%s3 + $0x338] sm:$0xff]
  %v221 = vld [vmem:[%s3 + $0x340] sm:$0xff]
  %v222 = vld [vmem:[%s3 + $0x348] sm:$0xff]
  %v223 = vld [vmem:[%s3 + $0x350] sm:$0xff]
  %v224 = vld [vmem:[%s3 + $0x358] sm:$0xff]
  %v225 = vld [vmem:[%s3 + $0x360] sm:$0xff]
  %v226 = vld [vmem:[%s3 + $0x368] sm:$0xff]
  %v227 = vld [vmem:[%s3 + $0x370] sm:$0xff]
  %v228 = vld [vmem:[%s3 + $0x378] sm:$0xff]
  %v229 = vld [vmem:[%s3 + $0x380] sm:$0xff]
  %v230 = vld [vmem:[%s3 + $0x388] sm:$0xff]
  %v231 = vld [vmem:[%s3 + $0x390] sm:$0xff]
  %v232 = vld [vmem:[%s3 + $0x398] sm:$0xff]
  %v233 = vld [vmem:[%s3 + $0x3a0] sm:$0xff]
  %v234 = vld [vmem:[%s3 + $0x3a8] sm:$0xff]
  %v235 = vld [vmem:[%s3 + $0x3b0] sm:$0xff]
  %v236 = vld [vmem:[%s3 + $0x3b8] sm:$0xff]
  %v237 = vld [vmem:[%s3 + $0x3c0] sm:$0xff]
  %v238 = vld [vmem:[%s3 + $0x3c8] sm:$0xff]
  %v239 = vld [vmem:[%s3 + $0x3d0] sm:$0xff]
  %v240 = vld [vmem:[%s3 + $0x3d8] sm:$0xff]
  %v241 = vld [vmem:[%s3 + $0x3e0] sm:$0xff]
  %v242 = vld [vmem:[%s3 + $0x3e8] sm:$0xff]
  %v243 = vld [vmem:[%s3 + $0x3f0] sm:$0xff]
  %v244 = vld [vmem:[%s3 + $0x3f8] sm:$0xff]
  %v245 = vld [vmem:[%s4] sm:$0xf]
  %v247 = vperm.slane %v245, 0
  %v248 = vperm.slane %v245, 1
  %v249 = vperm.slane %v245, 2
  %v250 = vperm.slane %v245, 3
  %255 = vmatpush.msra.mxu0 %v177
  %256 = vmatpush.msra.mxu0 %v173
  %257 = vmatpush.msra.mxu0 %v169
  %258 = vmatpush.msra.mxu0 %v165
  %259 = vmatpush.msra.mxu0 %v161
  %260 = vmatpush.msra.mxu0 %v157
  %261 = vmatpush.msra.mxu0 %v153
  %262 = vmatpush.msra.mxu0 %v149
  %263 = vmatpush.msra.mxu0 %v145
  %264 = vmatpush.msra.mxu0 %v141
  %265 = vmatpush.msra.mxu0 %v137
  %266 = vmatpush.msra.mxu0 %v133
  %267 = vmatpush.msra.mxu0 %v129
  %268 = vmatpush.msra.mxu0 %v125
  %269 = vmatpush.msra.mxu0 %v121
  %270 = vmatpush.msra.mxu0 %v117
  %271 = vmatmul.f32.gmra.mxu0 %v109
  %v272 = vpop.f32.mrf.mxu0
  %v273 = vadd.f32 %v247, %v272
  %274 = vmatmul.f32.gmra.mxu0 %v111
  %v275 = vpop.f32.mrf.mxu0
  %v276 = vadd.f32 %v247, %v275
  %277 = vmatmul.f32.gmra.mxu0 %v113
  %v278 = vpop.f32.mrf.mxu0
  %v279 = vadd.f32 %v247, %v278
  %280 = vmatmul.f32.gmra.mxu0 %v115
  %v281 = vpop.f32.mrf.mxu0
  %v282 = vadd.f32 %v247, %v281
  %283 = vdwg.mxu0
  %284 = vmatpush.msra.mxu0 %v241
  %285 = vmatpush.msra.mxu0 %v237
  %286 = vmatpush.msra.mxu0 %v233
  %287 = vmatpush.msra.mxu0 %v229
  %288 = vmatpush.msra.mxu0 %v225
  %289 = vmatpush.msra.mxu0 %v221
  %290 = vmatpush.msra.mxu0 %v217
  %291 = vmatpush.msra.mxu0 %v213
  %292 = vmatpush.msra.mxu0 %v209
  %293 = vmatpush.msra.mxu0 %v205
  %294 = vmatpush.msra.mxu0 %v201
  %295 = vmatpush.msra.mxu0 %v197
  %296 = vmatpush.msra.mxu0 %v193
  %297 = vmatpush.msra.mxu0 %v189
  %298 = vmatpush.msra.mxu0 %v185
  %299 = vmatpush.msra.mxu0 %v181
  %300 = vmatmul.f32.gmra.mxu0 %v110
  %v301 = vpop.f32.mrf.mxu0
  %v302 = vadd.f32 %v273, %v301
  %303 = vmatmul.f32.gmra.mxu0 %v112
  %v304 = vpop.f32.mrf.mxu0
  %v305 = vadd.f32 %v276, %v304
  %306 = vmatmul.f32.gmra.mxu0 %v114
  %v307 = vpop.f32.mrf.mxu0
  %v308 = vadd.f32 %v279, %v307
  %309 = vmatmul.f32.gmra.mxu0 %v116
  %v310 = vpop.f32.mrf.mxu0
  %v311 = vadd.f32 %v282, %v310
  %312 = vdwg.mxu0
  %313 = vmatpush.msra.mxu0 %v178
  %314 = vmatpush.msra.mxu0 %v174
  %315 = vmatpush.msra.mxu0 %v170
  %316 = vmatpush.msra.mxu0 %v166
  %317 = vmatpush.msra.mxu0 %v162
  %318 = vmatpush.msra.mxu0 %v158
  %319 = vmatpush.msra.mxu0 %v154
  %320 = vmatpush.msra.mxu0 %v150
  %321 = vmatpush.msra.mxu0 %v146
  %322 = vmatpush.msra.mxu0 %v142
  %323 = vmatpush.msra.mxu0 %v138
  %324 = vmatpush.msra.mxu0 %v134
  %325 = vmatpush.msra.mxu0 %v130
  %326 = vmatpush.msra.mxu0 %v126
  %327 = vmatpush.msra.mxu0 %v122
  %328 = vmatpush.msra.mxu0 %v118
  %329 = vmatmul.f32.gmra.mxu0 %v109
  %v330 = vpop.f32.mrf.mxu0
  %v331 = vadd.f32 %v248, %v330
  %332 = vmatmul.f32.gmra.mxu0 %v111
  %v333 = vpop.f32.mrf.mxu0
  %v334 = vadd.f32 %v248, %v333
  %335 = vmatmul.f32.gmra.mxu0 %v113
  %v336 = vpop.f32.mrf.mxu0
  %v337 = vadd.f32 %v248, %v336
  %338 = vmatmul.f32.gmra.mxu0 %v115
  %v339 = vpop.f32.mrf.mxu0
  %v340 = vadd.f32 %v248, %v339
  %341 = vdwg.mxu0
  %342 = vmatpush.msra.mxu0 %v242
  %343 = vmatpush.msra.mxu0 %v238
  %344 = vmatpush.msra.mxu0 %v234
  %345 = vmatpush.msra.mxu0 %v230
  %346 = vmatpush.msra.mxu0 %v226
  %347 = vmatpush.msra.mxu0 %v222
  %348 = vmatpush.msra.mxu0 %v218
  %349 = vmatpush.msra.mxu0 %v214
  %350 = vmatpush.msra.mxu0 %v210
  %351 = vmatpush.msra.mxu0 %v206
  %352 = vmatpush.msra.mxu0 %v202
  %353 = vmatpush.msra.mxu0 %v198
  %354 = vmatpush.msra.mxu0 %v194
  %355 = vmatpush.msra.mxu0 %v190
  %356 = vmatpush.msra.mxu0 %v186
  %357 = vmatpush.msra.mxu0 %v182
  %358 = vmatmul.f32.gmra.mxu0 %v110
  %v359 = vpop.f32.mrf.mxu0
  %v360 = vadd.f32 %v331, %v359
  %361 = vmatmul.f32.gmra.mxu0 %v112
  %v362 = vpop.f32.mrf.mxu0
  %v363 = vadd.f32 %v334, %v362
  %364 = vmatmul.f32.gmra.mxu0 %v114
  %v365 = vpop.f32.mrf.mxu0
  %v366 = vadd.f32 %v337, %v365
  %367 = vmatmul.f32.gmra.mxu0 %v116
  %v368 = vpop.f32.mrf.mxu0
  %v369 = vadd.f32 %v340, %v368
  %370 = vdwg.mxu0
  %371 = vmatpush.msra.mxu0 %v179
  %372 = vmatpush.msra.mxu0 %v175
  %373 = vmatpush.msra.mxu0 %v171
  %374 = vmatpush.msra.mxu0 %v167
  %375 = vmatpush.msra.mxu0 %v163
  %376 = vmatpush.msra.mxu0 %v159
  %377 = vmatpush.msra.mxu0 %v155
  %378 = vmatpush.msra.mxu0 %v151
  %379 = vmatpush.msra.mxu0 %v147
  %380 = vmatpush.msra.mxu0 %v143
  %381 = vmatpush.msra.mxu0 %v139
  %382 = vmatpush.msra.mxu0 %v135
  %383 = vmatpush.msra.mxu0 %v131
  %384 = vmatpush.msra.mxu0 %v127
  %385 = vmatpush.msra.mxu0 %v123
  %386 = vmatpush.msra.mxu0 %v119
  %387 = vmatmul.f32.gmra.mxu0 %v109
  %v388 = vpop.f32.mrf.mxu0
  %v389 = vadd.f32 %v249, %v388
  %390 = vmatmul.f32.gmra.mxu0 %v111
  %v391 = vpop.f32.mrf.mxu0
  %v392 = vadd.f32 %v249, %v391
  %393 = vmatmul.f32.gmra.mxu0 %v113
  %v394 = vpop.f32.mrf.mxu0
  %v395 = vadd.f32 %v249, %v394
  %396 = vmatmul.f32.gmra.mxu0 %v115
  %v397 = vpop.f32.mrf.mxu0
  %v398 = vadd.f32 %v249, %v397
  %399 = vdwg.mxu0
  %400 = vmatpush.msra.mxu0 %v243
  %401 = vmatpush.msra.mxu0 %v239
  %402 = vmatpush.msra.mxu0 %v235
  %403 = vmatpush.msra.mxu0 %v231
  %404 = vmatpush.msra.mxu0 %v227
  %405 = vmatpush.msra.mxu0 %v223
  %406 = vmatpush.msra.mxu0 %v219
  %407 = vmatpush.msra.mxu0 %v215
  %408 = vmatpush.msra.mxu0 %v211
  %409 = vmatpush.msra.mxu0 %v207
  %410 = vmatpush.msra.mxu0 %v203
  %411 = vmatpush.msra.mxu0 %v199
  %412 = vmatpush.msra.mxu0 %v195
  %413 = vmatpush.msra.mxu0 %v191
  %414 = vmatpush.msra.mxu0 %v187
  %415 = vmatpush.msra.mxu0 %v183
  %416 = vmatmul.f32.gmra.mxu0 %v110
  %v417 = vpop.f32.mrf.mxu0
  %v418 = vadd.f32 %v389, %v417
  %419 = vmatmul.f32.gmra.mxu0 %v112
  %v420 = vpop.f32.mrf.mxu0
  %v421 = vadd.f32 %v392, %v420
  %422 = vmatmul.f32.gmra.mxu0 %v114
  %v423 = vpop.f32.mrf.mxu0
  %v424 = vadd.f32 %v395, %v423
  %425 = vmatmul.f32.gmra.mxu0 %v116
  %v426 = vpop.f32.mrf.mxu0
  %v427 = vadd.f32 %v398, %v426
  %428 = vdwg.mxu0
  %429 = vmatpush.msra.mxu0 %v180
  %430 = vmatpush.msra.mxu0 %v176
  %431 = vmatpush.msra.mxu0 %v172
  %432 = vmatpush.msra.mxu0 %v168
  %433 = vmatpush.msra.mxu0 %v164
  %434 = vmatpush.msra.mxu0 %v160
  %435 = vmatpush.msra.mxu0 %v156
  %436 = vmatpush.msra.mxu0 %v152
  %437 = vmatpush.msra.mxu0 %v148
  %438 = vmatpush.msra.mxu0 %v144
  %439 = vmatpush.msra.mxu0 %v140
  %440 = vmatpush.msra.mxu0 %v136
  %441 = vmatpush.msra.mxu0 %v132
  %442 = vmatpush.msra.mxu0 %v128
  %443 = vmatpush.msra.mxu0 %v124
  %444 = vmatpush.msra.mxu0 %v120
  %445 = vmatmul.f32.gmra.mxu0 %v109
  %v446 = vpop.f32.mrf.mxu0
  %v447 = vadd.f32 %v250, %v446
  %448 = vmatmul.f32.gmra.mxu0 %v111
  %v449 = vpop.f32.mrf.mxu0
  %v450 = vadd.f32 %v250, %v449
  %451 = vmatmul.f32.gmra.mxu0 %v113
  %v452 = vpop.f32.mrf.mxu0
  %v453 = vadd.f32 %v250, %v452
  %454 = vmatmul.f32.gmra.mxu0 %v115
  %v455 = vpop.f32.mrf.mxu0
  %v456 = vadd.f32 %v250, %v455
  %457 = vdwg.mxu0
  %458 = vmatpush.msra.mxu0 %v244
  %459 = vmatpush.msra.mxu0 %v240
  %460 = vmatpush.msra.mxu0 %v236
  %461 = vmatpush.msra.mxu0 %v232
  %462 = vmatpush.msra.mxu0 %v228
  %463 = vmatpush.msra.mxu0 %v224
  %464 = vmatpush.msra.mxu0 %v220
  %465 = vmatpush.msra.mxu0 %v216
  %466 = vmatpush.msra.mxu0 %v212
  %467 = vmatpush.msra.mxu0 %v208
  %468 = vmatpush.msra.mxu0 %v204
  %469 = vmatpush.msra.mxu0 %v200
  %470 = vmatpush.msra.mxu0 %v196
  %471 = vmatpush.msra.mxu0 %v192
  %472 = vmatpush.msra.mxu0 %v188
  %473 = vmatpush.msra.mxu0 %v184
  %474 = vmatmul.f32.gmra.mxu0 %v110
  %v475 = vpop.f32.mrf.mxu0
  %v476 = vadd.f32 %v447, %v475
  %477 = vmatmul.f32.gmra.mxu0 %v112
  %v478 = vpop.f32.mrf.mxu0
  %v479 = vadd.f32 %v450, %v478
  %480 = vmatmul.f32.gmra.mxu0 %v114
  %v481 = vpop.f32.mrf.mxu0
  %v482 = vadd.f32 %v453, %v481
  %483 = vmatmul.f32.gmra.mxu0 %v116
  %v484 = vpop.f32.mrf.mxu0
  %v485 = vadd.f32 %v456, %v484
  %486 = vdwg.mxu0
  %v487 = vmax.f32 %v302, 0.0
  %v488 = vmax.f32 %v360, 0.0
  %v489 = vmax.f32 %v418, 0.0
  %v490 = vmax.f32 %v476, 0.0
  %v491 = vmax.f32 %v305, 0.0
  %v492 = vmax.f32 %v363, 0.0
  %v493 = vmax.f32 %v421, 0.0
  %v494 = vmax.f32 %v479, 0.0
  %v495 = vmax.f32 %v308, 0.0
  %v496 = vmax.f32 %v366, 0.0
  %v497 = vmax.f32 %v424, 0.0
  %v498 = vmax.f32 %v482, 0.0
  %v499 = vmax.f32 %v311, 0.0
  %v500 = vmax.f32 %v369, 0.0
  %v501 = vmax.f32 %v427, 0.0
  %v502 = vmax.f32 %v485, 0.0
  %503 = vst [vmem:[%s5] sm:$0xff] %v487
  %504 = vst [vmem:[%s5 + $0x8] sm:$0xff] %v488
  %505 = vst [vmem:[%s5 + $0x10] sm:$0xff] %v489
  %506 = vst [vmem:[%s5 + $0x18] sm:$0xff] %v490
  %507 = vst [vmem:[%s5 + $0x20] sm:$0xff] %v491
  %508 = vst [vmem:[%s5 + $0x28] sm:$0xff] %v492
  %509 = vst [vmem:[%s5 + $0x30] sm:$0xff] %v493
  %510 = vst [vmem:[%s5 + $0x38] sm:$0xff] %v494
  %511 = vst [vmem:[%s5 + $0x40] sm:$0xff] %v495
  %512 = vst [vmem:[%s5 + $0x48] sm:$0xff] %v496
  %513 = vst [vmem:[%s5 + $0x50] sm:$0xff] %v497
  %514 = vst [vmem:[%s5 + $0x58] sm:$0xff] %v498
  %515 = vst [vmem:[%s5 + $0x60] sm:$0xff] %v499
  %516 = vst [vmem:[%s5 + $0x68] sm:$0xff] %v500
  %517 = vst [vmem:[%s5 + $0x70] sm:$0xff] %v501
  %518 = vst [vmem:[%s5 + $0x78] sm:$0xff] %v502
  // Predicated region
  $region22: #{point_transformer_forward.82} parent=0 // pred_check
    _
  $region23: #{point_transformer_forward.82} parent=0 // pred_check_branch
    %520 = sbr.rel (0) target = $region25
  $region24: #{point_transformer_forward.82} parent=0 // pred_region
    _
  $region25: #{point_transformer_forward.82} parent=0 // pred_fallthru
    _
  // Predicated region
  $region26: #{point_transformer_forward.82} parent=0 // pred_check
    _
  $region27: #{point_transformer_forward.82} parent=0 // pred_check_branch
    %522 = sbr.rel (0) target = $region29
  $region28: #{point_transformer_forward.82} parent=0 // pred_region
    _
  $region29: #{point_transformer_forward.82} parent=0 // pred_fallthru
    _

// kernel: point_transformer_forward.83
$region0: #{point_transformer_forward.83}
  #allocation0 [shape = 'u32[]', space=smem, size = 0x4, offset = 0x4, fixed_abs, tag = 'smem constant byte address 0x4 - core index']
  #allocation1 [shape = 'u32[72,128]{1,0:T(1,128)}', space=vmem, size = 0x9000, scoped, tag = 'internal scratch']
  %s0 = inlined_call_operand.vmem [shape: f32[32,640], index: 0, kind: input, shape index: {}]
  %s1 = inlined_call_operand.vmem [shape: f32[640,64], index: 1, kind: input, shape index: {}]
  %s2 = inlined_call_operand.vmem [shape: f32[1,64], index: 2, kind: input, shape index: {}]
  %s3 = inlined_call_operand.vmem [shape: f32[64,32], index: 3, kind: input, shape index: {}]
  %s4 = inlined_call_operand.vmem [shape: f32[1,32], index: 4, kind: input, shape index: {}]
  %s5 = inlined_call_operand.hbm [shape: f32[32,32], index: 5, kind: output, shape index: {}]
  %s6 = sld [smem:[#allocation0]]
  $region30: #{point_transformer_forward.83} parent=0
    _
  %s8 = ssub.s32 1, %s6
  %s9 = scalar_select 0, %s8, %s6
  $region1: #{point_transformer_forward.83} parent=0
    #allocation2 [shape = 'u8[16384]{0}', space=vmem, size = 0x4000, scoped, tag = 'output window, operand 0, single buffered']
    #allocation3 [shape = 's32[1]{0}', space=sflag, size = 0x4, scoped, tag = 'scoped memory for point_transformer_forward.83']
    %10 = vsyncpa [#allocation3], 0
    // Predicated region
    $region2: #{point_transformer_forward.83} parent=1 // pred_check
      _
    $region3: #{point_transformer_forward.83} parent=1 // pred_check_branch
      %12 = sbr.rel (0) target = $region5
    $region4: #{point_transformer_forward.83} parent=1 // pred_region
      _
    $region5: #{point_transformer_forward.83} parent=1 // pred_fallthru
      _
    // Predicated region
    $region6: #{point_transformer_forward.83} parent=1 // pred_check
      _
    $region7: #{point_transformer_forward.83} parent=1 // pred_check_branch
      %14 = sbr.rel (0) target = $region9
    $region8: #{point_transformer_forward.83} parent=1 // pred_region
      _
    $region9: #{point_transformer_forward.83} parent=1 // pred_fallthru
      _
    // Predicated region
    $region10: #{point_transformer_forward.83} parent=1 // pred_check
      _
    $region11: #{point_transformer_forward.83} parent=1 // pred_check_branch
      %16 = sbr.rel (0) target = $region13
    $region12: #{point_transformer_forward.83} parent=1 // pred_region
      _
    $region13: #{point_transformer_forward.83} parent=1 // pred_fallthru
      _
    // Predicated region
    $region14: #{point_transformer_forward.83} parent=1 // pred_check
      _
    $region15: #{point_transformer_forward.83} parent=1 // pred_check_branch
      %18 = sbr.rel (0) target = $region17
    $region16: #{point_transformer_forward.83} parent=1 // pred_region
      _
    $region17: #{point_transformer_forward.83} parent=1 // pred_fallthru
      _
    // Predicated region
    $region18: #{point_transformer_forward.83} parent=1 // pred_check
      _
    $region19: #{point_transformer_forward.83} parent=1 // pred_check_branch
      %20 = sbr.rel (0) target = $region21
    $region20: #{point_transformer_forward.83} parent=1 // pred_region
      _
    $region21: #{point_transformer_forward.83} parent=1 // pred_fallthru
      _
    %v21 = vld [vmem:[%s0] sm:$0xff]
    %v22 = vld [vmem:[%s0 + $0x8] sm:$0xff]
    %v23 = vld [vmem:[%s0 + $0x10] sm:$0xff]
    %v24 = vld [vmem:[%s0 + $0x18] sm:$0xff]
    %v25 = vld [vmem:[%s0 + $0x20] sm:$0xff]
    %v26 = vld [vmem:[%s0 + $0x28] sm:$0xff]
    %v27 = vld [vmem:[%s0 + $0x30] sm:$0xff]
    %v28 = vld [vmem:[%s0 + $0x38] sm:$0xff]
    %v29 = vld [vmem:[%s0 + $0x40] sm:$0xff]
    %v30 = vld [vmem:[%s0 + $0x48] sm:$0xff]
    %v31 = vld [vmem:[%s0 + $0x50] sm:$0xff]
    %v32 = vld [vmem:[%s0 + $0x58] sm:$0xff]
    %v33 = vld [vmem:[%s0 + $0x60] sm:$0xff]
    %v34 = vld [vmem:[%s0 + $0x68] sm:$0xff]
    %v35 = vld [vmem:[%s0 + $0x70] sm:$0xff]
    %v36 = vld [vmem:[%s0 + $0x78] sm:$0xff]
    %v37 = vld [vmem:[%s0 + $0x80] sm:$0xff]
    %v38 = vld [vmem:[%s0 + $0x88] sm:$0xff]
    %v39 = vld [vmem:[%s0 + $0x90] sm:$0xff]
    %v40 = vld [vmem:[%s0 + $0x98] sm:$0xff]
    %v41 = vld [vmem:[%s1] sm:$0xff]
    %v42 = vld [vmem:[%s1 + $0x8] sm:$0xff]
    %v43 = vld [vmem:[%s1 + $0x10] sm:$0xff]
    %v44 = vld [vmem:[%s1 + $0x18] sm:$0xff]
    %v45 = vld [vmem:[%s1 + $0x20] sm:$0xff]
    %v46 = vld [vmem:[%s1 + $0x28] sm:$0xff]
    %v47 = vld [vmem:[%s1 + $0x30] sm:$0xff]
    %v48 = vld [vmem:[%s1 + $0x38] sm:$0xff]
    %v49 = vld [vmem:[%s1 + $0x40] sm:$0xff]
    %v50 = vld [vmem:[%s1 + $0x48] sm:$0xff]
    %v51 = vld [vmem:[%s1 + $0x50] sm:$0xff]
    %v52 = vld [vmem:[%s1 + $0x58] sm:$0xff]
    %v53 = vld [vmem:[%s1 + $0x60] sm:$0xff]
    %v54 = vld [vmem:[%s1 + $0x68] sm:$0xff]
    %v55 = vld [vmem:[%s1 + $0x70] sm:$0xff]
    %v56 = vld [vmem:[%s1 + $0x78] sm:$0xff]
    %v57 = vld [vmem:[%s1 + $0x80] sm:$0xff]
    %v58 = vld [vmem:[%s1 + $0x88] sm:$0xff]
    %v59 = vld [vmem:[%s1 + $0x90] sm:$0xff]
    %v60 = vld [vmem:[%s1 + $0x98] sm:$0xff]
    %v61 = vld [vmem:[%s1 + $0xa0] sm:$0xff]
    %v62 = vld [vmem:[%s1 + $0xa8] sm:$0xff]
    %v63 = vld [vmem:[%s1 + $0xb0] sm:$0xff]
    %v64 = vld [vmem:[%s1 + $0xb8] sm:$0xff]
    %v65 = vld [vmem:[%s1 + $0xc0] sm:$0xff]
    %v66 = vld [vmem:[%s1 + $0xc8] sm:$0xff]
    %v67 = vld [vmem:[%s1 + $0xd0] sm:$0xff]
    %v68 = vld [vmem:[%s1 + $0xd8] sm:$0xff]
    %v69 = vld [vmem:[%s1 + $0xe0] sm:$0xff]
    %v70 = vld [vmem:[%s1 + $0xe8] sm:$0xff]
    %v71 = vld [vmem:[%s1 + $0xf0] sm:$0xff]
    %v72 = vld [vmem:[%s1 + $0xf8] sm:$0xff]
    %v73 = vld [vmem:[%s1 + $0x100] sm:$0xff]
    %v74 = vld [vmem:[%s1 + $0x108] sm:$0xff]
    %v75 = vld [vmem:[%s1 + $0x110] sm:$0xff]
    %v76 = vld [vmem:[%s1 + $0x118] sm:$0xff]
    %v77 = vld [vmem:[%s1 + $0x120] sm:$0xff]
    %v78 = vld [vmem:[%s1 + $0x128] sm:$0xff]
    %v79 = vld [vmem:[%s1 + $0x130] sm:$0xff]
    %v80 = vld [vmem:[%s1 + $0x138] sm:$0xff]
    %v81 = vld [vmem:[%s1 + $0x140] sm:$0xff]
    %v82 = vld [vmem:[%s1 + $0x148] sm:$0xff]
    %v83 = vld [vmem:[%s1 + $0x150] sm:$0xff]
    %v84 = vld [vmem:[%s1 + $0x158] sm:$0xff]
    %v85 = vld [vmem:[%s1 + $0x160] sm:$0xff]
    %v86 = vld [vmem:[%s1 + $0x168] sm:$0xff]
    %v87 = vld [vmem:[%s1 + $0x170] sm:$0xff]
    %v88 = vld [vmem:[%s1 + $0x178] sm:$0xff]
    %v89 = vld [vmem:[%s1 + $0x180] sm:$0xff]
    %v90 = vld [vmem:[%s1 + $0x188] sm:$0xff]
    %v91 = vld [vmem:[%s1 + $0x190] sm:$0xff]
    %v92 = vld [vmem:[%s1 + $0x198] sm:$0xff]
    %v93 = vld [vmem:[%s1 + $0x1a0] sm:$0xff]
    %v94 = vld [vmem:[%s1 + $0x1a8] sm:$0xff]
    %v95 = vld [vmem:[%s1 + $0x1b0] sm:$0xff]
    %v96 = vld [vmem:[%s1 + $0x1b8] sm:$0xff]
    %v97 = vld [vmem:[%s1 + $0x1c0] sm:$0xff]
    %v98 = vld [vmem:[%s1 + $0x1c8] sm:$0xff]
    %v99 = vld [vmem:[%s1 + $0x1d0] sm:$0xff]
    %v100 = vld [vmem:[%s1 + $0x1d8] sm:$0xff]
    %v101 = vld [vmem:[%s1 + $0x1e0] sm:$0xff]
    %v102 = vld [vmem:[%s1 + $0x1e8] sm:$0xff]
    %v103 = vld [vmem:[%s1 + $0x1f0] sm:$0xff]
    %v104 = vld [vmem:[%s1 + $0x1f8] sm:$0xff]
    %v105 = vld [vmem:[%s1 + $0x200] sm:$0xff]
    %v106 = vld [vmem:[%s1 + $0x208] sm:$0xff]
    %v107 = vld [vmem:[%s1 + $0x210] sm:$0xff]
    %v108 = vld [vmem:[%s1 + $0x218] sm:$0xff]
    %v109 = vld [vmem:[%s1 + $0x220] sm:$0xff]
    %v110 = vld [vmem:[%s1 + $0x228] sm:$0xff]
    %v111 = vld [vmem:[%s1 + $0x230] sm:$0xff]
    %v112 = vld [vmem:[%s1 + $0x238] sm:$0xff]
    %v113 = vld [vmem:[%s1 + $0x240] sm:$0xff]
    %v114 = vld [vmem:[%s1 + $0x248] sm:$0xff]
    %v115 = vld [vmem:[%s1 + $0x250] sm:$0xff]
    %v116 = vld [vmem:[%s1 + $0x258] sm:$0xff]
    %v117 = vld [vmem:[%s1 + $0x260] sm:$0xff]
    %v118 = vld [vmem:[%s1 + $0x268] sm:$0xff]
    %v119 = vld [vmem:[%s1 + $0x270] sm:$0xff]
    %v120 = vld [vmem:[%s1 + $0x278] sm:$0xff]
    %v121 = vld [vmem:[%s2] sm:$0x1]
    %v123 = vperm.slane %v121, 0
    %125 = vmatpush.msra.mxu0 %v56
    %126 = vmatpush.msra.mxu0 %v55
    %127 = vmatpush.msra.mxu0 %v54
    %128 = vmatpush.msra.mxu0 %v53
    %129 = vmatpush.msra.mxu0 %v52
    %130 = vmatpush.msra.mxu0 %v51
    %131 = vmatpush.msra.mxu0 %v50
    %132 = vmatpush.msra.mxu0 %v49
    %133 = vmatpush.msra.mxu0 %v48
    %134 = vmatpush.msra.mxu0 %v47
    %135 = vmatpush.msra.mxu0 %v46
    %136 = vmatpush.msra.mxu0 %v45
    %137 = vmatpush.msra.mxu0 %v44
    %138 = vmatpush.msra.mxu0 %v43
    %139 = vmatpush.msra.mxu0 %v42
    %140 = vmatpush.msra.mxu0 %v41
    %141 = vmatmul.f32.gmra.mxu0 %v21
    %v142 = vpop.f32.mrf.mxu0
    %v143 = vadd.f32 %v123, %v142
    %144 = vmatmul.f32.gmra.mxu0 %v26
    %v145 = vpop.f32.mrf.mxu0
    %v146 = vadd.f32 %v123, %v145
    %147 = vmatmul.f32.gmra.mxu0 %v31
    %v148 = vpop.f32.mrf.mxu0
    %v149 = vadd.f32 %v123, %v148
    %150 = vmatmul.f32.gmra.mxu0 %v36
    %v151 = vpop.f32.mrf.mxu0
    %v152 = vadd.f32 %v123, %v151
    %153 = vdwg.mxu0
    %154 = vmatpush.msra.mxu0 %v72
    %155 = vmatpush.msra.mxu0 %v71
    %156 = vmatpush.msra.mxu0 %v70
    %157 = vmatpush.msra.mxu0 %v69
    %158 = vmatpush.msra.mxu0 %v68
    %159 = vmatpush.msra.mxu0 %v67
    %160 = vmatpush.msra.mxu0 %v66
    %161 = vmatpush.msra.mxu0 %v65
    %162 = vmatpush.msra.mxu0 %v64
    %163 = vmatpush.msra.mxu0 %v63
    %164 = vmatpush.msra.mxu0 %v62
    %165 = vmatpush.msra.mxu0 %v61
    %166 = vmatpush.msra.mxu0 %v60
    %167 = vmatpush.msra.mxu0 %v59
    %168 = vmatpush.msra.mxu0 %v58
    %169 = vmatpush.msra.mxu0 %v57
    %170 = vmatmul.f32.gmra.mxu0 %v22
    %v171 = vpop.f32.mrf.mxu0
    %v172 = vadd.f32 %v143, %v171
    %173 = vmatmul.f32.gmra.mxu0 %v27
    %v174 = vpop.f32.mrf.mxu0
    %v175 = vadd.f32 %v146, %v174
    %176 = vmatmul.f32.gmra.mxu0 %v32
    %v177 = vpop.f32.mrf.mxu0
    %v178 = vadd.f32 %v149, %v177
    %179 = vmatmul.f32.gmra.mxu0 %v37
    %v180 = vpop.f32.mrf.mxu0
    %v181 = vadd.f32 %v152, %v180
    %182 = vdwg.mxu0
    %183 = vmatpush.msra.mxu0 %v88
    %184 = vmatpush.msra.mxu0 %v87
    %185 = vmatpush.msra.mxu0 %v86
    %186 = vmatpush.msra.mxu0 %v85
    %187 = vmatpush.msra.mxu0 %v84
    %188 = vmatpush.msra.mxu0 %v83
    %189 = vmatpush.msra.mxu0 %v82
    %190 = vmatpush.msra.mxu0 %v81
    %191 = vmatpush.msra.mxu0 %v80
    %192 = vmatpush.msra.mxu0 %v79
    %193 = vmatpush.msra.mxu0 %v78
    %194 = vmatpush.msra.mxu0 %v77
    %195 = vmatpush.msra.mxu0 %v76
    %196 = vmatpush.msra.mxu0 %v75
    %197 = vmatpush.msra.mxu0 %v74
    %198 = vmatpush.msra.mxu0 %v73
    %199 = vmatmul.f32.gmra.mxu0 %v23
    %v200 = vpop.f32.mrf.mxu0
    %v201 = vadd.f32 %v172, %v200
    %202 = vmatmul.f32.gmra.mxu0 %v28
    %v203 = vpop.f32.mrf.mxu0
    %v204 = vadd.f32 %v175, %v203
    %205 = vmatmul.f32.gmra.mxu0 %v33
    %v206 = vpop.f32.mrf.mxu0
    %v207 = vadd.f32 %v178, %v206
    %208 = vmatmul.f32.gmra.mxu0 %v38
    %v209 = vpop.f32.mrf.mxu0
    %v210 = vadd.f32 %v181, %v209
    %211 = vdwg.mxu0
    %212 = vmatpush.msra.mxu0 %v104
    %213 = vmatpush.msra.mxu0 %v103
    %214 = vmatpush.msra.mxu0 %v102
    %215 = vmatpush.msra.mxu0 %v101
    %216 = vmatpush.msra.mxu0 %v100
    %217 = vmatpush.msra.mxu0 %v99
    %218 = vmatpush.msra.mxu0 %v98
    %219 = vmatpush.msra.mxu0 %v97
    %220 = vmatpush.msra.mxu0 %v96
    %221 = vmatpush.msra.mxu0 %v95
    %222 = vmatpush.msra.mxu0 %v94
    %223 = vmatpush.msra.mxu0 %v93
    %224 = vmatpush.msra.mxu0 %v92
    %225 = vmatpush.msra.mxu0 %v91
    %226 = vmatpush.msra.mxu0 %v90
    %227 = vmatpush.msra.mxu0 %v89
    %228 = vmatmul.f32.gmra.mxu0 %v24
    %v229 = vpop.f32.mrf.mxu0
    %v230 = vadd.f32 %v201, %v229
    %231 = vmatmul.f32.gmra.mxu0 %v29
    %v232 = vpop.f32.mrf.mxu0
    %v233 = vadd.f32 %v204, %v232
    %234 = vmatmul.f32.gmra.mxu0 %v34
    %v235 = vpop.f32.mrf.mxu0
    %v236 = vadd.f32 %v207, %v235
    %237 = vmatmul.f32.gmra.mxu0 %v39
    %v238 = vpop.f32.mrf.mxu0
    %v239 = vadd.f32 %v210, %v238
    %240 = vdwg.mxu0
    %241 = vmatpush.msra.mxu0 %v120
    %242 = vmatpush.msra.mxu0 %v119
    %243 = vmatpush.msra.mxu0 %v118
    %244 = vmatpush.msra.mxu0 %v117
    %245 = vmatpush.msra.mxu0 %v116
    %246 = vmatpush.msra.mxu0 %v115
    %247 = vmatpush.msra.mxu0 %v114
    %248 = vmatpush.msra.mxu0 %v113
    %249 = vmatpush.msra.mxu0 %v112
    %250 = vmatpush.msra.mxu0 %v111
    %251 = vmatpush.msra.mxu0 %v110
    %252 = vmatpush.msra.mxu0 %v109
    %253 = vmatpush.msra.mxu0 %v108
    %254 = vmatpush.msra.mxu0 %v107
    %255 = vmatpush.msra.mxu0 %v106
    %256 = vmatpush.msra.mxu0 %v105
    %257 = vmatmul.f32.gmra.mxu0 %v25
    %v258 = vpop.f32.mrf.mxu0
    %v259 = vadd.f32 %v230, %v258
    %260 = vmatmul.f32.gmra.mxu0 %v30
    %v261 = vpop.f32.mrf.mxu0
    %v262 = vadd.f32 %v233, %v261
    %263 = vmatmul.f32.gmra.mxu0 %v35
    %v264 = vpop.f32.mrf.mxu0
    %v265 = vadd.f32 %v236, %v264
    %266 = vmatmul.f32.gmra.mxu0 %v40
    %v267 = vpop.f32.mrf.mxu0
    %v268 = vadd.f32 %v239, %v267
    %269 = vdwg.mxu0
    %v270 = vmax.f32 %v259, 0.0
    %v271 = vmax.f32 %v262, 0.0
    %v272 = vmax.f32 %v265, 0.0
    %v273 = vmax.f32 %v268, 0.0
    %v274 = vld [vmem:[%s3] sm:$0xff]
    %v275 = vld [vmem:[%s3 + $0x8] sm:$0xff]
    %v276 = vld [vmem:[%s3 + $0x10] sm:$0xff]
    %v277 = vld [vmem:[%s3 + $0x18] sm:$0xff]
    %v278 = vld [vmem:[%s3 + $0x20] sm:$0xff]
    %v279 = vld [vmem:[%s3 + $0x28] sm:$0xff]
    %v280 = vld [vmem:[%s3 + $0x30] sm:$0xff]
    %v281 = vld [vmem:[%s3 + $0x38] sm:$0xff]
    %v282 = vld [vmem:[%s4] sm:$0x1]
    %v284 = vperm.slane %v282, 0
    %vm286 = vcmask 523264
    %v288 = vsel %vm286, %v270, 0
    %v291 = vsel %vm286, %v271, 0
    %v294 = vsel %vm286, %v272, 0
    %v297 = vsel %vm286, %v273, 0
    %299 = vmatpush.msra.mxu0 0.0
    %300 = vmatpush.msra.mxu0 0.0
    %301 = vmatpush.msra.mxu0 0.0
    %302 = vmatpush.msra.mxu0 0.0
    %303 = vmatpush.msra.mxu0 0.0
    %304 = vmatpush.msra.mxu0 0.0
    %305 = vmatpush.msra.mxu0 0.0
    %306 = vmatpush.msra.mxu0 0.0
    %307 = vmatpush.msra.mxu0 %v281
    %308 = vmatpush.msra.mxu0 %v280
    %309 = vmatpush.msra.mxu0 %v279
    %310 = vmatpush.msra.mxu0 %v278
    %311 = vmatpush.msra.mxu0 %v277
    %312 = vmatpush.msra.mxu0 %v276
    %313 = vmatpush.msra.mxu0 %v275
    %314 = vmatpush.msra.mxu0 %v274
    %315 = vmatmul.f32.gmra.mxu0 %v288
    %v316 = vpop.f32.mrf.mxu0
    %v317 = vadd.f32 %v284, %v316
    %318 = vmatmul.f32.gmra.mxu0 %v291
    %v319 = vpop.f32.mrf.mxu0
    %v320 = vadd.f32 %v284, %v319
    %321 = vmatmul.f32.gmra.mxu0 %v294
    %v322 = vpop.f32.mrf.mxu0
    %v323 = vadd.f32 %v284, %v322
    %324 = vmatmul.f32.gmra.mxu0 %v297
    %v325 = vpop.f32.mrf.mxu0
    %v326 = vadd.f32 %v284, %v325
    %327 = vdwg.mxu0
    %v328 = vmax.f32 %v317, 0.0
    %v329 = vmax.f32 %v320, 0.0
    %v330 = vmax.f32 %v323, 0.0
    %v331 = vmax.f32 %v326, 0.0
    %vm332 = vcmask 261120
    %333 = vst.msk [vmem:[#allocation2] sm:$0xff] %vm332, %v328
    %334 = vst.msk [vmem:[#allocation2 + $0x8] sm:$0xff] %vm332, %v329
    %335 = vst.msk [vmem:[#allocation2 + $0x10] sm:$0xff] %vm332, %v330
    %336 = vst.msk [vmem:[#allocation2 + $0x18] sm:$0xff] %vm332, %v331
    // Predicated region
    $region22: #{point_transformer_forward.83} parent=1 // pred_check
      _
    $region23: #{point_transformer_forward.83} parent=1 // pred_check_branch
      %338 = sbr.rel (0) target = $region25
    $region24: #{point_transformer_forward.83} parent=1 // pred_region
      %340 = vsyncadd [#allocation3], 0
      %s341 = sshll.u32 [#allocation2], 4
      %s342 = int_to_ptr.vmem [resolvable:$true] %s341
      %s343 = sshll.u32 %s5, 4
      %s344 = int_to_ptr.hbm [resolvable:$true] %s343
      %349 = dma.vmem_to_hbm [thread:$0]  %s342, 512, %s344, [#allocation3], 128, 128, 8
    $region25: #{point_transformer_forward.83} parent=1 // pred_fallthru
      _
    // Predicated region
    $region26: #{point_transformer_forward.83} parent=1 // pred_check
      _
    $region27: #{point_transformer_forward.83} parent=1 // pred_check_branch
      %351 = sbr.rel (0) target = $region29
    $region28: #{point_transformer_forward.83} parent=1 // pred_region
      %353 = dma.done [#allocation3], 512
    $region29: #{point_transformer_forward.83} parent=1 // pred_fallthru
      _
    %354 = vsyncpa [#allocation3], 1

</llo_original>
